<compile_context>
chip_gen: v7x
topology: tpu7x:2x2x1
jax: 0.10.0
libtpu: 0.0.40
codegen_flags: <defaults>
</compile_context>

<pallas_src>
import functools

import jax
import jax.numpy as jnp
from jax.experimental import pallas as pl
from jax.experimental.pallas import tpu as pltpu


# VMEM limits chosen to be safe on v5e/v6e (128 MiB physical, 16/32 MiB scoped
# default) and on v7x (64 MiB physical per TensorCore).
_VMEM_LIMIT = 48 * 1024 * 1024
_RESIDENT_BUDGET = 20 * 1024 * 1024   # z + out fully resident in VMEM
_TILE_BUDGET = 6 * 1024 * 1024        # streaming tile size (~85% HBM roofline)


# ---------------------------------------------------------------------------
# Fast path: z fully VMEM-resident, single fused kernel (no grid).
# ---------------------------------------------------------------------------
def _fused_kernel(z_ref, w1_ref, b1_ref, w2_ref, out_ref, beta_ref,
                  *, num_paths, feat, n_valid):
    x = z_ref[...]                                    # (N, M*D), native dtype
    w1 = w1_ref[...]
    b1 = b1_ref[...].astype(jnp.float32)
    w2 = w2_ref[...].astype(jnp.float32)              # (1, H)

    # Per-metapath column sums of tanh(z_m @ W1 + b1), built in-register.
    parts = []
    for m in range(num_paths):                        # M is small & static
        xm = x[:, m * feat:(m + 1) * feat]            # (N, D)
        h = jnp.tanh(
            jnp.dot(xm, w1, preferred_element_type=jnp.float32) + b1
        )                                             # (N, H) f32
        parts.append(jnp.sum(h, axis=0, keepdims=True))
    hsum = jnp.concatenate(parts, axis=0)             # (M, H) f32

    # mean_n (h @ w2) == (mean_n h) @ w2 (linearity) -> VPU mul + lane reduce.
    wmean = jnp.sum(hsum * w2, axis=-1, keepdims=True) * (1.0 / n_valid)  # (M,1)
    wmean = wmean - jnp.max(wmean)
    e = jnp.exp(wmean)
    beta = e / jnp.sum(e)                             # (M, 1) f32
    beta_ref[...] = beta.astype(beta_ref.dtype)

    # out = sum_m beta[m] * z_m, unrolled, f32 accumulator.
    acc = x[:, 0:feat].astype(jnp.float32) * beta[0:1, 0:1]
    for m in range(1, num_paths):
        acc = acc + x[:, m * feat:(m + 1) * feat].astype(jnp.float32) * beta[m:m + 1, 0:1]
    out_ref[...] = acc.astype(out_ref.dtype)


# ---------------------------------------------------------------------------
# Streaming pass 1: per-tile partial column sums of the tanh projection.
# Each tile writes its own (1, M, H) block -> safe to mark "parallel".
# ---------------------------------------------------------------------------
def _partial_hsum_kernel(z_ref, w1_ref, b1_ref, out_ref,
                         *, num_paths, feat, block_rows, n_valid, mask_rows):
    i = pl.program_id(0)
    x = z_ref[...]                                    # (TN, M*D)
    w1 = w1_ref[...]
    b1 = b1_ref[...].astype(jnp.float32)

    if mask_rows:
        row = jax.lax.broadcasted_iota(jnp.int32, (block_rows, 1), 0) + i * block_rows
        valid = (row < n_valid).astype(jnp.float32)   # (TN, 1)

    parts = []
    for m in range(num_paths):
        xm = x[:, m * feat:(m + 1) * feat]            # (TN, D)
        h = jnp.tanh(
            jnp.dot(xm, w1, preferred_element_type=jnp.float32) + b1
        )                                             # (TN, H) f32
        if mask_rows:
            h = h * valid
        parts.append(jnp.sum(h, axis=0, keepdims=True))
    out_ref[...] = jnp.concatenate(parts, axis=0)[None]   # (1, M, H)


# ---------------------------------------------------------------------------
# Streaming pass 2: out tile = sum_m beta[m] * z_m ; beta scalars in SMEM.
# ---------------------------------------------------------------------------
def _weighted_sum_kernel(beta_ref, z_ref, out_ref, *, num_paths, feat):
    x = z_ref[...]                                    # (TN, M*D)
    acc = x[:, 0:feat].astype(jnp.float32) * beta_ref[0, 0]
    for m in range(1, num_paths):
        acc = acc + x[:, m * feat:(m + 1) * feat].astype(jnp.float32) * beta_ref[0, m]
    out_ref[...] = acc.astype(out_ref.dtype)


def _choose_block_rows(n_rows, row_bytes, budget_bytes=_TILE_BUDGET):
    """Fixed large tile: largest multiple of 8 rows within the byte budget."""
    rows = max(8, (budget_bytes // max(1, row_bytes)) // 8 * 8)
    n_ceil8 = ((n_rows + 7) // 8) * 8
    return min(rows, n_ceil8)


def semantic_attention(z, w1, b1, w2, *, block_rows=None,
                       max_resident_bytes=_RESIDENT_BUDGET):
    """z: (N, M, D); w1: (D, H); b1: (1, H); w2: (1, H) (Linear(H,1).weight)."""
    N, M, D = z.shape
    H = w1.shape[1]
    assert w1.shape == (D, H) and b1.shape == (1, H) and w2.shape == (1, H)

    z2 = z.reshape(N, M * D)                          # free contiguous reshape
    itemsize = z.dtype.itemsize
    resident_bytes = N * M * D * itemsize + N * D * max(itemsize, 4)

    # ---- fast path: z resident in VMEM, single fused kernel ----------------
    if block_rows is None and resident_bytes <= max_resident_bytes:
        out, beta = pl.pallas_call(
            functools.partial(_fused_kernel, num_paths=M, feat=D, n_valid=N),
            out_shape=(jax.ShapeDtypeStruct((N, D), z.dtype),
                       jax.ShapeDtypeStruct((M, 1), jnp.float32)),
            compiler_params=pltpu.CompilerParams(vmem_limit_bytes=_VMEM_LIMIT),
        )(z2, w1, b1, w2)
        return out, beta

    # ---- streaming path -----------------------------------------------------
    if block_rows is None:
        block_rows = _choose_block_rows(N, M * D * itemsize)
    block_rows = max(8, (block_rows // 8) * 8)
    num_tiles = pl.cdiv(N, block_rows)
    n_pad = num_tiles * block_rows
    needs_mask = n_pad != N
    if needs_mask:
        z2 = jnp.pad(z2, ((0, n_pad - N), (0, 0)))

    # pass 1: per-tile partial (M, H) column sums (parallel-safe).
    partials = pl.pallas_call(
        functools.partial(_partial_hsum_kernel, num_paths=M, feat=D,
                          block_rows=block_rows, n_valid=N,
                          mask_rows=needs_mask),
        grid=(num_tiles,),
        in_specs=[
            pl.BlockSpec((block_rows, M * D), lambda i: (i, 0)),
            pl.BlockSpec((D, H), lambda i: (0, 0)),
            pl.BlockSpec((1, H), lambda i: (0, 0)),
        ],
        out_specs=pl.BlockSpec((1, M, H), lambda i: (i, 0, 0)),
        out_shape=jax.ShapeDtypeStruct((num_tiles, M, H), jnp.float32),
        compiler_params=pltpu.CompilerParams(
            dimension_semantics=("parallel",),
            vmem_limit_bytes=_VMEM_LIMIT),
    )(z2, w1, b1)

    # Tiny finalize in plain JAX: w2 contraction + mean + softmax over M.
    hsum = jnp.sum(partials, axis=0)                                   # (M, H)
    wmean = (hsum @ w2.astype(jnp.float32).T) * (1.0 / N)              # (M, 1)
    beta = jax.nn.softmax(wmean, axis=0)                               # (M, 1)

    # pass 2: weighted sum over metapaths (beta in SMEM).
    out_pad = pl.pallas_call(
        functools.partial(_weighted_sum_kernel, num_paths=M, feat=D),
        grid=(num_tiles,),
        in_specs=[
            pl.BlockSpec(memory_space=pltpu.MemorySpace.SMEM),         # (1, M)
            pl.BlockSpec((block_rows, M * D), lambda i: (i, 0)),
        ],
        out_specs=pl.BlockSpec((block_rows, D), lambda i: (i, 0)),
        out_shape=jax.ShapeDtypeStruct((n_pad, D), z.dtype),
        compiler_params=pltpu.CompilerParams(
            dimension_semantics=("parallel",),
            vmem_limit_bytes=_VMEM_LIMIT),
    )(beta.reshape(1, M).astype(jnp.float32), z2)

    out = out_pad[:N] if needs_mask else out_pad
    return out, beta


def _reference(z, w1, b1, w2):
    # Pure-JAX replica of the PyTorch forward for a correctness check.
    w = jnp.tanh(z @ w1 + b1) @ w2.T                  # (N, M, 1)
    beta = jax.nn.softmax(w.mean(0), axis=0)          # (M, 1)
    out = (beta[None, :, :] * z).sum(1)               # (N, D)
    return out, beta


if __name__ == "__main__":
    # Shapes consistent with HANLayer: D = hidden_dim, H = hidden_dim // 2,
    # M = num_paths, N = num_nodes.
    key = jax.random.PRNGKey(0)
    kz, kw1, kb1, kw2 = jax.random.split(key, 4)

    M, D = 4, 128
    H = D // 2
    w1 = jax.random.normal(kw1, (D, H), dtype=jnp.float32) * (1.0 / jnp.sqrt(D))
    b1 = jax.random.normal(kb1, (1, H), dtype=jnp.float32) * 0.01
    w2 = jax.random.normal(kw2, (1, H), dtype=jnp.float32) * (1.0 / jnp.sqrt(H))

    # Case 1: VMEM-resident fused fast path (z ~= 1 MiB).
    N = 512
    z = jax.random.normal(kz, (N, M, D), dtype=jnp.float32)
    out, score = semantic_attention(z, w1, b1, w2)
    jax.block_until_ready((out, score))
    ref_out, ref_score = _reference(z, w1, b1, w2)
    assert jnp.allclose(out, ref_out, atol=1e-4, rtol=1e-4)
    assert jnp.allclose(score, ref_score, atol=1e-5, rtol=1e-5)

    # Case 2: streaming two-pass path with a non-divisible N
    # (forces padding + masked last tile, 4-step grid).
    N2 = 500
    z_s = jax.random.normal(kz, (N2, M, D), dtype=jnp.float32)
    out_s, score_s = semantic_attention(z_s, w1, b1, w2, block_rows=128)
    jax.block_until_ready((out_s, score_s))
    ref_out_s, ref_score_s = _reference(z_s, w1, b1, w2)
    assert jnp.allclose(out_s, ref_out_s, atol=1e-4, rtol=1e-4)
    assert jnp.allclose(score_s, ref_score_s, atol=1e-5, rtol=1e-5)

    print("KERNEL_OK")
</pallas_src>

<mosaic_0001>
module attributes {stable_mosaic.version = 11 : i64} {
  func.func @_fused_kernel(%arg0: memref<512x512xf32, #tpu.memory_space<vmem>>, %arg1: memref<128x64xf32, #tpu.memory_space<vmem>>, %arg2: memref<1x64xf32, #tpu.memory_space<vmem>>, %arg3: memref<1x64xf32, #tpu.memory_space<vmem>>, %arg4: memref<512x128xf32, #tpu.memory_space<vmem>>, %arg5: memref<4x1xf32, #tpu.memory_space<vmem>>) attributes {dimension_semantics = [], scalar_prefetch = 0 : i64, scratch_operands = 0 : i64, tpu.core_type = #tpu.core_type<tc>} {
    %c0 = arith.constant 0 : index
    %c0_0 = arith.constant 0 : index
    %0 = vector.load %arg0[%c0, %c0_0] : memref<512x512xf32, #tpu.memory_space<vmem>>, vector<512x512xf32>
    %c0_1 = arith.constant 0 : index
    %c0_2 = arith.constant 0 : index
    %1 = vector.load %arg1[%c0_1, %c0_2] : memref<128x64xf32, #tpu.memory_space<vmem>>, vector<128x64xf32>
    %c0_3 = arith.constant 0 : index
    %c0_4 = arith.constant 0 : index
    %2 = vector.load %arg2[%c0_3, %c0_4] : memref<1x64xf32, #tpu.memory_space<vmem>>, vector<1x64xf32>
    %c0_5 = arith.constant 0 : index
    %c0_6 = arith.constant 0 : index
    %3 = vector.load %arg3[%c0_5, %c0_6] : memref<1x64xf32, #tpu.memory_space<vmem>>, vector<1x64xf32>
    %4 = vector.extract_strided_slice %0 {offsets = [0, 0], sizes = [512, 128], strides = [1, 1]} : vector<512x512xf32> to vector<512x128xf32>
    %cst = arith.constant dense<0.000000e+00> : vector<512x64xf32>
    %5 = tpu.matmul %4, %1, %cst {dimension_numbers = #tpu.dot_dimension_numbers<[1], [0], [0], [1], [0, 0, 1, 1], [], []>} : vector<512x128xf32>, vector<128x64xf32>, vector<512x64xf32> -> vector<512x64xf32>
    %6 = vector.broadcast %2 : vector<1x64xf32> to vector<512x64xf32>
    %7 = arith.addf %5, %6 : vector<512x64xf32>
    %8 = math.tanh %7 : vector<512x64xf32>
    %cst_7 = arith.constant dense<0.000000e+00> : vector<64xf32>
    %9 = vector.multi_reduction <add>, %8, %cst_7 [0] : vector<512x64xf32> to vector<64xf32>
    %10 = vector.shape_cast %9 : vector<64xf32> to vector<1x64xf32>
    %11 = vector.extract_strided_slice %0 {offsets = [0, 128], sizes = [512, 128], strides = [1, 1]} : vector<512x512xf32> to vector<512x128xf32>
    %cst_8 = arith.constant dense<0.000000e+00> : vector<512x64xf32>
    %12 = tpu.matmul %11, %1, %cst_8 {dimension_numbers = #tpu.dot_dimension_numbers<[1], [0], [0], [1], [0, 0, 1, 1], [], []>} : vector<512x128xf32>, vector<128x64xf32>, vector<512x64xf32> -> vector<512x64xf32>
    %13 = vector.broadcast %2 : vector<1x64xf32> to vector<512x64xf32>
    %14 = arith.addf %12, %13 : vector<512x64xf32>
    %15 = math.tanh %14 : vector<512x64xf32>
    %cst_9 = arith.constant dense<0.000000e+00> : vector<64xf32>
    %16 = vector.multi_reduction <add>, %15, %cst_9 [0] : vector<512x64xf32> to vector<64xf32>
    %17 = vector.shape_cast %16 : vector<64xf32> to vector<1x64xf32>
    %18 = vector.extract_strided_slice %0 {offsets = [0, 256], sizes = [512, 128], strides = [1, 1]} : vector<512x512xf32> to vector<512x128xf32>
    %cst_10 = arith.constant dense<0.000000e+00> : vector<512x64xf32>
    %19 = tpu.matmul %18, %1, %cst_10 {dimension_numbers = #tpu.dot_dimension_numbers<[1], [0], [0], [1], [0, 0, 1, 1], [], []>} : vector<512x128xf32>, vector<128x64xf32>, vector<512x64xf32> -> vector<512x64xf32>
    %20 = vector.broadcast %2 : vector<1x64xf32> to vector<512x64xf32>
    %21 = arith.addf %19, %20 : vector<512x64xf32>
    %22 = math.tanh %21 : vector<512x64xf32>
    %cst_11 = arith.constant dense<0.000000e+00> : vector<64xf32>
    %23 = vector.multi_reduction <add>, %22, %cst_11 [0] : vector<512x64xf32> to vector<64xf32>
    %24 = vector.shape_cast %23 : vector<64xf32> to vector<1x64xf32>
    %25 = vector.extract_strided_slice %0 {offsets = [0, 384], sizes = [512, 128], strides = [1, 1]} : vector<512x512xf32> to vector<512x128xf32>
    %cst_12 = arith.constant dense<0.000000e+00> : vector<512x64xf32>
    %26 = tpu.matmul %25, %1, %cst_12 {dimension_numbers = #tpu.dot_dimension_numbers<[1], [0], [0], [1], [0, 0, 1, 1], [], []>} : vector<512x128xf32>, vector<128x64xf32>, vector<512x64xf32> -> vector<512x64xf32>
    %27 = vector.broadcast %2 : vector<1x64xf32> to vector<512x64xf32>
    %28 = arith.addf %26, %27 : vector<512x64xf32>
    %29 = math.tanh %28 : vector<512x64xf32>
    %cst_13 = arith.constant dense<0.000000e+00> : vector<64xf32>
    %30 = vector.multi_reduction <add>, %29, %cst_13 [0] : vector<512x64xf32> to vector<64xf32>
    %31 = vector.shape_cast %30 : vector<64xf32> to vector<1x64xf32>
    %32 = tpu.concatenate %10, %17, %24, %31 in 0 : vector<1x64xf32>, vector<1x64xf32>, vector<1x64xf32>, vector<1x64xf32> -> vector<4x64xf32>
    %33 = vector.broadcast %3 : vector<1x64xf32> to vector<4x64xf32>
    %34 = arith.mulf %32, %33 : vector<4x64xf32>
    %cst_14 = arith.constant dense<0.000000e+00> : vector<4xf32>
    %35 = vector.multi_reduction <add>, %34, %cst_14 [1] : vector<4x64xf32> to vector<4xf32>
    %36 = vector.shape_cast %35 : vector<4xf32> to vector<4x1xf32>
    %cst_15 = arith.constant 0.001953125 : f32
    %37 = vector.broadcast %cst_15 : f32 to vector<4x1xf32>
    %38 = arith.mulf %36, %37 : vector<4x1xf32>
    %39 = vector.shape_cast %38 : vector<4x1xf32> to vector<1x4x1xf32>
    %cst_16 = arith.constant dense<0xFF800000> : vector<1xf32>
    %40 = vector.multi_reduction <maximumf>, %39, %cst_16 [1, 2] : vector<1x4x1xf32> to vector<1xf32>
    %41 = vector.shape_cast %40 : vector<1xf32> to vector<1x1x1xf32>
    %42 = vector.extract %41[0, 0, 0] : f32 from vector<1x1x1xf32>
    %43 = vector.broadcast %42 : f32 to vector<4x1xf32>
    %44 = arith.subf %38, %43 : vector<4x1xf32>
    %45 = math.exp %44 : vector<4x1xf32>
    %46 = vector.shape_cast %45 : vector<4x1xf32> to vector<1x4x1xf32>
    %cst_17 = arith.constant dense<0.000000e+00> : vector<1xf32>
    %47 = vector.multi_reduction <add>, %46, %cst_17 [1, 2] : vector<1x4x1xf32> to vector<1xf32>
    %48 = vector.shape_cast %47 : vector<1xf32> to vector<1x1x1xf32>
    %49 = vector.extract %48[0, 0, 0] : f32 from vector<1x1x1xf32>
    %50 = vector.broadcast %49 : f32 to vector<4x1xf32>
    %51 = arith.divf %45, %50 : vector<4x1xf32>
    %c0_18 = arith.constant 0 : index
    %c0_19 = arith.constant 0 : index
    %52 = vector.load %arg5[%c0_18, %c0_19] : memref<4x1xf32, #tpu.memory_space<vmem>>, vector<4x1xf32>
    tpu.vector_store %arg5[%c0_18, %c0_19], %51 {strides = array<i32>} : memref<4x1xf32, #tpu.memory_space<vmem>>, vector<4x1xf32>,
    %53 = vector.extract_strided_slice %0 {offsets = [0, 0], sizes = [512, 128], strides = [1, 1]} : vector<512x512xf32> to vector<512x128xf32>
    %54 = vector.extract_strided_slice %51 {offsets = [0, 0], sizes = [1, 1], strides = [1, 1]} : vector<4x1xf32> to vector<1x1xf32>
    %55 = vector.broadcast %54 : vector<1x1xf32> to vector<512x128xf32>
    %56 = arith.mulf %53, %55 : vector<512x128xf32>
    %57 = vector.extract_strided_slice %0 {offsets = [0, 128], sizes = [512, 128], strides = [1, 1]} : vector<512x512xf32> to vector<512x128xf32>
    %58 = vector.extract_strided_slice %51 {offsets = [1, 0], sizes = [1, 1], strides = [1, 1]} : vector<4x1xf32> to vector<1x1xf32>
    %59 = vector.broadcast %58 : vector<1x1xf32> to vector<512x128xf32>
    %60 = arith.mulf %57, %59 : vector<512x128xf32>
    %61 = arith.addf %56, %60 : vector<512x128xf32>
    %62 = vector.extract_strided_slice %0 {offsets = [0, 256], sizes = [512, 128], strides = [1, 1]} : vector<512x512xf32> to vector<512x128xf32>
    %63 = vector.extract_strided_slice %51 {offsets = [2, 0], sizes = [1, 1], strides = [1, 1]} : vector<4x1xf32> to vector<1x1xf32>
    %64 = vector.broadcast %63 : vector<1x1xf32> to vector<512x128xf32>
    %65 = arith.mulf %62, %64 : vector<512x128xf32>
    %66 = arith.addf %61, %65 : vector<512x128xf32>
    %67 = vector.extract_strided_slice %0 {offsets = [0, 384], sizes = [512, 128], strides = [1, 1]} : vector<512x512xf32> to vector<512x128xf32>
    %68 = vector.extract_strided_slice %51 {offsets = [3, 0], sizes = [1, 1], strides = [1, 1]} : vector<4x1xf32> to vector<1x1xf32>
    %69 = vector.broadcast %68 : vector<1x1xf32> to vector<512x128xf32>
    %70 = arith.mulf %67, %69 : vector<512x128xf32>
    %71 = arith.addf %66, %70 : vector<512x128xf32>
    %c0_20 = arith.constant 0 : index
    %c0_21 = arith.constant 0 : index
    %72 = vector.load %arg4[%c0_20, %c0_21] : memref<512x128xf32, #tpu.memory_space<vmem>>, vector<512x128xf32>
    tpu.vector_store %arg4[%c0_20, %c0_21], %71 {strides = array<i32>} : memref<512x128xf32, #tpu.memory_space<vmem>>, vector<512x128xf32>,
    return
  }
}

</mosaic_0001>

<llo_original>
// kernel: tpu_custom_call.1
$region0: #{tpu_custom_call.1}
  #allocation0 [shape = 'u32[]', space=smem, size = 0x4, offset = 0x4, fixed_abs, tag = 'smem constant byte address 0x4 - core index']
  #allocation1 [shape = 'u32[144,128]{1,0:T(1,128)}', space=vmem, size = 0x12000, scoped, tag = 'internal scratch']
  %s0 = inlined_call_operand.hbm [shape: f32[512,512], index: 0, kind: input, shape index: {}]
  %s1 = inlined_call_operand.vmem [shape: f32[128,64], index: 1, kind: input, shape index: {}]
  %s2 = inlined_call_operand.vmem [shape: f32[1,64], index: 2, kind: input, shape index: {}]
  %s3 = inlined_call_operand.vmem [shape: f32[1,64], index: 3, kind: input, shape index: {}]
  %s4 = inlined_call_operand.hbm [shape: f32[512,128], index: 4, kind: output, shape index: {0}]
  %s5 = inlined_call_operand.vmem [shape: f32[4,1], index: 5, kind: output, shape index: {1}]
  %6 = xla_tuple %s4, %s5
  %s7 = sld [smem:[#allocation0]]
  $region38: #{tpu_custom_call.1} parent=0
    _
  %s9 = ssub.s32 1, %s7
  %s10 = scalar_select 0, %s9, %s7
  $region1: #{tpu_custom_call.1} parent=0
    #allocation2 [shape = 'u8[1048576]{0}', space=vmem, size = 0x100000, scoped, tag = 'input window, operand 0, single buffered']
    #allocation3 [shape = 's32[1]{0}', space=sflag, size = 0x4, scoped, tag = 'scoped memory for tpu_custom_call.1']
    #allocation4 [shape = 's32[1]{0}', space=sflag, size = 0x4, scoped, tag = 'scoped memory for tpu_custom_call.1']
    #allocation5 [shape = 'u8[262144]{0}', space=vmem, size = 0x40000, scoped, tag = 'output window, operand 0, single buffered']
    %11 = vsyncpa [#allocation3], 0
    %12 = vsyncpa [#allocation4], 0
    // Predicated region
    $region2: #{tpu_custom_call.1} parent=1 // pred_check
      _
    $region3: #{tpu_custom_call.1} parent=1 // pred_check_branch
      %14 = sbr.rel (0) target = $region5
    $region4: #{tpu_custom_call.1} parent=1 // pred_region
      %s16 = ssub.s32 32768, 32768
      %17 = vsyncadd [#allocation3], %s16
      %s18 = sshll.u32 [#allocation2], 4
      %s19 = int_to_ptr.vmem [resolvable:$true] %s18
      %24 = dma.hbm_to_vmem [thread:$0]  %s0, 32768, %s19, [#allocation3], 512, 512, 32
    $region5: #{tpu_custom_call.1} parent=1 // pred_fallthru
      _
    // Predicated region
    $region6: #{tpu_custom_call.1} parent=1 // pred_check
      _
    $region7: #{tpu_custom_call.1} parent=1 // pred_check_branch
      %26 = sbr.rel (0) target = $region9
    $region8: #{tpu_custom_call.1} parent=1 // pred_region
      _
    $region9: #{tpu_custom_call.1} parent=1 // pred_fallthru
      _
    // Predicated region
    $region10: #{tpu_custom_call.1} parent=1 // pred_check
      _
    $region11: #{tpu_custom_call.1} parent=1 // pred_check_branch
      %28 = sbr.rel (0) target = $region13
    $region12: #{tpu_custom_call.1} parent=1 // pred_region
      _
    $region13: #{tpu_custom_call.1} parent=1 // pred_fallthru
      _
    // Predicated region
    $region14: #{tpu_custom_call.1} parent=1 // pred_check
      _
    $region15: #{tpu_custom_call.1} parent=1 // pred_check_branch
      %30 = sbr.rel (0) target = $region17
    $region16: #{tpu_custom_call.1} parent=1 // pred_region
      _
    $region17: #{tpu_custom_call.1} parent=1 // pred_fallthru
      _
    // Predicated region
    $region18: #{tpu_custom_call.1} parent=1 // pred_check
      _
    $region19: #{tpu_custom_call.1} parent=1 // pred_check_branch
      %32 = sbr.rel (0) target = $region21
    $region20: #{tpu_custom_call.1} parent=1 // pred_region
      %33 = dma.done [#allocation3], 32768
    $region21: #{tpu_custom_call.1} parent=1 // pred_fallthru
      _
    %v34 = vld [vmem:[#allocation2] sm:$0xff]
    %v35 = vld [vmem:[#allocation2 + $0x8] sm:$0xff]
    %v36 = vld [vmem:[#allocation2 + $0x10] sm:$0xff]
    %v37 = vld [vmem:[#allocation2 + $0x18] sm:$0xff]
    %v38 = vld [vmem:[#allocation2 + $0x20] sm:$0xff]
    %v39 = vld [vmem:[#allocation2 + $0x28] sm:$0xff]
    %v40 = vld [vmem:[#allocation2 + $0x30] sm:$0xff]
    %v41 = vld [vmem:[#allocation2 + $0x38] sm:$0xff]
    %v42 = vld [vmem:[#allocation2 + $0x40] sm:$0xff]
    %v43 = vld [vmem:[#allocation2 + $0x48] sm:$0xff]
    %v44 = vld [vmem:[#allocation2 + $0x50] sm:$0xff]
    %v45 = vld [vmem:[#allocation2 + $0x58] sm:$0xff]
    %v46 = vld [vmem:[#allocation2 + $0x60] sm:$0xff]
    %v47 = vld [vmem:[#allocation2 + $0x68] sm:$0xff]
    %v48 = vld [vmem:[#allocation2 + $0x70] sm:$0xff]
    %v49 = vld [vmem:[#allocation2 + $0x78] sm:$0xff]
    %v50 = vld [vmem:[#allocation2 + $0x80] sm:$0xff]
    %v51 = vld [vmem:[#allocation2 + $0x88] sm:$0xff]
    %v52 = vld [vmem:[#allocation2 + $0x90] sm:$0xff]
    %v53 = vld [vmem:[#allocation2 + $0x98] sm:$0xff]
    %v54 = vld [vmem:[#allocation2 + $0xa0] sm:$0xff]
    %v55 = vld [vmem:[#allocation2 + $0xa8] sm:$0xff]
    %v56 = vld [vmem:[#allocation2 + $0xb0] sm:$0xff]
    %v57 = vld [vmem:[#allocation2 + $0xb8] sm:$0xff]
    %v58 = vld [vmem:[#allocation2 + $0xc0] sm:$0xff]
    %v59 = vld [vmem:[#allocation2 + $0xc8] sm:$0xff]
    %v60 = vld [vmem:[#allocation2 + $0xd0] sm:$0xff]
    %v61 = vld [vmem:[#allocation2 + $0xd8] sm:$0xff]
    %v62 = vld [vmem:[#allocation2 + $0xe0] sm:$0xff]
    %v63 = vld [vmem:[#allocation2 + $0xe8] sm:$0xff]
    %v64 = vld [vmem:[#allocation2 + $0xf0] sm:$0xff]
    %v65 = vld [vmem:[#allocation2 + $0xf8] sm:$0xff]
    %v66 = vld [vmem:[#allocation2 + $0x100] sm:$0xff]
    %v67 = vld [vmem:[#allocation2 + $0x108] sm:$0xff]
    %v68 = vld [vmem:[#allocation2 + $0x110] sm:$0xff]
    %v69 = vld [vmem:[#allocation2 + $0x118] sm:$0xff]
    %v70 = vld [vmem:[#allocation2 + $0x120] sm:$0xff]
    %v71 = vld [vmem:[#allocation2 + $0x128] sm:$0xff]
    %v72 = vld [vmem:[#allocation2 + $0x130] sm:$0xff]
    %v73 = vld [vmem:[#allocation2 + $0x138] sm:$0xff]
    %v74 = vld [vmem:[#allocation2 + $0x140] sm:$0xff]
    %v75 = vld [vmem:[#allocation2 + $0x148] sm:$0xff]
    %v76 = vld [vmem:[#allocation2 + $0x150] sm:$0xff]
    %v77 = vld [vmem:[#allocation2 + $0x158] sm:$0xff]
    %v78 = vld [vmem:[#allocation2 + $0x160] sm:$0xff]
    %v79 = vld [vmem:[#allocation2 + $0x168] sm:$0xff]
    %v80 = vld [vmem:[#allocation2 + $0x170] sm:$0xff]
    %v81 = vld [vmem:[#allocation2 + $0x178] sm:$0xff]
    %v82 = vld [vmem:[#allocation2 + $0x180] sm:$0xff]
    %v83 = vld [vmem:[#allocation2 + $0x188] sm:$0xff]
    %v84 = vld [vmem:[#allocation2 + $0x190] sm:$0xff]
    %v85 = vld [vmem:[#allocation2 + $0x198] sm:$0xff]
    %v86 = vld [vmem:[#allocation2 + $0x1a0] sm:$0xff]
    %v87 = vld [vmem:[#allocation2 + $0x1a8] sm:$0xff]
    %v88 = vld [vmem:[#allocation2 + $0x1b0] sm:$0xff]
    %v89 = vld [vmem:[#allocation2 + $0x1b8] sm:$0xff]
    %v90 = vld [vmem:[#allocation2 + $0x1c0] sm:$0xff]
    %v91 = vld [vmem:[#allocation2 + $0x1c8] sm:$0xff]
    %v92 = vld [vmem:[#allocation2 + $0x1d0] sm:$0xff]
    %v93 = vld [vmem:[#allocation2 + $0x1d8] sm:$0xff]
    %v94 = vld [vmem:[#allocation2 + $0x1e0] sm:$0xff]
    %v95 = vld [vmem:[#allocation2 + $0x1e8] sm:$0xff]
    %v96 = vld [vmem:[#allocation2 + $0x1f0] sm:$0xff]
    %v97 = vld [vmem:[#allocation2 + $0x1f8] sm:$0xff]
    %v98 = vld [vmem:[#allocation2 + $0x200] sm:$0xff]
    %v99 = vld [vmem:[#allocation2 + $0x208] sm:$0xff]
    %v100 = vld [vmem:[#allocation2 + $0x210] sm:$0xff]
    %v101 = vld [vmem:[#allocation2 + $0x218] sm:$0xff]
    %v102 = vld [vmem:[#allocation2 + $0x220] sm:$0xff]
    %v103 = vld [vmem:[#allocation2 + $0x228] sm:$0xff]
    %v104 = vld [vmem:[#allocation2 + $0x230] sm:$0xff]
    %v105 = vld [vmem:[#allocation2 + $0x238] sm:$0xff]
    %v106 = vld [vmem:[#allocation2 + $0x240] sm:$0xff]
    %v107 = vld [vmem:[#allocation2 + $0x248] sm:$0xff]
    %v108 = vld [vmem:[#allocation2 + $0x250] sm:$0xff]
    %v109 = vld [vmem:[#allocation2 + $0x258] sm:$0xff]
    %v110 = vld [vmem:[#allocation2 + $0x260] sm:$0xff]
    %v111 = vld [vmem:[#allocation2 + $0x268] sm:$0xff]
    %v112 = vld [vmem:[#allocation2 + $0x270] sm:$0xff]
    %v113 = vld [vmem:[#allocation2 + $0x278] sm:$0xff]
    %v114 = vld [vmem:[#allocation2 + $0x280] sm:$0xff]
    %v115 = vld [vmem:[#allocation2 + $0x288] sm:$0xff]
    %v116 = vld [vmem:[#allocation2 + $0x290] sm:$0xff]
    %v117 = vld [vmem:[#allocation2 + $0x298] sm:$0xff]
    %v118 = vld [vmem:[#allocation2 + $0x2a0] sm:$0xff]
    %v119 = vld [vmem:[#allocation2 + $0x2a8] sm:$0xff]
    %v120 = vld [vmem:[#allocation2 + $0x2b0] sm:$0xff]
    %v121 = vld [vmem:[#allocation2 + $0x2b8] sm:$0xff]
    %v122 = vld [vmem:[#allocation2 + $0x2c0] sm:$0xff]
    %v123 = vld [vmem:[#allocation2 + $0x2c8] sm:$0xff]
    %v124 = vld [vmem:[#allocation2 + $0x2d0] sm:$0xff]
    %v125 = vld [vmem:[#allocation2 + $0x2d8] sm:$0xff]
    %v126 = vld [vmem:[#allocation2 + $0x2e0] sm:$0xff]
    %v127 = vld [vmem:[#allocation2 + $0x2e8] sm:$0xff]
    %v128 = vld [vmem:[#allocation2 + $0x2f0] sm:$0xff]
    %v129 = vld [vmem:[#allocation2 + $0x2f8] sm:$0xff]
    %v130 = vld [vmem:[#allocation2 + $0x300] sm:$0xff]
    %v131 = vld [vmem:[#allocation2 + $0x308] sm:$0xff]
    %v132 = vld [vmem:[#allocation2 + $0x310] sm:$0xff]
    %v133 = vld [vmem:[#allocation2 + $0x318] sm:$0xff]
    %v134 = vld [vmem:[#allocation2 + $0x320] sm:$0xff]
    %v135 = vld [vmem:[#allocation2 + $0x328] sm:$0xff]
    %v136 = vld [vmem:[#allocation2 + $0x330] sm:$0xff]
    %v137 = vld [vmem:[#allocation2 + $0x338] sm:$0xff]
    %v138 = vld [vmem:[#allocation2 + $0x340] sm:$0xff]
    %v139 = vld [vmem:[#allocation2 + $0x348] sm:$0xff]
    %v140 = vld [vmem:[#allocation2 + $0x350] sm:$0xff]
    %v141 = vld [vmem:[#allocation2 + $0x358] sm:$0xff]
    %v142 = vld [vmem:[#allocation2 + $0x360] sm:$0xff]
    %v143 = vld [vmem:[#allocation2 + $0x368] sm:$0xff]
    %v144 = vld [vmem:[#allocation2 + $0x370] sm:$0xff]
    %v145 = vld [vmem:[#allocation2 + $0x378] sm:$0xff]
    %v146 = vld [vmem:[#allocation2 + $0x380] sm:$0xff]
    %v147 = vld [vmem:[#allocation2 + $0x388] sm:$0xff]
    %v148 = vld [vmem:[#allocation2 + $0x390] sm:$0xff]
    %v149 = vld [vmem:[#allocation2 + $0x398] sm:$0xff]
    %v150 = vld [vmem:[#allocation2 + $0x3a0] sm:$0xff]
    %v151 = vld [vmem:[#allocation2 + $0x3a8] sm:$0xff]
    %v152 = vld [vmem:[#allocation2 + $0x3b0] sm:$0xff]
    %v153 = vld [vmem:[#allocation2 + $0x3b8] sm:$0xff]
    %v154 = vld [vmem:[#allocation2 + $0x3c0] sm:$0xff]
    %v155 = vld [vmem:[#allocation2 + $0x3c8] sm:$0xff]
    %v156 = vld [vmem:[#allocation2 + $0x3d0] sm:$0xff]
    %v157 = vld [vmem:[#allocation2 + $0x3d8] sm:$0xff]
    %v158 = vld [vmem:[#allocation2 + $0x3e0] sm:$0xff]
    %v159 = vld [vmem:[#allocation2 + $0x3e8] sm:$0xff]
    %v160 = vld [vmem:[#allocation2 + $0x3f0] sm:$0xff]
    %v161 = vld [vmem:[#allocation2 + $0x3f8] sm:$0xff]
    %v162 = vld [vmem:[#allocation2 + $0x400] sm:$0xff]
    %v163 = vld [vmem:[#allocation2 + $0x408] sm:$0xff]
    %v164 = vld [vmem:[#allocation2 + $0x410] sm:$0xff]
    %v165 = vld [vmem:[#allocation2 + $0x418] sm:$0xff]
    %v166 = vld [vmem:[#allocation2 + $0x420] sm:$0xff]
    %v167 = vld [vmem:[#allocation2 + $0x428] sm:$0xff]
    %v168 = vld [vmem:[#allocation2 + $0x430] sm:$0xff]
    %v169 = vld [vmem:[#allocation2 + $0x438] sm:$0xff]
    %v170 = vld [vmem:[#allocation2 + $0x440] sm:$0xff]
    %v171 = vld [vmem:[#allocation2 + $0x448] sm:$0xff]
    %v172 = vld [vmem:[#allocation2 + $0x450] sm:$0xff]
    %v173 = vld [vmem:[#allocation2 + $0x458] sm:$0xff]
    %v174 = vld [vmem:[#allocation2 + $0x460] sm:$0xff]
    %v175 = vld [vmem:[#allocation2 + $0x468] sm:$0xff]
    %v176 = vld [vmem:[#allocation2 + $0x470] sm:$0xff]
    %v177 = vld [vmem:[#allocation2 + $0x478] sm:$0xff]
    %v178 = vld [vmem:[#allocation2 + $0x480] sm:$0xff]
    %v179 = vld [vmem:[#allocation2 + $0x488] sm:$0xff]
    %v180 = vld [vmem:[#allocation2 + $0x490] sm:$0xff]
    %v181 = vld [vmem:[#allocation2 + $0x498] sm:$0xff]
    %v182 = vld [vmem:[#allocation2 + $0x4a0] sm:$0xff]
    %v183 = vld [vmem:[#allocation2 + $0x4a8] sm:$0xff]
    %v184 = vld [vmem:[#allocation2 + $0x4b0] sm:$0xff]
    %v185 = vld [vmem:[#allocation2 + $0x4b8] sm:$0xff]
    %v186 = vld [vmem:[#allocation2 + $0x4c0] sm:$0xff]
    %v187 = vld [vmem:[#allocation2 + $0x4c8] sm:$0xff]
    %v188 = vld [vmem:[#allocation2 + $0x4d0] sm:$0xff]
    %v189 = vld [vmem:[#allocation2 + $0x4d8] sm:$0xff]
    %v190 = vld [vmem:[#allocation2 + $0x4e0] sm:$0xff]
    %v191 = vld [vmem:[#allocation2 + $0x4e8] sm:$0xff]
    %v192 = vld [vmem:[#allocation2 + $0x4f0] sm:$0xff]
    %v193 = vld [vmem:[#allocation2 + $0x4f8] sm:$0xff]
    %v194 = vld [vmem:[#allocation2 + $0x500] sm:$0xff]
    %v195 = vld [vmem:[#allocation2 + $0x508] sm:$0xff]
    %v196 = vld [vmem:[#allocation2 + $0x510] sm:$0xff]
    %v197 = vld [vmem:[#allocation2 + $0x518] sm:$0xff]
    %v198 = vld [vmem:[#allocation2 + $0x520] sm:$0xff]
    %v199 = vld [vmem:[#allocation2 + $0x528] sm:$0xff]
    %v200 = vld [vmem:[#allocation2 + $0x530] sm:$0xff]
    %v201 = vld [vmem:[#allocation2 + $0x538] sm:$0xff]
    %v202 = vld [vmem:[#allocation2 + $0x540] sm:$0xff]
    %v203 = vld [vmem:[#allocation2 + $0x548] sm:$0xff]
    %v204 = vld [vmem:[#allocation2 + $0x550] sm:$0xff]
    %v205 = vld [vmem:[#allocation2 + $0x558] sm:$0xff]
    %v206 = vld [vmem:[#allocation2 + $0x560] sm:$0xff]
    %v207 = vld [vmem:[#allocation2 + $0x568] sm:$0xff]
    %v208 = vld [vmem:[#allocation2 + $0x570] sm:$0xff]
    %v209 = vld [vmem:[#allocation2 + $0x578] sm:$0xff]
    %v210 = vld [vmem:[#allocation2 + $0x580] sm:$0xff]
    %v211 = vld [vmem:[#allocation2 + $0x588] sm:$0xff]
    %v212 = vld [vmem:[#allocation2 + $0x590] sm:$0xff]
    %v213 = vld [vmem:[#allocation2 + $0x598] sm:$0xff]
    %v214 = vld [vmem:[#allocation2 + $0x5a0] sm:$0xff]
    %v215 = vld [vmem:[#allocation2 + $0x5a8] sm:$0xff]
    %v216 = vld [vmem:[#allocation2 + $0x5b0] sm:$0xff]
    %v217 = vld [vmem:[#allocation2 + $0x5b8] sm:$0xff]
    %v218 = vld [vmem:[#allocation2 + $0x5c0] sm:$0xff]
    %v219 = vld [vmem:[#allocation2 + $0x5c8] sm:$0xff]
    %v220 = vld [vmem:[#allocation2 + $0x5d0] sm:$0xff]
    %v221 = vld [vmem:[#allocation2 + $0x5d8] sm:$0xff]
    %v222 = vld [vmem:[#allocation2 + $0x5e0] sm:$0xff]
    %v223 = vld [vmem:[#allocation2 + $0x5e8] sm:$0xff]
    %v224 = vld [vmem:[#allocation2 + $0x5f0] sm:$0xff]
    %v225 = vld [vmem:[#allocation2 + $0x5f8] sm:$0xff]
    %v226 = vld [vmem:[#allocation2 + $0x600] sm:$0xff]
    %v227 = vld [vmem:[#allocation2 + $0x608] sm:$0xff]
    %v228 = vld [vmem:[#allocation2 + $0x610] sm:$0xff]
    %v229 = vld [vmem:[#allocation2 + $0x618] sm:$0xff]
    %v230 = vld [vmem:[#allocation2 + $0x620] sm:$0xff]
    %v231 = vld [vmem:[#allocation2 + $0x628] sm:$0xff]
    %v232 = vld [vmem:[#allocation2 + $0x630] sm:$0xff]
    %v233 = vld [vmem:[#allocation2 + $0x638] sm:$0xff]
    %v234 = vld [vmem:[#allocation2 + $0x640] sm:$0xff]
    %v235 = vld [vmem:[#allocation2 + $0x648] sm:$0xff]
    %v236 = vld [vmem:[#allocation2 + $0x650] sm:$0xff]
    %v237 = vld [vmem:[#allocation2 + $0x658] sm:$0xff]
    %v238 = vld [vmem:[#allocation2 + $0x660] sm:$0xff]
    %v239 = vld [vmem:[#allocation2 + $0x668] sm:$0xff]
    %v240 = vld [vmem:[#allocation2 + $0x670] sm:$0xff]
    %v241 = vld [vmem:[#allocation2 + $0x678] sm:$0xff]
    %v242 = vld [vmem:[#allocation2 + $0x680] sm:$0xff]
    %v243 = vld [vmem:[#allocation2 + $0x688] sm:$0xff]
    %v244 = vld [vmem:[#allocation2 + $0x690] sm:$0xff]
    %v245 = vld [vmem:[#allocation2 + $0x698] sm:$0xff]
    %v246 = vld [vmem:[#allocation2 + $0x6a0] sm:$0xff]
    %v247 = vld [vmem:[#allocation2 + $0x6a8] sm:$0xff]
    %v248 = vld [vmem:[#allocation2 + $0x6b0] sm:$0xff]
    %v249 = vld [vmem:[#allocation2 + $0x6b8] sm:$0xff]
    %v250 = vld [vmem:[#allocation2 + $0x6c0] sm:$0xff]
    %v251 = vld [vmem:[#allocation2 + $0x6c8] sm:$0xff]
    %v252 = vld [vmem:[#allocation2 + $0x6d0] sm:$0xff]
    %v253 = vld [vmem:[#allocation2 + $0x6d8] sm:$0xff]
    %v254 = vld [vmem:[#allocation2 + $0x6e0] sm:$0xff]
    %v255 = vld [vmem:[#allocation2 + $0x6e8] sm:$0xff]
    %v256 = vld [vmem:[#allocation2 + $0x6f0] sm:$0xff]
    %v257 = vld [vmem:[#allocation2 + $0x6f8] sm:$0xff]
    %v258 = vld [vmem:[#allocation2 + $0x700] sm:$0xff]
    %v259 = vld [vmem:[#allocation2 + $0x708] sm:$0xff]
    %v260 = vld [vmem:[#allocation2 + $0x710] sm:$0xff]
    %v261 = vld [vmem:[#allocation2 + $0x718] sm:$0xff]
    %v262 = vld [vmem:[#allocation2 + $0x720] sm:$0xff]
    %v263 = vld [vmem:[#allocation2 + $0x728] sm:$0xff]
    %v264 = vld [vmem:[#allocation2 + $0x730] sm:$0xff]
    %v265 = vld [vmem:[#allocation2 + $0x738] sm:$0xff]
    %v266 = vld [vmem:[#allocation2 + $0x740] sm:$0xff]
    %v267 = vld [vmem:[#allocation2 + $0x748] sm:$0xff]
    %v268 = vld [vmem:[#allocation2 + $0x750] sm:$0xff]
    %v269 = vld [vmem:[#allocation2 + $0x758] sm:$0xff]
    %v270 = vld [vmem:[#allocation2 + $0x760] sm:$0xff]
    %v271 = vld [vmem:[#allocation2 + $0x768] sm:$0xff]
    %v272 = vld [vmem:[#allocation2 + $0x770] sm:$0xff]
    %v273 = vld [vmem:[#allocation2 + $0x778] sm:$0xff]
    %v274 = vld [vmem:[#allocation2 + $0x780] sm:$0xff]
    %v275 = vld [vmem:[#allocation2 + $0x788] sm:$0xff]
    %v276 = vld [vmem:[#allocation2 + $0x790] sm:$0xff]
    %v277 = vld [vmem:[#allocation2 + $0x798] sm:$0xff]
    %v278 = vld [vmem:[#allocation2 + $0x7a0] sm:$0xff]
    %v279 = vld [vmem:[#allocation2 + $0x7a8] sm:$0xff]
    %v280 = vld [vmem:[#allocation2 + $0x7b0] sm:$0xff]
    %v281 = vld [vmem:[#allocation2 + $0x7b8] sm:$0xff]
    %v282 = vld [vmem:[#allocation2 + $0x7c0] sm:$0xff]
    %v283 = vld [vmem:[#allocation2 + $0x7c8] sm:$0xff]
    %v284 = vld [vmem:[#allocation2 + $0x7d0] sm:$0xff]
    %v285 = vld [vmem:[#allocation2 + $0x7d8] sm:$0xff]
    %v286 = vld [vmem:[#allocation2 + $0x7e0] sm:$0xff]
    %v287 = vld [vmem:[#allocation2 + $0x7e8] sm:$0xff]
    %v288 = vld [vmem:[#allocation2 + $0x7f0] sm:$0xff]
    %v289 = vld [vmem:[#allocation2 + $0x7f8] sm:$0xff]
    %v290 = vld [vmem:[%s1] sm:$0xff]
    %v291 = vld [vmem:[%s1 + $0x8] sm:$0xff]
    %v292 = vld [vmem:[%s1 + $0x10] sm:$0xff]
    %v293 = vld [vmem:[%s1 + $0x18] sm:$0xff]
    %v294 = vld [vmem:[%s1 + $0x20] sm:$0xff]
    %v295 = vld [vmem:[%s1 + $0x28] sm:$0xff]
    %v296 = vld [vmem:[%s1 + $0x30] sm:$0xff]
    %v297 = vld [vmem:[%s1 + $0x38] sm:$0xff]
    %v298 = vld [vmem:[%s1 + $0x40] sm:$0xff]
    %v299 = vld [vmem:[%s1 + $0x48] sm:$0xff]
    %v300 = vld [vmem:[%s1 + $0x50] sm:$0xff]
    %v301 = vld [vmem:[%s1 + $0x58] sm:$0xff]
    %v302 = vld [vmem:[%s1 + $0x60] sm:$0xff]
    %v303 = vld [vmem:[%s1 + $0x68] sm:$0xff]
    %v304 = vld [vmem:[%s1 + $0x70] sm:$0xff]
    %v305 = vld [vmem:[%s1 + $0x78] sm:$0xff]
    %v306 = vld [vmem:[%s2] sm:$0x1]
    %v307 = vld [vmem:[%s3] sm:$0x1]
    %v309 = vlaneseq
    %v310 = vshrl.u32 %v309, 7
    %v311 = vsub.s32 0, %v310
    %v312 = vrot.slane %v306, %v311
    %314 = vmatprep.subr.mxu0 0.0
    %315 = vmatpush1.msra.mxu0 %v290
    %316 = vmatprep.subr.mxu0 0.0
    %317 = vmatpush1.msra.mxu0 %v291
    %318 = vmatprep.subr.mxu0 0.0
    %319 = vmatpush1.msra.mxu0 %v292
    %320 = vmatprep.subr.mxu0 0.0
    %321 = vmatpush1.msra.mxu0 %v293
    %322 = vmatprep.subr.mxu0 0.0
    %323 = vmatpush1.msra.mxu0 %v294
    %324 = vmatprep.subr.mxu0 0.0
    %325 = vmatpush1.msra.mxu0 %v295
    %326 = vmatprep.subr.mxu0 0.0
    %327 = vmatpush1.msra.mxu0 %v296
    %328 = vmatprep.subr.mxu0 0.0
    %329 = vmatpush1.msra.mxu0 %v297
    %330 = vmatprep.subr.mxu0 0.0
    %331 = vmatpush1.msra.mxu0 %v298
    %332 = vmatprep.subr.mxu0 0.0
    %333 = vmatpush1.msra.mxu0 %v299
    %334 = vmatprep.subr.mxu0 0.0
    %335 = vmatpush1.msra.mxu0 %v300
    %336 = vmatprep.subr.mxu0 0.0
    %337 = vmatpush1.msra.mxu0 %v301
    %338 = vmatprep.subr.mxu0 0.0
    %339 = vmatpush1.msra.mxu0 %v302
    %340 = vmatprep.subr.mxu0 0.0
    %341 = vmatpush1.msra.mxu0 %v303
    %342 = vmatprep.subr.mxu0 0.0
    %343 = vmatpush1.msra.mxu0 %v304
    %344 = vmatprep.subr.mxu0 0.0
    %345 = vmatpush1.msra.mxu0 %v305
    %346 = vmatprep.subr.mxu0 0.0
    %347 = vmatpush1.msra.mxu0 0.0
    %348 = vmatprep.subr.mxu0 0.0
    %349 = vmatpush1.msra.mxu0 0.0
    %350 = vmatprep.subr.mxu0 0.0
    %351 = vmatpush1.msra.mxu0 0.0
    %352 = vmatprep.subr.mxu0 0.0
    %353 = vmatpush1.msra.mxu0 0.0
    %354 = vmatprep.subr.mxu0 0.0
    %355 = vmatpush1.msra.mxu0 0.0
    %356 = vmatprep.subr.mxu0 0.0
    %357 = vmatpush1.msra.mxu0 0.0
    %358 = vmatprep.subr.mxu0 0.0
    %359 = vmatpush1.msra.mxu0 0.0
    %360 = vmatprep.subr.mxu0 0.0
    %361 = vmatpush1.msra.mxu0 0.0
    %362 = vmatprep.subr.mxu0 0.0
    %363 = vmatpush1.msra.mxu0 0.0
    %364 = vmatprep.subr.mxu0 0.0
    %365 = vmatpush1.msra.mxu0 0.0
    %366 = vmatprep.subr.mxu0 0.0
    %367 = vmatpush1.msra.mxu0 0.0
    %368 = vmatprep.subr.mxu0 0.0
    %369 = vmatpush1.msra.mxu0 0.0
    %370 = vmatprep.subr.mxu0 0.0
    %371 = vmatpush1.msra.mxu0 0.0
    %372 = vmatprep.subr.mxu0 0.0
    %373 = vmatpush1.msra.mxu0 0.0
    %374 = vmatprep.subr.mxu0 0.0
    %375 = vmatpush1.msra.mxu0 0.0
    %376 = vmatprep.subr.mxu0 0.0
    %377 = vmatpush1.msra.mxu0 0.0
    %378 = vmatprep.mubr.f32.mxu0 0.0
    %379 = vmatmul.mubr.f32.gmra.mrb[0].mxu0 %v34
    %v380 = vpop.f32.mrb[0].mxu0
    %v381 = vadd.f32 %v312, %v380
    %v382 = vpop.f32.mrb[0].mxu0
    %383 = vmatprep.mubr.f32.mxu0 0.0
    %384 = vmatmul.mubr.f32.gmra.mrb[0].mxu0 %v38
    %v385 = vpop.f32.mrb[0].mxu0
    %v386 = vadd.f32 %v312, %v385
    %v387 = vpop.f32.mrb[0].mxu0
    %388 = vmatprep.mubr.f32.mxu0 0.0
    %389 = vmatmul.mubr.f32.gmra.mrb[0].mxu0 %v42
    %v390 = vpop.f32.mrb[0].mxu0
    %v391 = vadd.f32 %v312, %v390
    %v392 = vpop.f32.mrb[0].mxu0
    %393 = vmatprep.mubr.f32.mxu0 0.0
    %394 = vmatmul.mubr.f32.gmra.mrb[0].mxu0 %v46
    %v395 = vpop.f32.mrb[0].mxu0
    %v396 = vadd.f32 %v312, %v395
    %v397 = vpop.f32.mrb[0].mxu0
    %398 = vmatprep.mubr.f32.mxu0 0.0
    %399 = vmatmul.mubr.f32.gmra.mrb[0].mxu0 %v50
    %v400 = vpop.f32.mrb[0].mxu0
    %v401 = vadd.f32 %v312, %v400
    %v402 = vpop.f32.mrb[0].mxu0
    %403 = vmatprep.mubr.f32.mxu0 0.0
    %404 = vmatmul.mubr.f32.gmra.mrb[0].mxu0 %v54
    %v405 = vpop.f32.mrb[0].mxu0
    %v406 = vadd.f32 %v312, %v405
    %v407 = vpop.f32.mrb[0].mxu0
    %408 = vmatprep.mubr.f32.mxu0 0.0
    %409 = vmatmul.mubr.f32.gmra.mrb[0].mxu0 %v58
    %v410 = vpop.f32.mrb[0].mxu0
    %v411 = vadd.f32 %v312, %v410
    %v412 = vpop.f32.mrb[0].mxu0
    %413 = vmatprep.mubr.f32.mxu0 0.0
    %414 = vmatmul.mubr.f32.gmra.mrb[0].mxu0 %v62
    %v415 = vpop.f32.mrb[0].mxu0
    %v416 = vadd.f32 %v312, %v415
    %v417 = vpop.f32.mrb[0].mxu0
    %418 = vmatprep.mubr.f32.mxu0 0.0
    %419 = vmatmul.mubr.f32.gmra.mrb[0].mxu0 %v66
    %v420 = vpop.f32.mrb[0].mxu0
    %v421 = vadd.f32 %v312, %v420
    %v422 = vpop.f32.mrb[0].mxu0
    %423 = vmatprep.mubr.f32.mxu0 0.0
    %424 = vmatmul.mubr.f32.gmra.mrb[0].mxu0 %v70
    %v425 = vpop.f32.mrb[0].mxu0
    %v426 = vadd.f32 %v312, %v425
    %v427 = vpop.f32.mrb[0].mxu0
    %428 = vmatprep.mubr.f32.mxu0 0.0
    %429 = vmatmul.mubr.f32.gmra.mrb[0].mxu0 %v74
    %v430 = vpop.f32.mrb[0].mxu0
    %v431 = vadd.f32 %v312, %v430
    %v432 = vpop.f32.mrb[0].mxu0
    %433 = vmatprep.mubr.f32.mxu0 0.0
    %434 = vmatmul.mubr.f32.gmra.mrb[0].mxu0 %v78
    %v435 = vpop.f32.mrb[0].mxu0
    %v436 = vadd.f32 %v312, %v435
    %v437 = vpop.f32.mrb[0].mxu0
    %438 = vmatprep.mubr.f32.mxu0 0.0
    %439 = vmatmul.mubr.f32.gmra.mrb[0].mxu0 %v82
    %v440 = vpop.f32.mrb[0].mxu0
    %v441 = vadd.f32 %v312, %v440
    %v442 = vpop.f32.mrb[0].mxu0
    %443 = vmatprep.mubr.f32.mxu0 0.0
    %444 = vmatmul.mubr.f32.gmra.mrb[0].mxu0 %v86
    %v445 = vpop.f32.mrb[0].mxu0
    %v446 = vadd.f32 %v312, %v445
    %v447 = vpop.f32.mrb[0].mxu0
    %448 = vmatprep.mubr.f32.mxu0 0.0
    %449 = vmatmul.mubr.f32.gmra.mrb[0].mxu0 %v90
    %v450 = vpop.f32.mrb[0].mxu0
    %v451 = vadd.f32 %v312, %v450
    %v452 = vpop.f32.mrb[0].mxu0
    %453 = vmatprep.mubr.f32.mxu0 0.0
    %454 = vmatmul.mubr.f32.gmra.mrb[0].mxu0 %v94
    %v455 = vpop.f32.mrb[0].mxu0
    %v456 = vadd.f32 %v312, %v455
    %v457 = vpop.f32.mrb[0].mxu0
    %458 = vmatprep.mubr.f32.mxu0 0.0
    %459 = vmatmul.mubr.f32.gmra.mrb[0].mxu0 %v98
    %v460 = vpop.f32.mrb[0].mxu0
    %v461 = vadd.f32 %v312, %v460
    %v462 = vpop.f32.mrb[0].mxu0
    %463 = vmatprep.mubr.f32.mxu0 0.0
    %464 = vmatmul.mubr.f32.gmra.mrb[0].mxu0 %v102
    %v465 = vpop.f32.mrb[0].mxu0
    %v466 = vadd.f32 %v312, %v465
    %v467 = vpop.f32.mrb[0].mxu0
    %468 = vmatprep.mubr.f32.mxu0 0.0
    %469 = vmatmul.mubr.f32.gmra.mrb[0].mxu0 %v106
    %v470 = vpop.f32.mrb[0].mxu0
    %v471 = vadd.f32 %v312, %v470
    %v472 = vpop.f32.mrb[0].mxu0
    %473 = vmatprep.mubr.f32.mxu0 0.0
    %474 = vmatmul.mubr.f32.gmra.mrb[0].mxu0 %v110
    %v475 = vpop.f32.mrb[0].mxu0
    %v476 = vadd.f32 %v312, %v475
    %v477 = vpop.f32.mrb[0].mxu0
    %478 = vmatprep.mubr.f32.mxu0 0.0
    %479 = vmatmul.mubr.f32.gmra.mrb[0].mxu0 %v114
    %v480 = vpop.f32.mrb[0].mxu0
    %v481 = vadd.f32 %v312, %v480
    %v482 = vpop.f32.mrb[0].mxu0
    %483 = vmatprep.mubr.f32.mxu0 0.0
    %484 = vmatmul.mubr.f32.gmra.mrb[0].mxu0 %v118
    %v485 = vpop.f32.mrb[0].mxu0
    %v486 = vadd.f32 %v312, %v485
    %v487 = vpop.f32.mrb[0].mxu0
    %488 = vmatprep.mubr.f32.mxu0 0.0
    %489 = vmatmul.mubr.f32.gmra.mrb[0].mxu0 %v122
    %v490 = vpop.f32.mrb[0].mxu0
    %v491 = vadd.f32 %v312, %v490
    %v492 = vpop.f32.mrb[0].mxu0
    %493 = vmatprep.mubr.f32.mxu0 0.0
    %494 = vmatmul.mubr.f32.gmra.mrb[0].mxu0 %v126
    %v495 = vpop.f32.mrb[0].mxu0
    %v496 = vadd.f32 %v312, %v495
    %v497 = vpop.f32.mrb[0].mxu0
    %498 = vmatprep.mubr.f32.mxu0 0.0
    %499 = vmatmul.mubr.f32.gmra.mrb[0].mxu0 %v130
    %v500 = vpop.f32.mrb[0].mxu0
    %v501 = vadd.f32 %v312, %v500
    %v502 = vpop.f32.mrb[0].mxu0
    %503 = vmatprep.mubr.f32.mxu0 0.0
    %504 = vmatmul.mubr.f32.gmra.mrb[0].mxu0 %v134
    %v505 = vpop.f32.mrb[0].mxu0
    %v506 = vadd.f32 %v312, %v505
    %v507 = vpop.f32.mrb[0].mxu0
    %508 = vmatprep.mubr.f32.mxu0 0.0
    %509 = vmatmul.mubr.f32.gmra.mrb[0].mxu0 %v138
    %v510 = vpop.f32.mrb[0].mxu0
    %v511 = vadd.f32 %v312, %v510
    %v512 = vpop.f32.mrb[0].mxu0
    %513 = vmatprep.mubr.f32.mxu0 0.0
    %514 = vmatmul.mubr.f32.gmra.mrb[0].mxu0 %v142
    %v515 = vpop.f32.mrb[0].mxu0
    %v516 = vadd.f32 %v312, %v515
    %v517 = vpop.f32.mrb[0].mxu0
    %518 = vmatprep.mubr.f32.mxu0 0.0
    %519 = vmatmul.mubr.f32.gmra.mrb[0].mxu0 %v146
    %v520 = vpop.f32.mrb[0].mxu0
    %v521 = vadd.f32 %v312, %v520
    %v522 = vpop.f32.mrb[0].mxu0
    %523 = vmatprep.mubr.f32.mxu0 0.0
    %524 = vmatmul.mubr.f32.gmra.mrb[0].mxu0 %v150
    %v525 = vpop.f32.mrb[0].mxu0
    %v526 = vadd.f32 %v312, %v525
    %v527 = vpop.f32.mrb[0].mxu0
    %528 = vmatprep.mubr.f32.mxu0 0.0
    %529 = vmatmul.mubr.f32.gmra.mrb[0].mxu0 %v154
    %v530 = vpop.f32.mrb[0].mxu0
    %v531 = vadd.f32 %v312, %v530
    %v532 = vpop.f32.mrb[0].mxu0
    %533 = vmatprep.mubr.f32.mxu0 0.0
    %534 = vmatmul.mubr.f32.gmra.mrb[0].mxu0 %v158
    %v535 = vpop.f32.mrb[0].mxu0
    %v536 = vadd.f32 %v312, %v535
    %v537 = vpop.f32.mrb[0].mxu0
    %538 = vmatprep.mubr.f32.mxu0 0.0
    %539 = vmatmul.mubr.f32.gmra.mrb[0].mxu0 %v162
    %v540 = vpop.f32.mrb[0].mxu0
    %v541 = vadd.f32 %v312, %v540
    %v542 = vpop.f32.mrb[0].mxu0
    %543 = vmatprep.mubr.f32.mxu0 0.0
    %544 = vmatmul.mubr.f32.gmra.mrb[0].mxu0 %v166
    %v545 = vpop.f32.mrb[0].mxu0
    %v546 = vadd.f32 %v312, %v545
    %v547 = vpop.f32.mrb[0].mxu0
    %548 = vmatprep.mubr.f32.mxu0 0.0
    %549 = vmatmul.mubr.f32.gmra.mrb[0].mxu0 %v170
    %v550 = vpop.f32.mrb[0].mxu0
    %v551 = vadd.f32 %v312, %v550
    %v552 = vpop.f32.mrb[0].mxu0
    %553 = vmatprep.mubr.f32.mxu0 0.0
    %554 = vmatmul.mubr.f32.gmra.mrb[0].mxu0 %v174
    %v555 = vpop.f32.mrb[0].mxu0
    %v556 = vadd.f32 %v312, %v555
    %v557 = vpop.f32.mrb[0].mxu0
    %558 = vmatprep.mubr.f32.mxu0 0.0
    %559 = vmatmul.mubr.f32.gmra.mrb[0].mxu0 %v178
    %v560 = vpop.f32.mrb[0].mxu0
    %v561 = vadd.f32 %v312, %v560
    %v562 = vpop.f32.mrb[0].mxu0
    %563 = vmatprep.mubr.f32.mxu0 0.0
    %564 = vmatmul.mubr.f32.gmra.mrb[0].mxu0 %v182
    %v565 = vpop.f32.mrb[0].mxu0
    %v566 = vadd.f32 %v312, %v565
    %v567 = vpop.f32.mrb[0].mxu0
    %568 = vmatprep.mubr.f32.mxu0 0.0
    %569 = vmatmul.mubr.f32.gmra.mrb[0].mxu0 %v186
    %v570 = vpop.f32.mrb[0].mxu0
    %v571 = vadd.f32 %v312, %v570
    %v572 = vpop.f32.mrb[0].mxu0
    %573 = vmatprep.mubr.f32.mxu0 0.0
    %574 = vmatmul.mubr.f32.gmra.mrb[0].mxu0 %v190
    %v575 = vpop.f32.mrb[0].mxu0
    %v576 = vadd.f32 %v312, %v575
    %v577 = vpop.f32.mrb[0].mxu0
    %578 = vmatprep.mubr.f32.mxu0 0.0
    %579 = vmatmul.mubr.f32.gmra.mrb[0].mxu0 %v194
    %v580 = vpop.f32.mrb[0].mxu0
    %v581 = vadd.f32 %v312, %v580
    %v582 = vpop.f32.mrb[0].mxu0
    %583 = vmatprep.mubr.f32.mxu0 0.0
    %584 = vmatmul.mubr.f32.gmra.mrb[0].mxu0 %v198
    %v585 = vpop.f32.mrb[0].mxu0
    %v586 = vadd.f32 %v312, %v585
    %v587 = vpop.f32.mrb[0].mxu0
    %588 = vmatprep.mubr.f32.mxu0 0.0
    %589 = vmatmul.mubr.f32.gmra.mrb[0].mxu0 %v202
    %v590 = vpop.f32.mrb[0].mxu0
    %v591 = vadd.f32 %v312, %v590
    %v592 = vpop.f32.mrb[0].mxu0
    %593 = vmatprep.mubr.f32.mxu0 0.0
    %594 = vmatmul.mubr.f32.gmra.mrb[0].mxu0 %v206
    %v595 = vpop.f32.mrb[0].mxu0
    %v596 = vadd.f32 %v312, %v595
    %v597 = vpop.f32.mrb[0].mxu0
    %598 = vmatprep.mubr.f32.mxu0 0.0
    %599 = vmatmul.mubr.f32.gmra.mrb[0].mxu0 %v210
    %v600 = vpop.f32.mrb[0].mxu0
    %v601 = vadd.f32 %v312, %v600
    %v602 = vpop.f32.mrb[0].mxu0
    %603 = vmatprep.mubr.f32.mxu0 0.0
    %604 = vmatmul.mubr.f32.gmra.mrb[0].mxu0 %v214
    %v605 = vpop.f32.mrb[0].mxu0
    %v606 = vadd.f32 %v312, %v605
    %v607 = vpop.f32.mrb[0].mxu0
    %608 = vmatprep.mubr.f32.mxu0 0.0
    %609 = vmatmul.mubr.f32.gmra.mrb[0].mxu0 %v218
    %v610 = vpop.f32.mrb[0].mxu0
    %v611 = vadd.f32 %v312, %v610
    %v612 = vpop.f32.mrb[0].mxu0
    %613 = vmatprep.mubr.f32.mxu0 0.0
    %614 = vmatmul.mubr.f32.gmra.mrb[0].mxu0 %v222
    %v615 = vpop.f32.mrb[0].mxu0
    %v616 = vadd.f32 %v312, %v615
    %v617 = vpop.f32.mrb[0].mxu0
    %618 = vmatprep.mubr.f32.mxu0 0.0
    %619 = vmatmul.mubr.f32.gmra.mrb[0].mxu0 %v226
    %v620 = vpop.f32.mrb[0].mxu0
    %v621 = vadd.f32 %v312, %v620
    %v622 = vpop.f32.mrb[0].mxu0
    %623 = vmatprep.mubr.f32.mxu0 0.0
    %624 = vmatmul.mubr.f32.gmra.mrb[0].mxu0 %v230
    %v625 = vpop.f32.mrb[0].mxu0
    %v626 = vadd.f32 %v312, %v625
    %v627 = vpop.f32.mrb[0].mxu0
    %628 = vmatprep.mubr.f32.mxu0 0.0
    %629 = vmatmul.mubr.f32.gmra.mrb[0].mxu0 %v234
    %v630 = vpop.f32.mrb[0].mxu0
    %v631 = vadd.f32 %v312, %v630
    %v632 = vpop.f32.mrb[0].mxu0
    %633 = vmatprep.mubr.f32.mxu0 0.0
    %634 = vmatmul.mubr.f32.gmra.mrb[0].mxu0 %v238
    %v635 = vpop.f32.mrb[0].mxu0
    %v636 = vadd.f32 %v312, %v635
    %v637 = vpop.f32.mrb[0].mxu0
    %638 = vmatprep.mubr.f32.mxu0 0.0
    %639 = vmatmul.mubr.f32.gmra.mrb[0].mxu0 %v242
    %v640 = vpop.f32.mrb[0].mxu0
    %v641 = vadd.f32 %v312, %v640
    %v642 = vpop.f32.mrb[0].mxu0
    %643 = vmatprep.mubr.f32.mxu0 0.0
    %644 = vmatmul.mubr.f32.gmra.mrb[0].mxu0 %v246
    %v645 = vpop.f32.mrb[0].mxu0
    %v646 = vadd.f32 %v312, %v645
    %v647 = vpop.f32.mrb[0].mxu0
    %648 = vmatprep.mubr.f32.mxu0 0.0
    %649 = vmatmul.mubr.f32.gmra.mrb[0].mxu0 %v250
    %v650 = vpop.f32.mrb[0].mxu0
    %v651 = vadd.f32 %v312, %v650
    %v652 = vpop.f32.mrb[0].mxu0
    %653 = vmatprep.mubr.f32.mxu0 0.0
    %654 = vmatmul.mubr.f32.gmra.mrb[0].mxu0 %v254
    %v655 = vpop.f32.mrb[0].mxu0
    %v656 = vadd.f32 %v312, %v655
    %v657 = vpop.f32.mrb[0].mxu0
    %658 = vmatprep.mubr.f32.mxu0 0.0
    %659 = vmatmul.mubr.f32.gmra.mrb[0].mxu0 %v258
    %v660 = vpop.f32.mrb[0].mxu0
    %v661 = vadd.f32 %v312, %v660
    %v662 = vpop.f32.mrb[0].mxu0
    %663 = vmatprep.mubr.f32.mxu0 0.0
    %664 = vmatmul.mubr.f32.gmra.mrb[0].mxu0 %v262
    %v665 = vpop.f32.mrb[0].mxu0
    %v666 = vadd.f32 %v312, %v665
    %v667 = vpop.f32.mrb[0].mxu0
    %668 = vmatprep.mubr.f32.mxu0 0.0
    %669 = vmatmul.mubr.f32.gmra.mrb[0].mxu0 %v266
    %v670 = vpop.f32.mrb[0].mxu0
    %v671 = vadd.f32 %v312, %v670
    %v672 = vpop.f32.mrb[0].mxu0
    %673 = vmatprep.mubr.f32.mxu0 0.0
    %674 = vmatmul.mubr.f32.gmra.mrb[0].mxu0 %v270
    %v675 = vpop.f32.mrb[0].mxu0
    %v676 = vadd.f32 %v312, %v675
    %v677 = vpop.f32.mrb[0].mxu0
    %678 = vmatprep.mubr.f32.mxu0 0.0
    %679 = vmatmul.mubr.f32.gmra.mrb[0].mxu0 %v274
    %v680 = vpop.f32.mrb[0].mxu0
    %v681 = vadd.f32 %v312, %v680
    %v682 = vpop.f32.mrb[0].mxu0
    %683 = vmatprep.mubr.f32.mxu0 0.0
    %684 = vmatmul.mubr.f32.gmra.mrb[0].mxu0 %v278
    %v685 = vpop.f32.mrb[0].mxu0
    %v686 = vadd.f32 %v312, %v685
    %v687 = vpop.f32.mrb[0].mxu0
    %688 = vmatprep.mubr.f32.mxu0 0.0
    %689 = vmatmul.mubr.f32.gmra.mrb[0].mxu0 %v282
    %v690 = vpop.f32.mrb[0].mxu0
    %v691 = vadd.f32 %v312, %v690
    %v692 = vpop.f32.mrb[0].mxu0
    %693 = vmatprep.mubr.f32.mxu0 0.0
    %694 = vmatmul.mubr.f32.gmra.mrb[0].mxu0 %v286
    %v695 = vpop.f32.mrb[0].mxu0
    %v696 = vadd.f32 %v312, %v695
    %v697 = vpop.f32.mrb[0].mxu0
    %698 = vdwg.mxu0
    %v699 = vtanh.pop %v381
    %v700 = vtanh.pop %v386
    %v701 = vtanh.pop %v391
    %v702 = vtanh.pop %v396
    %v703 = vtanh.pop %v401
    %v704 = vtanh.pop %v406
    %v705 = vtanh.pop %v411
    %v706 = vtanh.pop %v416
    %v707 = vtanh.pop %v421
    %v708 = vtanh.pop %v426
    %v709 = vtanh.pop %v431
    %v710 = vtanh.pop %v436
    %v711 = vtanh.pop %v441
    %v712 = vtanh.pop %v446
    %v713 = vtanh.pop %v451
    %v714 = vtanh.pop %v456
    %v715 = vtanh.pop %v461
    %v716 = vtanh.pop %v466
    %v717 = vtanh.pop %v471
    %v718 = vtanh.pop %v476
    %v719 = vtanh.pop %v481
    %v720 = vtanh.pop %v486
    %v721 = vtanh.pop %v491
    %v722 = vtanh.pop %v496
    %v723 = vtanh.pop %v501
    %v724 = vtanh.pop %v506
    %v725 = vtanh.pop %v511
    %v726 = vtanh.pop %v516
    %v727 = vtanh.pop %v521
    %v728 = vtanh.pop %v526
    %v729 = vtanh.pop %v531
    %v730 = vtanh.pop %v536
    %v731 = vtanh.pop %v541
    %v732 = vtanh.pop %v546
    %v733 = vtanh.pop %v551
    %v734 = vtanh.pop %v556
    %v735 = vtanh.pop %v561
    %v736 = vtanh.pop %v566
    %v737 = vtanh.pop %v571
    %v738 = vtanh.pop %v576
    %v739 = vtanh.pop %v581
    %v740 = vtanh.pop %v586
    %v741 = vtanh.pop %v591
    %v742 = vtanh.pop %v596
    %v743 = vtanh.pop %v601
    %v744 = vtanh.pop %v606
    %v745 = vtanh.pop %v611
    %v746 = vtanh.pop %v616
    %v747 = vtanh.pop %v621
    %v748 = vtanh.pop %v626
    %v749 = vtanh.pop %v631
    %v750 = vtanh.pop %v636
    %v751 = vtanh.pop %v641
    %v752 = vtanh.pop %v646
    %v753 = vtanh.pop %v651
    %v754 = vtanh.pop %v656
    %v755 = vtanh.pop %v661
    %v756 = vtanh.pop %v666
    %v757 = vtanh.pop %v671
    %v758 = vtanh.pop %v676
    %v759 = vtanh.pop %v681
    %v760 = vtanh.pop %v686
    %v761 = vtanh.pop %v691
    %v762 = vtanh.pop %v696
    %vm763 = vcmask 523264
    %v764 = vsel %vm763, %v699, 0.0
    %v765 = vsel %vm763, %v700, 0.0
    %v766 = vadd.f32 %v764, %v765
    %v767 = vsel %vm763, %v701, 0.0
    %v768 = vadd.f32 %v766, %v767
    %v769 = vsel %vm763, %v702, 0.0
    %v770 = vadd.f32 %v768, %v769
    %v771 = vsel %vm763, %v703, 0.0
    %v772 = vadd.f32 %v770, %v771
    %v773 = vsel %vm763, %v704, 0.0
    %v774 = vadd.f32 %v772, %v773
    %v775 = vsel %vm763, %v705, 0.0
    %v776 = vadd.f32 %v774, %v775
    %v777 = vsel %vm763, %v706, 0.0
    %v778 = vadd.f32 %v776, %v777
    %v779 = vsel %vm763, %v707, 0.0
    %v780 = vadd.f32 %v778, %v779
    %v781 = vsel %vm763, %v708, 0.0
    %v782 = vadd.f32 %v780, %v781
    %v783 = vsel %vm763, %v709, 0.0
    %v784 = vadd.f32 %v782, %v783
    %v785 = vsel %vm763, %v710, 0.0
    %v786 = vadd.f32 %v784, %v785
    %v787 = vsel %vm763, %v711, 0.0
    %v788 = vadd.f32 %v786, %v787
    %v789 = vsel %vm763, %v712, 0.0
    %v790 = vadd.f32 %v788, %v789
    %v791 = vsel %vm763, %v713, 0.0
    %v792 = vadd.f32 %v790, %v791
    %v793 = vsel %vm763, %v714, 0.0
    %v794 = vadd.f32 %v792, %v793
    %v795 = vsel %vm763, %v715, 0.0
    %v796 = vadd.f32 %v794, %v795
    %v797 = vsel %vm763, %v716, 0.0
    %v798 = vadd.f32 %v796, %v797
    %v799 = vsel %vm763, %v717, 0.0
    %v800 = vadd.f32 %v798, %v799
    %v801 = vsel %vm763, %v718, 0.0
    %v802 = vadd.f32 %v800, %v801
    %v803 = vsel %vm763, %v719, 0.0
    %v804 = vadd.f32 %v802, %v803
    %v805 = vsel %vm763, %v720, 0.0
    %v806 = vadd.f32 %v804, %v805
    %v807 = vsel %vm763, %v721, 0.0
    %v808 = vadd.f32 %v806, %v807
    %v809 = vsel %vm763, %v722, 0.0
    %v810 = vadd.f32 %v808, %v809
    %v811 = vsel %vm763, %v723, 0.0
    %v812 = vadd.f32 %v810, %v811
    %v813 = vsel %vm763, %v724, 0.0
    %v814 = vadd.f32 %v812, %v813
    %v815 = vsel %vm763, %v725, 0.0
    %v816 = vadd.f32 %v814, %v815
    %v817 = vsel %vm763, %v726, 0.0
    %v818 = vadd.f32 %v816, %v817
    %v819 = vsel %vm763, %v727, 0.0
    %v820 = vadd.f32 %v818, %v819
    %v821 = vsel %vm763, %v728, 0.0
    %v822 = vadd.f32 %v820, %v821
    %v823 = vsel %vm763, %v729, 0.0
    %v824 = vadd.f32 %v822, %v823
    %v825 = vsel %vm763, %v730, 0.0
    %v826 = vadd.f32 %v824, %v825
    %v827 = vsel %vm763, %v731, 0.0
    %v828 = vadd.f32 %v826, %v827
    %v829 = vsel %vm763, %v732, 0.0
    %v830 = vadd.f32 %v828, %v829
    %v831 = vsel %vm763, %v733, 0.0
    %v832 = vadd.f32 %v830, %v831
    %v833 = vsel %vm763, %v734, 0.0
    %v834 = vadd.f32 %v832, %v833
    %v835 = vsel %vm763, %v735, 0.0
    %v836 = vadd.f32 %v834, %v835
    %v837 = vsel %vm763, %v736, 0.0
    %v838 = vadd.f32 %v836, %v837
    %v839 = vsel %vm763, %v737, 0.0
    %v840 = vadd.f32 %v838, %v839
    %v841 = vsel %vm763, %v738, 0.0
    %v842 = vadd.f32 %v840, %v841
    %v843 = vsel %vm763, %v739, 0.0
    %v844 = vadd.f32 %v842, %v843
    %v845 = vsel %vm763, %v740, 0.0
    %v846 = vadd.f32 %v844, %v845
    %v847 = vsel %vm763, %v741, 0.0
    %v848 = vadd.f32 %v846, %v847
    %v849 = vsel %vm763, %v742, 0.0
    %v850 = vadd.f32 %v848, %v849
    %v851 = vsel %vm763, %v743, 0.0
    %v852 = vadd.f32 %v850, %v851
    %v853 = vsel %vm763, %v744, 0.0
    %v854 = vadd.f32 %v852, %v853
    %v855 = vsel %vm763, %v745, 0.0
    %v856 = vadd.f32 %v854, %v855
    %v857 = vsel %vm763, %v746, 0.0
    %v858 = vadd.f32 %v856, %v857
    %v859 = vsel %vm763, %v747, 0.0
    %v860 = vadd.f32 %v858, %v859
    %v861 = vsel %vm763, %v748, 0.0
    %v862 = vadd.f32 %v860, %v861
    %v863 = vsel %vm763, %v749, 0.0
    %v864 = vadd.f32 %v862, %v863
    %v865 = vsel %vm763, %v750, 0.0
    %v866 = vadd.f32 %v864, %v865
    %v867 = vsel %vm763, %v751, 0.0
    %v868 = vadd.f32 %v866, %v867
    %v869 = vsel %vm763, %v752, 0.0
    %v870 = vadd.f32 %v868, %v869
    %v871 = vsel %vm763, %v753, 0.0
    %v872 = vadd.f32 %v870, %v871
    %v873 = vsel %vm763, %v754, 0.0
    %v874 = vadd.f32 %v872, %v873
    %v875 = vsel %vm763, %v755, 0.0
    %v876 = vadd.f32 %v874, %v875
    %v877 = vsel %vm763, %v756, 0.0
    %v878 = vadd.f32 %v876, %v877
    %v879 = vsel %vm763, %v757, 0.0
    %v880 = vadd.f32 %v878, %v879
    %v881 = vsel %vm763, %v758, 0.0
    %v882 = vadd.f32 %v880, %v881
    %v883 = vsel %vm763, %v759, 0.0
    %v884 = vadd.f32 %v882, %v883
    %v885 = vsel %vm763, %v760, 0.0
    %v886 = vadd.f32 %v884, %v885
    %v887 = vsel %vm763, %v761, 0.0
    %v888 = vadd.f32 %v886, %v887
    %v889 = vsel %vm763, %v762, 0.0
    %v890 = vadd.f32 %v888, %v889
    %v891 = vrot.slane %v890, 4
    %v892 = vadd.f32 %v890, %v891
    %v893 = vrot.slane %v892, 2
    %v894 = vadd.f32 %v892, %v893
    %v895 = vrot.slane %v894, 1
    %v896 = vadd.f32 %v894, %v895
    %897 = vmatprep.subr.mxu0 0.0
    %898 = vmatpush1.msra.mxu0 %v290
    %899 = vmatprep.subr.mxu0 0.0
    %900 = vmatpush1.msra.mxu0 %v291
    %901 = vmatprep.subr.mxu0 0.0
    %902 = vmatpush1.msra.mxu0 %v292
    %903 = vmatprep.subr.mxu0 0.0
    %904 = vmatpush1.msra.mxu0 %v293
    %905 = vmatprep.subr.mxu0 0.0
    %906 = vmatpush1.msra.mxu0 %v294
    %907 = vmatprep.subr.mxu0 0.0
    %908 = vmatpush1.msra.mxu0 %v295
    %909 = vmatprep.subr.mxu0 0.0
    %910 = vmatpush1.msra.mxu0 %v296
    %911 = vmatprep.subr.mxu0 0.0
    %912 = vmatpush1.msra.mxu0 %v297
    %913 = vmatprep.subr.mxu0 0.0
    %914 = vmatpush1.msra.mxu0 %v298
    %915 = vmatprep.subr.mxu0 0.0
    %916 = vmatpush1.msra.mxu0 %v299
    %917 = vmatprep.subr.mxu0 0.0
    %918 = vmatpush1.msra.mxu0 %v300
    %919 = vmatprep.subr.mxu0 0.0
    %920 = vmatpush1.msra.mxu0 %v301
    %921 = vmatprep.subr.mxu0 0.0
    %922 = vmatpush1.msra.mxu0 %v302
    %923 = vmatprep.subr.mxu0 0.0
    %924 = vmatpush1.msra.mxu0 %v303
    %925 = vmatprep.subr.mxu0 0.0
    %926 = vmatpush1.msra.mxu0 %v304
    %927 = vmatprep.subr.mxu0 0.0
    %928 = vmatpush1.msra.mxu0 %v305
    %929 = vmatprep.subr.mxu0 0.0
    %930 = vmatpush1.msra.mxu0 0.0
    %931 = vmatprep.subr.mxu0 0.0
    %932 = vmatpush1.msra.mxu0 0.0
    %933 = vmatprep.subr.mxu0 0.0
    %934 = vmatpush1.msra.mxu0 0.0
    %935 = vmatprep.subr.mxu0 0.0
    %936 = vmatpush1.msra.mxu0 0.0
    %937 = vmatprep.subr.mxu0 0.0
    %938 = vmatpush1.msra.mxu0 0.0
    %939 = vmatprep.subr.mxu0 0.0
    %940 = vmatpush1.msra.mxu0 0.0
    %941 = vmatprep.subr.mxu0 0.0
    %942 = vmatpush1.msra.mxu0 0.0
    %943 = vmatprep.subr.mxu0 0.0
    %944 = vmatpush1.msra.mxu0 0.0
    %945 = vmatprep.subr.mxu0 0.0
    %946 = vmatpush1.msra.mxu0 0.0
    %947 = vmatprep.subr.mxu0 0.0
    %948 = vmatpush1.msra.mxu0 0.0
    %949 = vmatprep.subr.mxu0 0.0
    %950 = vmatpush1.msra.mxu0 0.0
    %951 = vmatprep.subr.mxu0 0.0
    %952 = vmatpush1.msra.mxu0 0.0
    %953 = vmatprep.subr.mxu0 0.0
    %954 = vmatpush1.msra.mxu0 0.0
    %955 = vmatprep.subr.mxu0 0.0
    %956 = vmatpush1.msra.mxu0 0.0
    %957 = vmatprep.subr.mxu0 0.0
    %958 = vmatpush1.msra.mxu0 0.0
    %959 = vmatprep.subr.mxu0 0.0
    %960 = vmatpush1.msra.mxu0 0.0
    %961 = vmatprep.mubr.f32.mxu0 0.0
    %962 = vmatmul.mubr.f32.gmra.mrb[0].mxu0 %v35
    %v963 = vpop.f32.mrb[0].mxu0
    %v964 = vadd.f32 %v312, %v963
    %v965 = vpop.f32.mrb[0].mxu0
    %966 = vmatprep.mubr.f32.mxu0 0.0
    %967 = vmatmul.mubr.f32.gmra.mrb[0].mxu0 %v39
    %v968 = vpop.f32.mrb[0].mxu0
    %v969 = vadd.f32 %v312, %v968
    %v970 = vpop.f32.mrb[0].mxu0
    %971 = vmatprep.mubr.f32.mxu0 0.0
    %972 = vmatmul.mubr.f32.gmra.mrb[0].mxu0 %v43
    %v973 = vpop.f32.mrb[0].mxu0
    %v974 = vadd.f32 %v312, %v973
    %v975 = vpop.f32.mrb[0].mxu0
    %976 = vmatprep.mubr.f32.mxu0 0.0
    %977 = vmatmul.mubr.f32.gmra.mrb[0].mxu0 %v47
    %v978 = vpop.f32.mrb[0].mxu0
    %v979 = vadd.f32 %v312, %v978
    %v980 = vpop.f32.mrb[0].mxu0
    %981 = vmatprep.mubr.f32.mxu0 0.0
    %982 = vmatmul.mubr.f32.gmra.mrb[0].mxu0 %v51
    %v983 = vpop.f32.mrb[0].mxu0
    %v984 = vadd.f32 %v312, %v983
    %v985 = vpop.f32.mrb[0].mxu0
    %986 = vmatprep.mubr.f32.mxu0 0.0
    %987 = vmatmul.mubr.f32.gmra.mrb[0].mxu0 %v55
    %v988 = vpop.f32.mrb[0].mxu0
    %v989 = vadd.f32 %v312, %v988
    %v990 = vpop.f32.mrb[0].mxu0
    %991 = vmatprep.mubr.f32.mxu0 0.0
    %992 = vmatmul.mubr.f32.gmra.mrb[0].mxu0 %v59
    %v993 = vpop.f32.mrb[0].mxu0
    %v994 = vadd.f32 %v312, %v993
    %v995 = vpop.f32.mrb[0].mxu0
    %996 = vmatprep.mubr.f32.mxu0 0.0
    %997 = vmatmul.mubr.f32.gmra.mrb[0].mxu0 %v63
    %v998 = vpop.f32.mrb[0].mxu0
    %v999 = vadd.f32 %v312, %v998
    %v1000 = vpop.f32.mrb[0].mxu0
    %1001 = vmatprep.mubr.f32.mxu0 0.0
    %1002 = vmatmul.mubr.f32.gmra.mrb[0].mxu0 %v67
    %v1003 = vpop.f32.mrb[0].mxu0
    %v1004 = vadd.f32 %v312, %v1003
    %v1005 = vpop.f32.mrb[0].mxu0
    %1006 = vmatprep.mubr.f32.mxu0 0.0
    %1007 = vmatmul.mubr.f32.gmra.mrb[0].mxu0 %v71
    %v1008 = vpop.f32.mrb[0].mxu0
    %v1009 = vadd.f32 %v312, %v1008
    %v1010 = vpop.f32.mrb[0].mxu0
    %1011 = vmatprep.mubr.f32.mxu0 0.0
    %1012 = vmatmul.mubr.f32.gmra.mrb[0].mxu0 %v75
    %v1013 = vpop.f32.mrb[0].mxu0
    %v1014 = vadd.f32 %v312, %v1013
    %v1015 = vpop.f32.mrb[0].mxu0
    %1016 = vmatprep.mubr.f32.mxu0 0.0
    %1017 = vmatmul.mubr.f32.gmra.mrb[0].mxu0 %v79
    %v1018 = vpop.f32.mrb[0].mxu0
    %v1019 = vadd.f32 %v312, %v1018
    %v1020 = vpop.f32.mrb[0].mxu0
    %1021 = vmatprep.mubr.f32.mxu0 0.0
    %1022 = vmatmul.mubr.f32.gmra.mrb[0].mxu0 %v83
    %v1023 = vpop.f32.mrb[0].mxu0
    %v1024 = vadd.f32 %v312, %v1023
    %v1025 = vpop.f32.mrb[0].mxu0
    %1026 = vmatprep.mubr.f32.mxu0 0.0
    %1027 = vmatmul.mubr.f32.gmra.mrb[0].mxu0 %v87
    %v1028 = vpop.f32.mrb[0].mxu0
    %v1029 = vadd.f32 %v312, %v1028
    %v1030 = vpop.f32.mrb[0].mxu0
    %1031 = vmatprep.mubr.f32.mxu0 0.0
    %1032 = vmatmul.mubr.f32.gmra.mrb[0].mxu0 %v91
    %v1033 = vpop.f32.mrb[0].mxu0
    %v1034 = vadd.f32 %v312, %v1033
    %v1035 = vpop.f32.mrb[0].mxu0
    %1036 = vmatprep.mubr.f32.mxu0 0.0
    %1037 = vmatmul.mubr.f32.gmra.mrb[0].mxu0 %v95
    %v1038 = vpop.f32.mrb[0].mxu0
    %v1039 = vadd.f32 %v312, %v1038
    %v1040 = vpop.f32.mrb[0].mxu0
    %1041 = vmatprep.mubr.f32.mxu0 0.0
    %1042 = vmatmul.mubr.f32.gmra.mrb[0].mxu0 %v99
    %v1043 = vpop.f32.mrb[0].mxu0
    %v1044 = vadd.f32 %v312, %v1043
    %v1045 = vpop.f32.mrb[0].mxu0
    %1046 = vmatprep.mubr.f32.mxu0 0.0
    %1047 = vmatmul.mubr.f32.gmra.mrb[0].mxu0 %v103
    %v1048 = vpop.f32.mrb[0].mxu0
    %v1049 = vadd.f32 %v312, %v1048
    %v1050 = vpop.f32.mrb[0].mxu0
    %1051 = vmatprep.mubr.f32.mxu0 0.0
    %1052 = vmatmul.mubr.f32.gmra.mrb[0].mxu0 %v107
    %v1053 = vpop.f32.mrb[0].mxu0
    %v1054 = vadd.f32 %v312, %v1053
    %v1055 = vpop.f32.mrb[0].mxu0
    %1056 = vmatprep.mubr.f32.mxu0 0.0
    %1057 = vmatmul.mubr.f32.gmra.mrb[0].mxu0 %v111
    %v1058 = vpop.f32.mrb[0].mxu0
    %v1059 = vadd.f32 %v312, %v1058
    %v1060 = vpop.f32.mrb[0].mxu0
    %1061 = vmatprep.mubr.f32.mxu0 0.0
    %1062 = vmatmul.mubr.f32.gmra.mrb[0].mxu0 %v115
    %v1063 = vpop.f32.mrb[0].mxu0
    %v1064 = vadd.f32 %v312, %v1063
    %v1065 = vpop.f32.mrb[0].mxu0
    %1066 = vmatprep.mubr.f32.mxu0 0.0
    %1067 = vmatmul.mubr.f32.gmra.mrb[0].mxu0 %v119
    %v1068 = vpop.f32.mrb[0].mxu0
    %v1069 = vadd.f32 %v312, %v1068
    %v1070 = vpop.f32.mrb[0].mxu0
    %1071 = vmatprep.mubr.f32.mxu0 0.0
    %1072 = vmatmul.mubr.f32.gmra.mrb[0].mxu0 %v123
    %v1073 = vpop.f32.mrb[0].mxu0
    %v1074 = vadd.f32 %v312, %v1073
    %v1075 = vpop.f32.mrb[0].mxu0
    %1076 = vmatprep.mubr.f32.mxu0 0.0
    %1077 = vmatmul.mubr.f32.gmra.mrb[0].mxu0 %v127
    %v1078 = vpop.f32.mrb[0].mxu0
    %v1079 = vadd.f32 %v312, %v1078
    %v1080 = vpop.f32.mrb[0].mxu0
    %1081 = vmatprep.mubr.f32.mxu0 0.0
    %1082 = vmatmul.mubr.f32.gmra.mrb[0].mxu0 %v131
    %v1083 = vpop.f32.mrb[0].mxu0
    %v1084 = vadd.f32 %v312, %v1083
    %v1085 = vpop.f32.mrb[0].mxu0
    %1086 = vmatprep.mubr.f32.mxu0 0.0
    %1087 = vmatmul.mubr.f32.gmra.mrb[0].mxu0 %v135
    %v1088 = vpop.f32.mrb[0].mxu0
    %v1089 = vadd.f32 %v312, %v1088
    %v1090 = vpop.f32.mrb[0].mxu0
    %1091 = vmatprep.mubr.f32.mxu0 0.0
    %1092 = vmatmul.mubr.f32.gmra.mrb[0].mxu0 %v139
    %v1093 = vpop.f32.mrb[0].mxu0
    %v1094 = vadd.f32 %v312, %v1093
    %v1095 = vpop.f32.mrb[0].mxu0
    %1096 = vmatprep.mubr.f32.mxu0 0.0
    %1097 = vmatmul.mubr.f32.gmra.mrb[0].mxu0 %v143
    %v1098 = vpop.f32.mrb[0].mxu0
    %v1099 = vadd.f32 %v312, %v1098
    %v1100 = vpop.f32.mrb[0].mxu0
    %1101 = vmatprep.mubr.f32.mxu0 0.0
    %1102 = vmatmul.mubr.f32.gmra.mrb[0].mxu0 %v147
    %v1103 = vpop.f32.mrb[0].mxu0
    %v1104 = vadd.f32 %v312, %v1103
    %v1105 = vpop.f32.mrb[0].mxu0
    %1106 = vmatprep.mubr.f32.mxu0 0.0
    %1107 = vmatmul.mubr.f32.gmra.mrb[0].mxu0 %v151
    %v1108 = vpop.f32.mrb[0].mxu0
    %v1109 = vadd.f32 %v312, %v1108
    %v1110 = vpop.f32.mrb[0].mxu0
    %1111 = vmatprep.mubr.f32.mxu0 0.0
    %1112 = vmatmul.mubr.f32.gmra.mrb[0].mxu0 %v155
    %v1113 = vpop.f32.mrb[0].mxu0
    %v1114 = vadd.f32 %v312, %v1113
    %v1115 = vpop.f32.mrb[0].mxu0
    %1116 = vmatprep.mubr.f32.mxu0 0.0
    %1117 = vmatmul.mubr.f32.gmra.mrb[0].mxu0 %v159
    %v1118 = vpop.f32.mrb[0].mxu0
    %v1119 = vadd.f32 %v312, %v1118
    %v1120 = vpop.f32.mrb[0].mxu0
    %1121 = vmatprep.mubr.f32.mxu0 0.0
    %1122 = vmatmul.mubr.f32.gmra.mrb[0].mxu0 %v163
    %v1123 = vpop.f32.mrb[0].mxu0
    %v1124 = vadd.f32 %v312, %v1123
    %v1125 = vpop.f32.mrb[0].mxu0
    %1126 = vmatprep.mubr.f32.mxu0 0.0
    %1127 = vmatmul.mubr.f32.gmra.mrb[0].mxu0 %v167
    %v1128 = vpop.f32.mrb[0].mxu0
    %v1129 = vadd.f32 %v312, %v1128
    %v1130 = vpop.f32.mrb[0].mxu0
    %1131 = vmatprep.mubr.f32.mxu0 0.0
    %1132 = vmatmul.mubr.f32.gmra.mrb[0].mxu0 %v171
    %v1133 = vpop.f32.mrb[0].mxu0
    %v1134 = vadd.f32 %v312, %v1133
    %v1135 = vpop.f32.mrb[0].mxu0
    %1136 = vmatprep.mubr.f32.mxu0 0.0
    %1137 = vmatmul.mubr.f32.gmra.mrb[0].mxu0 %v175
    %v1138 = vpop.f32.mrb[0].mxu0
    %v1139 = vadd.f32 %v312, %v1138
    %v1140 = vpop.f32.mrb[0].mxu0
    %1141 = vmatprep.mubr.f32.mxu0 0.0
    %1142 = vmatmul.mubr.f32.gmra.mrb[0].mxu0 %v179
    %v1143 = vpop.f32.mrb[0].mxu0
    %v1144 = vadd.f32 %v312, %v1143
    %v1145 = vpop.f32.mrb[0].mxu0
    %1146 = vmatprep.mubr.f32.mxu0 0.0
    %1147 = vmatmul.mubr.f32.gmra.mrb[0].mxu0 %v183
    %v1148 = vpop.f32.mrb[0].mxu0
    %v1149 = vadd.f32 %v312, %v1148
    %v1150 = vpop.f32.mrb[0].mxu0
    %1151 = vmatprep.mubr.f32.mxu0 0.0
    %1152 = vmatmul.mubr.f32.gmra.mrb[0].mxu0 %v187
    %v1153 = vpop.f32.mrb[0].mxu0
    %v1154 = vadd.f32 %v312, %v1153
    %v1155 = vpop.f32.mrb[0].mxu0
    %1156 = vmatprep.mubr.f32.mxu0 0.0
    %1157 = vmatmul.mubr.f32.gmra.mrb[0].mxu0 %v191
    %v1158 = vpop.f32.mrb[0].mxu0
    %v1159 = vadd.f32 %v312, %v1158
    %v1160 = vpop.f32.mrb[0].mxu0
    %1161 = vmatprep.mubr.f32.mxu0 0.0
    %1162 = vmatmul.mubr.f32.gmra.mrb[0].mxu0 %v195
    %v1163 = vpop.f32.mrb[0].mxu0
    %v1164 = vadd.f32 %v312, %v1163
    %v1165 = vpop.f32.mrb[0].mxu0
    %1166 = vmatprep.mubr.f32.mxu0 0.0
    %1167 = vmatmul.mubr.f32.gmra.mrb[0].mxu0 %v199
    %v1168 = vpop.f32.mrb[0].mxu0
    %v1169 = vadd.f32 %v312, %v1168
    %v1170 = vpop.f32.mrb[0].mxu0
    %1171 = vmatprep.mubr.f32.mxu0 0.0
    %1172 = vmatmul.mubr.f32.gmra.mrb[0].mxu0 %v203
    %v1173 = vpop.f32.mrb[0].mxu0
    %v1174 = vadd.f32 %v312, %v1173
    %v1175 = vpop.f32.mrb[0].mxu0
    %1176 = vmatprep.mubr.f32.mxu0 0.0
    %1177 = vmatmul.mubr.f32.gmra.mrb[0].mxu0 %v207
    %v1178 = vpop.f32.mrb[0].mxu0
    %v1179 = vadd.f32 %v312, %v1178
    %v1180 = vpop.f32.mrb[0].mxu0
    %1181 = vmatprep.mubr.f32.mxu0 0.0
    %1182 = vmatmul.mubr.f32.gmra.mrb[0].mxu0 %v211
    %v1183 = vpop.f32.mrb[0].mxu0
    %v1184 = vadd.f32 %v312, %v1183
    %v1185 = vpop.f32.mrb[0].mxu0
    %1186 = vmatprep.mubr.f32.mxu0 0.0
    %1187 = vmatmul.mubr.f32.gmra.mrb[0].mxu0 %v215
    %v1188 = vpop.f32.mrb[0].mxu0
    %v1189 = vadd.f32 %v312, %v1188
    %v1190 = vpop.f32.mrb[0].mxu0
    %1191 = vmatprep.mubr.f32.mxu0 0.0
    %1192 = vmatmul.mubr.f32.gmra.mrb[0].mxu0 %v219
    %v1193 = vpop.f32.mrb[0].mxu0
    %v1194 = vadd.f32 %v312, %v1193
    %v1195 = vpop.f32.mrb[0].mxu0
    %1196 = vmatprep.mubr.f32.mxu0 0.0
    %1197 = vmatmul.mubr.f32.gmra.mrb[0].mxu0 %v223
    %v1198 = vpop.f32.mrb[0].mxu0
    %v1199 = vadd.f32 %v312, %v1198
    %v1200 = vpop.f32.mrb[0].mxu0
    %1201 = vmatprep.mubr.f32.mxu0 0.0
    %1202 = vmatmul.mubr.f32.gmra.mrb[0].mxu0 %v227
    %v1203 = vpop.f32.mrb[0].mxu0
    %v1204 = vadd.f32 %v312, %v1203
    %v1205 = vpop.f32.mrb[0].mxu0
    %1206 = vmatprep.mubr.f32.mxu0 0.0
    %1207 = vmatmul.mubr.f32.gmra.mrb[0].mxu0 %v231
    %v1208 = vpop.f32.mrb[0].mxu0
    %v1209 = vadd.f32 %v312, %v1208
    %v1210 = vpop.f32.mrb[0].mxu0
    %1211 = vmatprep.mubr.f32.mxu0 0.0
    %1212 = vmatmul.mubr.f32.gmra.mrb[0].mxu0 %v235
    %v1213 = vpop.f32.mrb[0].mxu0
    %v1214 = vadd.f32 %v312, %v1213
    %v1215 = vpop.f32.mrb[0].mxu0
    %1216 = vmatprep.mubr.f32.mxu0 0.0
    %1217 = vmatmul.mubr.f32.gmra.mrb[0].mxu0 %v239
    %v1218 = vpop.f32.mrb[0].mxu0
    %v1219 = vadd.f32 %v312, %v1218
    %v1220 = vpop.f32.mrb[0].mxu0
    %1221 = vmatprep.mubr.f32.mxu0 0.0
    %1222 = vmatmul.mubr.f32.gmra.mrb[0].mxu0 %v243
    %v1223 = vpop.f32.mrb[0].mxu0
    %v1224 = vadd.f32 %v312, %v1223
    %v1225 = vpop.f32.mrb[0].mxu0
    %1226 = vmatprep.mubr.f32.mxu0 0.0
    %1227 = vmatmul.mubr.f32.gmra.mrb[0].mxu0 %v247
    %v1228 = vpop.f32.mrb[0].mxu0
    %v1229 = vadd.f32 %v312, %v1228
    %v1230 = vpop.f32.mrb[0].mxu0
    %1231 = vmatprep.mubr.f32.mxu0 0.0
    %1232 = vmatmul.mubr.f32.gmra.mrb[0].mxu0 %v251
    %v1233 = vpop.f32.mrb[0].mxu0
    %v1234 = vadd.f32 %v312, %v1233
    %v1235 = vpop.f32.mrb[0].mxu0
    %1236 = vmatprep.mubr.f32.mxu0 0.0
    %1237 = vmatmul.mubr.f32.gmra.mrb[0].mxu0 %v255
    %v1238 = vpop.f32.mrb[0].mxu0
    %v1239 = vadd.f32 %v312, %v1238
    %v1240 = vpop.f32.mrb[0].mxu0
    %1241 = vmatprep.mubr.f32.mxu0 0.0
    %1242 = vmatmul.mubr.f32.gmra.mrb[0].mxu0 %v259
    %v1243 = vpop.f32.mrb[0].mxu0
    %v1244 = vadd.f32 %v312, %v1243
    %v1245 = vpop.f32.mrb[0].mxu0
    %1246 = vmatprep.mubr.f32.mxu0 0.0
    %1247 = vmatmul.mubr.f32.gmra.mrb[0].mxu0 %v263
    %v1248 = vpop.f32.mrb[0].mxu0
    %v1249 = vadd.f32 %v312, %v1248
    %v1250 = vpop.f32.mrb[0].mxu0
    %1251 = vmatprep.mubr.f32.mxu0 0.0
    %1252 = vmatmul.mubr.f32.gmra.mrb[0].mxu0 %v267
    %v1253 = vpop.f32.mrb[0].mxu0
    %v1254 = vadd.f32 %v312, %v1253
    %v1255 = vpop.f32.mrb[0].mxu0
    %1256 = vmatprep.mubr.f32.mxu0 0.0
    %1257 = vmatmul.mubr.f32.gmra.mrb[0].mxu0 %v271
    %v1258 = vpop.f32.mrb[0].mxu0
    %v1259 = vadd.f32 %v312, %v1258
    %v1260 = vpop.f32.mrb[0].mxu0
    %1261 = vmatprep.mubr.f32.mxu0 0.0
    %1262 = vmatmul.mubr.f32.gmra.mrb[0].mxu0 %v275
    %v1263 = vpop.f32.mrb[0].mxu0
    %v1264 = vadd.f32 %v312, %v1263
    %v1265 = vpop.f32.mrb[0].mxu0
    %1266 = vmatprep.mubr.f32.mxu0 0.0
    %1267 = vmatmul.mubr.f32.gmra.mrb[0].mxu0 %v279
    %v1268 = vpop.f32.mrb[0].mxu0
    %v1269 = vadd.f32 %v312, %v1268
    %v1270 = vpop.f32.mrb[0].mxu0
    %1271 = vmatprep.mubr.f32.mxu0 0.0
    %1272 = vmatmul.mubr.f32.gmra.mrb[0].mxu0 %v283
    %v1273 = vpop.f32.mrb[0].mxu0
    %v1274 = vadd.f32 %v312, %v1273
    %v1275 = vpop.f32.mrb[0].mxu0
    %1276 = vmatprep.mubr.f32.mxu0 0.0
    %1277 = vmatmul.mubr.f32.gmra.mrb[0].mxu0 %v287
    %v1278 = vpop.f32.mrb[0].mxu0
    %v1279 = vadd.f32 %v312, %v1278
    %v1280 = vpop.f32.mrb[0].mxu0
    %1281 = vdwg.mxu0
    %v1282 = vtanh.pop %v964
    %v1283 = vtanh.pop %v969
    %v1284 = vtanh.pop %v974
    %v1285 = vtanh.pop %v979
    %v1286 = vtanh.pop %v984
    %v1287 = vtanh.pop %v989
    %v1288 = vtanh.pop %v994
    %v1289 = vtanh.pop %v999
    %v1290 = vtanh.pop %v1004
    %v1291 = vtanh.pop %v1009
    %v1292 = vtanh.pop %v1014
    %v1293 = vtanh.pop %v1019
    %v1294 = vtanh.pop %v1024
    %v1295 = vtanh.pop %v1029
    %v1296 = vtanh.pop %v1034
    %v1297 = vtanh.pop %v1039
    %v1298 = vtanh.pop %v1044
    %v1299 = vtanh.pop %v1049
    %v1300 = vtanh.pop %v1054
    %v1301 = vtanh.pop %v1059
    %v1302 = vtanh.pop %v1064
    %v1303 = vtanh.pop %v1069
    %v1304 = vtanh.pop %v1074
    %v1305 = vtanh.pop %v1079
    %v1306 = vtanh.pop %v1084
    %v1307 = vtanh.pop %v1089
    %v1308 = vtanh.pop %v1094
    %v1309 = vtanh.pop %v1099
    %v1310 = vtanh.pop %v1104
    %v1311 = vtanh.pop %v1109
    %v1312 = vtanh.pop %v1114
    %v1313 = vtanh.pop %v1119
    %v1314 = vtanh.pop %v1124
    %v1315 = vtanh.pop %v1129
    %v1316 = vtanh.pop %v1134
    %v1317 = vtanh.pop %v1139
    %v1318 = vtanh.pop %v1144
    %v1319 = vtanh.pop %v1149
    %v1320 = vtanh.pop %v1154
    %v1321 = vtanh.pop %v1159
    %v1322 = vtanh.pop %v1164
    %v1323 = vtanh.pop %v1169
    %v1324 = vtanh.pop %v1174
    %v1325 = vtanh.pop %v1179
    %v1326 = vtanh.pop %v1184
    %v1327 = vtanh.pop %v1189
    %v1328 = vtanh.pop %v1194
    %v1329 = vtanh.pop %v1199
    %v1330 = vtanh.pop %v1204
    %v1331 = vtanh.pop %v1209
    %v1332 = vtanh.pop %v1214
    %v1333 = vtanh.pop %v1219
    %v1334 = vtanh.pop %v1224
    %v1335 = vtanh.pop %v1229
    %v1336 = vtanh.pop %v1234
    %v1337 = vtanh.pop %v1239
    %v1338 = vtanh.pop %v1244
    %v1339 = vtanh.pop %v1249
    %v1340 = vtanh.pop %v1254
    %v1341 = vtanh.pop %v1259
    %v1342 = vtanh.pop %v1264
    %v1343 = vtanh.pop %v1269
    %v1344 = vtanh.pop %v1274
    %v1345 = vtanh.pop %v1279
    %v1346 = vsel %vm763, %v1282, 0.0
    %v1347 = vsel %vm763, %v1283, 0.0
    %v1348 = vadd.f32 %v1346, %v1347
    %v1349 = vsel %vm763, %v1284, 0.0
    %v1350 = vadd.f32 %v1348, %v1349
    %v1351 = vsel %vm763, %v1285, 0.0
    %v1352 = vadd.f32 %v1350, %v1351
    %v1353 = vsel %vm763, %v1286, 0.0
    %v1354 = vadd.f32 %v1352, %v1353
    %v1355 = vsel %vm763, %v1287, 0.0
    %v1356 = vadd.f32 %v1354, %v1355
    %v1357 = vsel %vm763, %v1288, 0.0
    %v1358 = vadd.f32 %v1356, %v1357
    %v1359 = vsel %vm763, %v1289, 0.0
    %v1360 = vadd.f32 %v1358, %v1359
    %v1361 = vsel %vm763, %v1290, 0.0
    %v1362 = vadd.f32 %v1360, %v1361
    %v1363 = vsel %vm763, %v1291, 0.0
    %v1364 = vadd.f32 %v1362, %v1363
    %v1365 = vsel %vm763, %v1292, 0.0
    %v1366 = vadd.f32 %v1364, %v1365
    %v1367 = vsel %vm763, %v1293, 0.0
    %v1368 = vadd.f32 %v1366, %v1367
    %v1369 = vsel %vm763, %v1294, 0.0
    %v1370 = vadd.f32 %v1368, %v1369
    %v1371 = vsel %vm763, %v1295, 0.0
    %v1372 = vadd.f32 %v1370, %v1371
    %v1373 = vsel %vm763, %v1296, 0.0
    %v1374 = vadd.f32 %v1372, %v1373
    %v1375 = vsel %vm763, %v1297, 0.0
    %v1376 = vadd.f32 %v1374, %v1375
    %v1377 = vsel %vm763, %v1298, 0.0
    %v1378 = vadd.f32 %v1376, %v1377
    %v1379 = vsel %vm763, %v1299, 0.0
    %v1380 = vadd.f32 %v1378, %v1379
    %v1381 = vsel %vm763, %v1300, 0.0
    %v1382 = vadd.f32 %v1380, %v1381
    %v1383 = vsel %vm763, %v1301, 0.0
    %v1384 = vadd.f32 %v1382, %v1383
    %v1385 = vsel %vm763, %v1302, 0.0
    %v1386 = vadd.f32 %v1384, %v1385
    %v1387 = vsel %vm763, %v1303, 0.0
    %v1388 = vadd.f32 %v1386, %v1387
    %v1389 = vsel %vm763, %v1304, 0.0
    %v1390 = vadd.f32 %v1388, %v1389
    %v1391 = vsel %vm763, %v1305, 0.0
    %v1392 = vadd.f32 %v1390, %v1391
    %v1393 = vsel %vm763, %v1306, 0.0
    %v1394 = vadd.f32 %v1392, %v1393
    %v1395 = vsel %vm763, %v1307, 0.0
    %v1396 = vadd.f32 %v1394, %v1395
    %v1397 = vsel %vm763, %v1308, 0.0
    %v1398 = vadd.f32 %v1396, %v1397
    %v1399 = vsel %vm763, %v1309, 0.0
    %v1400 = vadd.f32 %v1398, %v1399
    %v1401 = vsel %vm763, %v1310, 0.0
    %v1402 = vadd.f32 %v1400, %v1401
    %v1403 = vsel %vm763, %v1311, 0.0
    %v1404 = vadd.f32 %v1402, %v1403
    %v1405 = vsel %vm763, %v1312, 0.0
    %v1406 = vadd.f32 %v1404, %v1405
    %v1407 = vsel %vm763, %v1313, 0.0
    %v1408 = vadd.f32 %v1406, %v1407
    %v1409 = vsel %vm763, %v1314, 0.0
    %v1410 = vadd.f32 %v1408, %v1409
    %v1411 = vsel %vm763, %v1315, 0.0
    %v1412 = vadd.f32 %v1410, %v1411
    %v1413 = vsel %vm763, %v1316, 0.0
    %v1414 = vadd.f32 %v1412, %v1413
    %v1415 = vsel %vm763, %v1317, 0.0
    %v1416 = vadd.f32 %v1414, %v1415
    %v1417 = vsel %vm763, %v1318, 0.0
    %v1418 = vadd.f32 %v1416, %v1417
    %v1419 = vsel %vm763, %v1319, 0.0
    %v1420 = vadd.f32 %v1418, %v1419
    %v1421 = vsel %vm763, %v1320, 0.0
    %v1422 = vadd.f32 %v1420, %v1421
    %v1423 = vsel %vm763, %v1321, 0.0
    %v1424 = vadd.f32 %v1422, %v1423
    %v1425 = vsel %vm763, %v1322, 0.0
    %v1426 = vadd.f32 %v1424, %v1425
    %v1427 = vsel %vm763, %v1323, 0.0
    %v1428 = vadd.f32 %v1426, %v1427
    %v1429 = vsel %vm763, %v1324, 0.0
    %v1430 = vadd.f32 %v1428, %v1429
    %v1431 = vsel %vm763, %v1325, 0.0
    %v1432 = vadd.f32 %v1430, %v1431
    %v1433 = vsel %vm763, %v1326, 0.0
    %v1434 = vadd.f32 %v1432, %v1433
    %v1435 = vsel %vm763, %v1327, 0.0
    %v1436 = vadd.f32 %v1434, %v1435
    %v1437 = vsel %vm763, %v1328, 0.0
    %v1438 = vadd.f32 %v1436, %v1437
    %v1439 = vsel %vm763, %v1329, 0.0
    %v1440 = vadd.f32 %v1438, %v1439
    %v1441 = vsel %vm763, %v1330, 0.0
    %v1442 = vadd.f32 %v1440, %v1441
    %v1443 = vsel %vm763, %v1331, 0.0
    %v1444 = vadd.f32 %v1442, %v1443
    %v1445 = vsel %vm763, %v1332, 0.0
    %v1446 = vadd.f32 %v1444, %v1445
    %v1447 = vsel %vm763, %v1333, 0.0
    %v1448 = vadd.f32 %v1446, %v1447
    %v1449 = vsel %vm763, %v1334, 0.0
    %v1450 = vadd.f32 %v1448, %v1449
    %v1451 = vsel %vm763, %v1335, 0.0
    %v1452 = vadd.f32 %v1450, %v1451
    %v1453 = vsel %vm763, %v1336, 0.0
    %v1454 = vadd.f32 %v1452, %v1453
    %v1455 = vsel %vm763, %v1337, 0.0
    %v1456 = vadd.f32 %v1454, %v1455
    %v1457 = vsel %vm763, %v1338, 0.0
    %v1458 = vadd.f32 %v1456, %v1457
    %v1459 = vsel %vm763, %v1339, 0.0
    %v1460 = vadd.f32 %v1458, %v1459
    %v1461 = vsel %vm763, %v1340, 0.0
    %v1462 = vadd.f32 %v1460, %v1461
    %v1463 = vsel %vm763, %v1341, 0.0
    %v1464 = vadd.f32 %v1462, %v1463
    %v1465 = vsel %vm763, %v1342, 0.0
    %v1466 = vadd.f32 %v1464, %v1465
    %v1467 = vsel %vm763, %v1343, 0.0
    %v1468 = vadd.f32 %v1466, %v1467
    %v1469 = vsel %vm763, %v1344, 0.0
    %v1470 = vadd.f32 %v1468, %v1469
    %v1471 = vsel %vm763, %v1345, 0.0
    %v1472 = vadd.f32 %v1470, %v1471
    %v1473 = vrot.slane %v1472, 4
    %v1474 = vadd.f32 %v1472, %v1473
    %v1475 = vrot.slane %v1474, 2
    %v1476 = vadd.f32 %v1474, %v1475
    %v1477 = vrot.slane %v1476, 1
    %v1478 = vadd.f32 %v1476, %v1477
    %1479 = vmatprep.subr.mxu0 0.0
    %1480 = vmatpush1.msra.mxu0 %v290
    %1481 = vmatprep.subr.mxu0 0.0
    %1482 = vmatpush1.msra.mxu0 %v291
    %1483 = vmatprep.subr.mxu0 0.0
    %1484 = vmatpush1.msra.mxu0 %v292
    %1485 = vmatprep.subr.mxu0 0.0
    %1486 = vmatpush1.msra.mxu0 %v293
    %1487 = vmatprep.subr.mxu0 0.0
    %1488 = vmatpush1.msra.mxu0 %v294
    %1489 = vmatprep.subr.mxu0 0.0
    %1490 = vmatpush1.msra.mxu0 %v295
    %1491 = vmatprep.subr.mxu0 0.0
    %1492 = vmatpush1.msra.mxu0 %v296
    %1493 = vmatprep.subr.mxu0 0.0
    %1494 = vmatpush1.msra.mxu0 %v297
    %1495 = vmatprep.subr.mxu0 0.0
    %1496 = vmatpush1.msra.mxu0 %v298
    %1497 = vmatprep.subr.mxu0 0.0
    %1498 = vmatpush1.msra.mxu0 %v299
    %1499 = vmatprep.subr.mxu0 0.0
    %1500 = vmatpush1.msra.mxu0 %v300
    %1501 = vmatprep.subr.mxu0 0.0
    %1502 = vmatpush1.msra.mxu0 %v301
    %1503 = vmatprep.subr.mxu0 0.0
    %1504 = vmatpush1.msra.mxu0 %v302
    %1505 = vmatprep.subr.mxu0 0.0
    %1506 = vmatpush1.msra.mxu0 %v303
    %1507 = vmatprep.subr.mxu0 0.0
    %1508 = vmatpush1.msra.mxu0 %v304
    %1509 = vmatprep.subr.mxu0 0.0
    %1510 = vmatpush1.msra.mxu0 %v305
    %1511 = vmatprep.subr.mxu0 0.0
    %1512 = vmatpush1.msra.mxu0 0.0
    %1513 = vmatprep.subr.mxu0 0.0
    %1514 = vmatpush1.msra.mxu0 0.0
    %1515 = vmatprep.subr.mxu0 0.0
    %1516 = vmatpush1.msra.mxu0 0.0
    %1517 = vmatprep.subr.mxu0 0.0
    %1518 = vmatpush1.msra.mxu0 0.0
    %1519 = vmatprep.subr.mxu0 0.0
    %1520 = vmatpush1.msra.mxu0 0.0
    %1521 = vmatprep.subr.mxu0 0.0
    %1522 = vmatpush1.msra.mxu0 0.0
    %1523 = vmatprep.subr.mxu0 0.0
    %1524 = vmatpush1.msra.mxu0 0.0
    %1525 = vmatprep.subr.mxu0 0.0
    %1526 = vmatpush1.msra.mxu0 0.0
    %1527 = vmatprep.subr.mxu0 0.0
    %1528 = vmatpush1.msra.mxu0 0.0
    %1529 = vmatprep.subr.mxu0 0.0
    %1530 = vmatpush1.msra.mxu0 0.0
    %1531 = vmatprep.subr.mxu0 0.0
    %1532 = vmatpush1.msra.mxu0 0.0
    %1533 = vmatprep.subr.mxu0 0.0
    %1534 = vmatpush1.msra.mxu0 0.0
    %1535 = vmatprep.subr.mxu0 0.0
    %1536 = vmatpush1.msra.mxu0 0.0
    %1537 = vmatprep.subr.mxu0 0.0
    %1538 = vmatpush1.msra.mxu0 0.0
    %1539 = vmatprep.subr.mxu0 0.0
    %1540 = vmatpush1.msra.mxu0 0.0
    %1541 = vmatprep.subr.mxu0 0.0
    %1542 = vmatpush1.msra.mxu0 0.0
    %1543 = vmatprep.mubr.f32.mxu0 0.0
    %1544 = vmatmul.mubr.f32.gmra.mrb[0].mxu0 %v36
    %v1545 = vpop.f32.mrb[0].mxu0
    %v1546 = vadd.f32 %v312, %v1545
    %v1547 = vpop.f32.mrb[0].mxu0
    %1548 = vmatprep.mubr.f32.mxu0 0.0
    %1549 = vmatmul.mubr.f32.gmra.mrb[0].mxu0 %v40
    %v1550 = vpop.f32.mrb[0].mxu0
    %v1551 = vadd.f32 %v312, %v1550
    %v1552 = vpop.f32.mrb[0].mxu0
    %1553 = vmatprep.mubr.f32.mxu0 0.0
    %1554 = vmatmul.mubr.f32.gmra.mrb[0].mxu0 %v44
    %v1555 = vpop.f32.mrb[0].mxu0
    %v1556 = vadd.f32 %v312, %v1555
    %v1557 = vpop.f32.mrb[0].mxu0
    %1558 = vmatprep.mubr.f32.mxu0 0.0
    %1559 = vmatmul.mubr.f32.gmra.mrb[0].mxu0 %v48
    %v1560 = vpop.f32.mrb[0].mxu0
    %v1561 = vadd.f32 %v312, %v1560
    %v1562 = vpop.f32.mrb[0].mxu0
    %1563 = vmatprep.mubr.f32.mxu0 0.0
    %1564 = vmatmul.mubr.f32.gmra.mrb[0].mxu0 %v52
    %v1565 = vpop.f32.mrb[0].mxu0
    %v1566 = vadd.f32 %v312, %v1565
    %v1567 = vpop.f32.mrb[0].mxu0
    %1568 = vmatprep.mubr.f32.mxu0 0.0
    %1569 = vmatmul.mubr.f32.gmra.mrb[0].mxu0 %v56
    %v1570 = vpop.f32.mrb[0].mxu0
    %v1571 = vadd.f32 %v312, %v1570
    %v1572 = vpop.f32.mrb[0].mxu0
    %1573 = vmatprep.mubr.f32.mxu0 0.0
    %1574 = vmatmul.mubr.f32.gmra.mrb[0].mxu0 %v60
    %v1575 = vpop.f32.mrb[0].mxu0
    %v1576 = vadd.f32 %v312, %v1575
    %v1577 = vpop.f32.mrb[0].mxu0
    %1578 = vmatprep.mubr.f32.mxu0 0.0
    %1579 = vmatmul.mubr.f32.gmra.mrb[0].mxu0 %v64
    %v1580 = vpop.f32.mrb[0].mxu0
    %v1581 = vadd.f32 %v312, %v1580
    %v1582 = vpop.f32.mrb[0].mxu0
    %1583 = vmatprep.mubr.f32.mxu0 0.0
    %1584 = vmatmul.mubr.f32.gmra.mrb[0].mxu0 %v68
    %v1585 = vpop.f32.mrb[0].mxu0
    %v1586 = vadd.f32 %v312, %v1585
    %v1587 = vpop.f32.mrb[0].mxu0
    %1588 = vmatprep.mubr.f32.mxu0 0.0
    %1589 = vmatmul.mubr.f32.gmra.mrb[0].mxu0 %v72
    %v1590 = vpop.f32.mrb[0].mxu0
    %v1591 = vadd.f32 %v312, %v1590
    %v1592 = vpop.f32.mrb[0].mxu0
    %1593 = vmatprep.mubr.f32.mxu0 0.0
    %1594 = vmatmul.mubr.f32.gmra.mrb[0].mxu0 %v76
    %v1595 = vpop.f32.mrb[0].mxu0
    %v1596 = vadd.f32 %v312, %v1595
    %v1597 = vpop.f32.mrb[0].mxu0
    %1598 = vmatprep.mubr.f32.mxu0 0.0
    %1599 = vmatmul.mubr.f32.gmra.mrb[0].mxu0 %v80
    %v1600 = vpop.f32.mrb[0].mxu0
    %v1601 = vadd.f32 %v312, %v1600
    %v1602 = vpop.f32.mrb[0].mxu0
    %1603 = vmatprep.mubr.f32.mxu0 0.0
    %1604 = vmatmul.mubr.f32.gmra.mrb[0].mxu0 %v84
    %v1605 = vpop.f32.mrb[0].mxu0
    %v1606 = vadd.f32 %v312, %v1605
    %v1607 = vpop.f32.mrb[0].mxu0
    %1608 = vmatprep.mubr.f32.mxu0 0.0
    %1609 = vmatmul.mubr.f32.gmra.mrb[0].mxu0 %v88
    %v1610 = vpop.f32.mrb[0].mxu0
    %v1611 = vadd.f32 %v312, %v1610
    %v1612 = vpop.f32.mrb[0].mxu0
    %1613 = vmatprep.mubr.f32.mxu0 0.0
    %1614 = vmatmul.mubr.f32.gmra.mrb[0].mxu0 %v92
    %v1615 = vpop.f32.mrb[0].mxu0
    %v1616 = vadd.f32 %v312, %v1615
    %v1617 = vpop.f32.mrb[0].mxu0
    %1618 = vmatprep.mubr.f32.mxu0 0.0
    %1619 = vmatmul.mubr.f32.gmra.mrb[0].mxu0 %v96
    %v1620 = vpop.f32.mrb[0].mxu0
    %v1621 = vadd.f32 %v312, %v1620
    %v1622 = vpop.f32.mrb[0].mxu0
    %1623 = vmatprep.mubr.f32.mxu0 0.0
    %1624 = vmatmul.mubr.f32.gmra.mrb[0].mxu0 %v100
    %v1625 = vpop.f32.mrb[0].mxu0
    %v1626 = vadd.f32 %v312, %v1625
    %v1627 = vpop.f32.mrb[0].mxu0
    %1628 = vmatprep.mubr.f32.mxu0 0.0
    %1629 = vmatmul.mubr.f32.gmra.mrb[0].mxu0 %v104
    %v1630 = vpop.f32.mrb[0].mxu0
    %v1631 = vadd.f32 %v312, %v1630
    %v1632 = vpop.f32.mrb[0].mxu0
    %1633 = vmatprep.mubr.f32.mxu0 0.0
    %1634 = vmatmul.mubr.f32.gmra.mrb[0].mxu0 %v108
    %v1635 = vpop.f32.mrb[0].mxu0
    %v1636 = vadd.f32 %v312, %v1635
    %v1637 = vpop.f32.mrb[0].mxu0
    %1638 = vmatprep.mubr.f32.mxu0 0.0
    %1639 = vmatmul.mubr.f32.gmra.mrb[0].mxu0 %v112
    %v1640 = vpop.f32.mrb[0].mxu0
    %v1641 = vadd.f32 %v312, %v1640
    %v1642 = vpop.f32.mrb[0].mxu0
    %1643 = vmatprep.mubr.f32.mxu0 0.0
    %1644 = vmatmul.mubr.f32.gmra.mrb[0].mxu0 %v116
    %v1645 = vpop.f32.mrb[0].mxu0
    %v1646 = vadd.f32 %v312, %v1645
    %v1647 = vpop.f32.mrb[0].mxu0
    %1648 = vmatprep.mubr.f32.mxu0 0.0
    %1649 = vmatmul.mubr.f32.gmra.mrb[0].mxu0 %v120
    %v1650 = vpop.f32.mrb[0].mxu0
    %v1651 = vadd.f32 %v312, %v1650
    %v1652 = vpop.f32.mrb[0].mxu0
    %1653 = vmatprep.mubr.f32.mxu0 0.0
    %1654 = vmatmul.mubr.f32.gmra.mrb[0].mxu0 %v124
    %v1655 = vpop.f32.mrb[0].mxu0
    %v1656 = vadd.f32 %v312, %v1655
    %v1657 = vpop.f32.mrb[0].mxu0
    %1658 = vmatprep.mubr.f32.mxu0 0.0
    %1659 = vmatmul.mubr.f32.gmra.mrb[0].mxu0 %v128
    %v1660 = vpop.f32.mrb[0].mxu0
    %v1661 = vadd.f32 %v312, %v1660
    %v1662 = vpop.f32.mrb[0].mxu0
    %1663 = vmatprep.mubr.f32.mxu0 0.0
    %1664 = vmatmul.mubr.f32.gmra.mrb[0].mxu0 %v132
    %v1665 = vpop.f32.mrb[0].mxu0
    %v1666 = vadd.f32 %v312, %v1665
    %v1667 = vpop.f32.mrb[0].mxu0
    %1668 = vmatprep.mubr.f32.mxu0 0.0
    %1669 = vmatmul.mubr.f32.gmra.mrb[0].mxu0 %v136
    %v1670 = vpop.f32.mrb[0].mxu0
    %v1671 = vadd.f32 %v312, %v1670
    %v1672 = vpop.f32.mrb[0].mxu0
    %1673 = vmatprep.mubr.f32.mxu0 0.0
    %1674 = vmatmul.mubr.f32.gmra.mrb[0].mxu0 %v140
    %v1675 = vpop.f32.mrb[0].mxu0
    %v1676 = vadd.f32 %v312, %v1675
    %v1677 = vpop.f32.mrb[0].mxu0
    %1678 = vmatprep.mubr.f32.mxu0 0.0
    %1679 = vmatmul.mubr.f32.gmra.mrb[0].mxu0 %v144
    %v1680 = vpop.f32.mrb[0].mxu0
    %v1681 = vadd.f32 %v312, %v1680
    %v1682 = vpop.f32.mrb[0].mxu0
    %1683 = vmatprep.mubr.f32.mxu0 0.0
    %1684 = vmatmul.mubr.f32.gmra.mrb[0].mxu0 %v148
    %v1685 = vpop.f32.mrb[0].mxu0
    %v1686 = vadd.f32 %v312, %v1685
    %v1687 = vpop.f32.mrb[0].mxu0
    %1688 = vmatprep.mubr.f32.mxu0 0.0
    %1689 = vmatmul.mubr.f32.gmra.mrb[0].mxu0 %v152
    %v1690 = vpop.f32.mrb[0].mxu0
    %v1691 = vadd.f32 %v312, %v1690
    %v1692 = vpop.f32.mrb[0].mxu0
    %1693 = vmatprep.mubr.f32.mxu0 0.0
    %1694 = vmatmul.mubr.f32.gmra.mrb[0].mxu0 %v156
    %v1695 = vpop.f32.mrb[0].mxu0
    %v1696 = vadd.f32 %v312, %v1695
    %v1697 = vpop.f32.mrb[0].mxu0
    %1698 = vmatprep.mubr.f32.mxu0 0.0
    %1699 = vmatmul.mubr.f32.gmra.mrb[0].mxu0 %v160
    %v1700 = vpop.f32.mrb[0].mxu0
    %v1701 = vadd.f32 %v312, %v1700
    %v1702 = vpop.f32.mrb[0].mxu0
    %1703 = vmatprep.mubr.f32.mxu0 0.0
    %1704 = vmatmul.mubr.f32.gmra.mrb[0].mxu0 %v164
    %v1705 = vpop.f32.mrb[0].mxu0
    %v1706 = vadd.f32 %v312, %v1705
    %v1707 = vpop.f32.mrb[0].mxu0
    %1708 = vmatprep.mubr.f32.mxu0 0.0
    %1709 = vmatmul.mubr.f32.gmra.mrb[0].mxu0 %v168
    %v1710 = vpop.f32.mrb[0].mxu0
    %v1711 = vadd.f32 %v312, %v1710
    %v1712 = vpop.f32.mrb[0].mxu0
    %1713 = vmatprep.mubr.f32.mxu0 0.0
    %1714 = vmatmul.mubr.f32.gmra.mrb[0].mxu0 %v172
    %v1715 = vpop.f32.mrb[0].mxu0
    %v1716 = vadd.f32 %v312, %v1715
    %v1717 = vpop.f32.mrb[0].mxu0
    %1718 = vmatprep.mubr.f32.mxu0 0.0
    %1719 = vmatmul.mubr.f32.gmra.mrb[0].mxu0 %v176
    %v1720 = vpop.f32.mrb[0].mxu0
    %v1721 = vadd.f32 %v312, %v1720
    %v1722 = vpop.f32.mrb[0].mxu0
    %1723 = vmatprep.mubr.f32.mxu0 0.0
    %1724 = vmatmul.mubr.f32.gmra.mrb[0].mxu0 %v180
    %v1725 = vpop.f32.mrb[0].mxu0
    %v1726 = vadd.f32 %v312, %v1725
    %v1727 = vpop.f32.mrb[0].mxu0
    %1728 = vmatprep.mubr.f32.mxu0 0.0
    %1729 = vmatmul.mubr.f32.gmra.mrb[0].mxu0 %v184
    %v1730 = vpop.f32.mrb[0].mxu0
    %v1731 = vadd.f32 %v312, %v1730
    %v1732 = vpop.f32.mrb[0].mxu0
    %1733 = vmatprep.mubr.f32.mxu0 0.0
    %1734 = vmatmul.mubr.f32.gmra.mrb[0].mxu0 %v188
    %v1735 = vpop.f32.mrb[0].mxu0
    %v1736 = vadd.f32 %v312, %v1735
    %v1737 = vpop.f32.mrb[0].mxu0
    %1738 = vmatprep.mubr.f32.mxu0 0.0
    %1739 = vmatmul.mubr.f32.gmra.mrb[0].mxu0 %v192
    %v1740 = vpop.f32.mrb[0].mxu0
    %v1741 = vadd.f32 %v312, %v1740
    %v1742 = vpop.f32.mrb[0].mxu0
    %1743 = vmatprep.mubr.f32.mxu0 0.0
    %1744 = vmatmul.mubr.f32.gmra.mrb[0].mxu0 %v196
    %v1745 = vpop.f32.mrb[0].mxu0
    %v1746 = vadd.f32 %v312, %v1745
    %v1747 = vpop.f32.mrb[0].mxu0
    %1748 = vmatprep.mubr.f32.mxu0 0.0
    %1749 = vmatmul.mubr.f32.gmra.mrb[0].mxu0 %v200
    %v1750 = vpop.f32.mrb[0].mxu0
    %v1751 = vadd.f32 %v312, %v1750
    %v1752 = vpop.f32.mrb[0].mxu0
    %1753 = vmatprep.mubr.f32.mxu0 0.0
    %1754 = vmatmul.mubr.f32.gmra.mrb[0].mxu0 %v204
    %v1755 = vpop.f32.mrb[0].mxu0
    %v1756 = vadd.f32 %v312, %v1755
    %v1757 = vpop.f32.mrb[0].mxu0
    %1758 = vmatprep.mubr.f32.mxu0 0.0
    %1759 = vmatmul.mubr.f32.gmra.mrb[0].mxu0 %v208
    %v1760 = vpop.f32.mrb[0].mxu0
    %v1761 = vadd.f32 %v312, %v1760
    %v1762 = vpop.f32.mrb[0].mxu0
    %1763 = vmatprep.mubr.f32.mxu0 0.0
    %1764 = vmatmul.mubr.f32.gmra.mrb[0].mxu0 %v212
    %v1765 = vpop.f32.mrb[0].mxu0
    %v1766 = vadd.f32 %v312, %v1765
    %v1767 = vpop.f32.mrb[0].mxu0
    %1768 = vmatprep.mubr.f32.mxu0 0.0
    %1769 = vmatmul.mubr.f32.gmra.mrb[0].mxu0 %v216
    %v1770 = vpop.f32.mrb[0].mxu0
    %v1771 = vadd.f32 %v312, %v1770
    %v1772 = vpop.f32.mrb[0].mxu0
    %1773 = vmatprep.mubr.f32.mxu0 0.0
    %1774 = vmatmul.mubr.f32.gmra.mrb[0].mxu0 %v220
    %v1775 = vpop.f32.mrb[0].mxu0
    %v1776 = vadd.f32 %v312, %v1775
    %v1777 = vpop.f32.mrb[0].mxu0
    %1778 = vmatprep.mubr.f32.mxu0 0.0
    %1779 = vmatmul.mubr.f32.gmra.mrb[0].mxu0 %v224
    %v1780 = vpop.f32.mrb[0].mxu0
    %v1781 = vadd.f32 %v312, %v1780
    %v1782 = vpop.f32.mrb[0].mxu0
    %1783 = vmatprep.mubr.f32.mxu0 0.0
    %1784 = vmatmul.mubr.f32.gmra.mrb[0].mxu0 %v228
    %v1785 = vpop.f32.mrb[0].mxu0
    %v1786 = vadd.f32 %v312, %v1785
    %v1787 = vpop.f32.mrb[0].mxu0
    %1788 = vmatprep.mubr.f32.mxu0 0.0
    %1789 = vmatmul.mubr.f32.gmra.mrb[0].mxu0 %v232
    %v1790 = vpop.f32.mrb[0].mxu0
    %v1791 = vadd.f32 %v312, %v1790
    %v1792 = vpop.f32.mrb[0].mxu0
    %1793 = vmatprep.mubr.f32.mxu0 0.0
    %1794 = vmatmul.mubr.f32.gmra.mrb[0].mxu0 %v236
    %v1795 = vpop.f32.mrb[0].mxu0
    %v1796 = vadd.f32 %v312, %v1795
    %v1797 = vpop.f32.mrb[0].mxu0
    %1798 = vmatprep.mubr.f32.mxu0 0.0
    %1799 = vmatmul.mubr.f32.gmra.mrb[0].mxu0 %v240
    %v1800 = vpop.f32.mrb[0].mxu0
    %v1801 = vadd.f32 %v312, %v1800
    %v1802 = vpop.f32.mrb[0].mxu0
    %1803 = vmatprep.mubr.f32.mxu0 0.0
    %1804 = vmatmul.mubr.f32.gmra.mrb[0].mxu0 %v244
    %v1805 = vpop.f32.mrb[0].mxu0
    %v1806 = vadd.f32 %v312, %v1805
    %v1807 = vpop.f32.mrb[0].mxu0
    %1808 = vmatprep.mubr.f32.mxu0 0.0
    %1809 = vmatmul.mubr.f32.gmra.mrb[0].mxu0 %v248
    %v1810 = vpop.f32.mrb[0].mxu0
    %v1811 = vadd.f32 %v312, %v1810
    %v1812 = vpop.f32.mrb[0].mxu0
    %1813 = vmatprep.mubr.f32.mxu0 0.0
    %1814 = vmatmul.mubr.f32.gmra.mrb[0].mxu0 %v252
    %v1815 = vpop.f32.mrb[0].mxu0
    %v1816 = vadd.f32 %v312, %v1815
    %v1817 = vpop.f32.mrb[0].mxu0
    %1818 = vmatprep.mubr.f32.mxu0 0.0
    %1819 = vmatmul.mubr.f32.gmra.mrb[0].mxu0 %v256
    %v1820 = vpop.f32.mrb[0].mxu0
    %v1821 = vadd.f32 %v312, %v1820
    %v1822 = vpop.f32.mrb[0].mxu0
    %1823 = vmatprep.mubr.f32.mxu0 0.0
    %1824 = vmatmul.mubr.f32.gmra.mrb[0].mxu0 %v260
    %v1825 = vpop.f32.mrb[0].mxu0
    %v1826 = vadd.f32 %v312, %v1825
    %v1827 = vpop.f32.mrb[0].mxu0
    %1828 = vmatprep.mubr.f32.mxu0 0.0
    %1829 = vmatmul.mubr.f32.gmra.mrb[0].mxu0 %v264
    %v1830 = vpop.f32.mrb[0].mxu0
    %v1831 = vadd.f32 %v312, %v1830
    %v1832 = vpop.f32.mrb[0].mxu0
    %1833 = vmatprep.mubr.f32.mxu0 0.0
    %1834 = vmatmul.mubr.f32.gmra.mrb[0].mxu0 %v268
    %v1835 = vpop.f32.mrb[0].mxu0
    %v1836 = vadd.f32 %v312, %v1835
    %v1837 = vpop.f32.mrb[0].mxu0
    %1838 = vmatprep.mubr.f32.mxu0 0.0
    %1839 = vmatmul.mubr.f32.gmra.mrb[0].mxu0 %v272
    %v1840 = vpop.f32.mrb[0].mxu0
    %v1841 = vadd.f32 %v312, %v1840
    %v1842 = vpop.f32.mrb[0].mxu0
    %1843 = vmatprep.mubr.f32.mxu0 0.0
    %1844 = vmatmul.mubr.f32.gmra.mrb[0].mxu0 %v276
    %v1845 = vpop.f32.mrb[0].mxu0
    %v1846 = vadd.f32 %v312, %v1845
    %v1847 = vpop.f32.mrb[0].mxu0
    %1848 = vmatprep.mubr.f32.mxu0 0.0
    %1849 = vmatmul.mubr.f32.gmra.mrb[0].mxu0 %v280
    %v1850 = vpop.f32.mrb[0].mxu0
    %v1851 = vadd.f32 %v312, %v1850
    %v1852 = vpop.f32.mrb[0].mxu0
    %1853 = vmatprep.mubr.f32.mxu0 0.0
    %1854 = vmatmul.mubr.f32.gmra.mrb[0].mxu0 %v284
    %v1855 = vpop.f32.mrb[0].mxu0
    %v1856 = vadd.f32 %v312, %v1855
    %v1857 = vpop.f32.mrb[0].mxu0
    %1858 = vmatprep.mubr.f32.mxu0 0.0
    %1859 = vmatmul.mubr.f32.gmra.mrb[0].mxu0 %v288
    %v1860 = vpop.f32.mrb[0].mxu0
    %v1861 = vadd.f32 %v312, %v1860
    %v1862 = vpop.f32.mrb[0].mxu0
    %1863 = vdwg.mxu0
    %v1864 = vtanh.pop %v1546
    %v1865 = vtanh.pop %v1551
    %v1866 = vtanh.pop %v1556
    %v1867 = vtanh.pop %v1561
    %v1868 = vtanh.pop %v1566
    %v1869 = vtanh.pop %v1571
    %v1870 = vtanh.pop %v1576
    %v1871 = vtanh.pop %v1581
    %v1872 = vtanh.pop %v1586
    %v1873 = vtanh.pop %v1591
    %v1874 = vtanh.pop %v1596
    %v1875 = vtanh.pop %v1601
    %v1876 = vtanh.pop %v1606
    %v1877 = vtanh.pop %v1611
    %v1878 = vtanh.pop %v1616
    %v1879 = vtanh.pop %v1621
    %v1880 = vtanh.pop %v1626
    %v1881 = vtanh.pop %v1631
    %v1882 = vtanh.pop %v1636
    %v1883 = vtanh.pop %v1641
    %v1884 = vtanh.pop %v1646
    %v1885 = vtanh.pop %v1651
    %v1886 = vtanh.pop %v1656
    %v1887 = vtanh.pop %v1661
    %v1888 = vtanh.pop %v1666
    %v1889 = vtanh.pop %v1671
    %v1890 = vtanh.pop %v1676
    %v1891 = vtanh.pop %v1681
    %v1892 = vtanh.pop %v1686
    %v1893 = vtanh.pop %v1691
    %v1894 = vtanh.pop %v1696
    %v1895 = vtanh.pop %v1701
    %v1896 = vtanh.pop %v1706
    %v1897 = vtanh.pop %v1711
    %v1898 = vtanh.pop %v1716
    %v1899 = vtanh.pop %v1721
    %v1900 = vtanh.pop %v1726
    %v1901 = vtanh.pop %v1731
    %v1902 = vtanh.pop %v1736
    %v1903 = vtanh.pop %v1741
    %v1904 = vtanh.pop %v1746
    %v1905 = vtanh.pop %v1751
    %v1906 = vtanh.pop %v1756
    %v1907 = vtanh.pop %v1761
    %v1908 = vtanh.pop %v1766
    %v1909 = vtanh.pop %v1771
    %v1910 = vtanh.pop %v1776
    %v1911 = vtanh.pop %v1781
    %v1912 = vtanh.pop %v1786
    %v1913 = vtanh.pop %v1791
    %v1914 = vtanh.pop %v1796
    %v1915 = vtanh.pop %v1801
    %v1916 = vtanh.pop %v1806
    %v1917 = vtanh.pop %v1811
    %v1918 = vtanh.pop %v1816
    %v1919 = vtanh.pop %v1821
    %v1920 = vtanh.pop %v1826
    %v1921 = vtanh.pop %v1831
    %v1922 = vtanh.pop %v1836
    %v1923 = vtanh.pop %v1841
    %v1924 = vtanh.pop %v1846
    %v1925 = vtanh.pop %v1851
    %v1926 = vtanh.pop %v1856
    %v1927 = vtanh.pop %v1861
    %v1928 = vsel %vm763, %v1864, 0.0
    %v1929 = vsel %vm763, %v1865, 0.0
    %v1930 = vadd.f32 %v1928, %v1929
    %v1931 = vsel %vm763, %v1866, 0.0
    %v1932 = vadd.f32 %v1930, %v1931
    %v1933 = vsel %vm763, %v1867, 0.0
    %v1934 = vadd.f32 %v1932, %v1933
    %v1935 = vsel %vm763, %v1868, 0.0
    %v1936 = vadd.f32 %v1934, %v1935
    %v1937 = vsel %vm763, %v1869, 0.0
    %v1938 = vadd.f32 %v1936, %v1937
    %v1939 = vsel %vm763, %v1870, 0.0
    %v1940 = vadd.f32 %v1938, %v1939
    %v1941 = vsel %vm763, %v1871, 0.0
    %v1942 = vadd.f32 %v1940, %v1941
    %v1943 = vsel %vm763, %v1872, 0.0
    %v1944 = vadd.f32 %v1942, %v1943
    %v1945 = vsel %vm763, %v1873, 0.0
    %v1946 = vadd.f32 %v1944, %v1945
    %v1947 = vsel %vm763, %v1874, 0.0
    %v1948 = vadd.f32 %v1946, %v1947
    %v1949 = vsel %vm763, %v1875, 0.0
    %v1950 = vadd.f32 %v1948, %v1949
    %v1951 = vsel %vm763, %v1876, 0.0
    %v1952 = vadd.f32 %v1950, %v1951
    %v1953 = vsel %vm763, %v1877, 0.0
    %v1954 = vadd.f32 %v1952, %v1953
    %v1955 = vsel %vm763, %v1878, 0.0
    %v1956 = vadd.f32 %v1954, %v1955
    %v1957 = vsel %vm763, %v1879, 0.0
    %v1958 = vadd.f32 %v1956, %v1957
    %v1959 = vsel %vm763, %v1880, 0.0
    %v1960 = vadd.f32 %v1958, %v1959
    %v1961 = vsel %vm763, %v1881, 0.0
    %v1962 = vadd.f32 %v1960, %v1961
    %v1963 = vsel %vm763, %v1882, 0.0
    %v1964 = vadd.f32 %v1962, %v1963
    %v1965 = vsel %vm763, %v1883, 0.0
    %v1966 = vadd.f32 %v1964, %v1965
    %v1967 = vsel %vm763, %v1884, 0.0
    %v1968 = vadd.f32 %v1966, %v1967
    %v1969 = vsel %vm763, %v1885, 0.0
    %v1970 = vadd.f32 %v1968, %v1969
    %v1971 = vsel %vm763, %v1886, 0.0
    %v1972 = vadd.f32 %v1970, %v1971
    %v1973 = vsel %vm763, %v1887, 0.0
    %v1974 = vadd.f32 %v1972, %v1973
    %v1975 = vsel %vm763, %v1888, 0.0
    %v1976 = vadd.f32 %v1974, %v1975
    %v1977 = vsel %vm763, %v1889, 0.0
    %v1978 = vadd.f32 %v1976, %v1977
    %v1979 = vsel %vm763, %v1890, 0.0
    %v1980 = vadd.f32 %v1978, %v1979
    %v1981 = vsel %vm763, %v1891, 0.0
    %v1982 = vadd.f32 %v1980, %v1981
    %v1983 = vsel %vm763, %v1892, 0.0
    %v1984 = vadd.f32 %v1982, %v1983
    %v1985 = vsel %vm763, %v1893, 0.0
    %v1986 = vadd.f32 %v1984, %v1985
    %v1987 = vsel %vm763, %v1894, 0.0
    %v1988 = vadd.f32 %v1986, %v1987
    %v1989 = vsel %vm763, %v1895, 0.0
    %v1990 = vadd.f32 %v1988, %v1989
    %v1991 = vsel %vm763, %v1896, 0.0
    %v1992 = vadd.f32 %v1990, %v1991
    %v1993 = vsel %vm763, %v1897, 0.0
    %v1994 = vadd.f32 %v1992, %v1993
    %v1995 = vsel %vm763, %v1898, 0.0
    %v1996 = vadd.f32 %v1994, %v1995
    %v1997 = vsel %vm763, %v1899, 0.0
    %v1998 = vadd.f32 %v1996, %v1997
    %v1999 = vsel %vm763, %v1900, 0.0
    %v2000 = vadd.f32 %v1998, %v1999
    %v2001 = vsel %vm763, %v1901, 0.0
    %v2002 = vadd.f32 %v2000, %v2001
    %v2003 = vsel %vm763, %v1902, 0.0
    %v2004 = vadd.f32 %v2002, %v2003
    %v2005 = vsel %vm763, %v1903, 0.0
    %v2006 = vadd.f32 %v2004, %v2005
    %v2007 = vsel %vm763, %v1904, 0.0
    %v2008 = vadd.f32 %v2006, %v2007
    %v2009 = vsel %vm763, %v1905, 0.0
    %v2010 = vadd.f32 %v2008, %v2009
    %v2011 = vsel %vm763, %v1906, 0.0
    %v2012 = vadd.f32 %v2010, %v2011
    %v2013 = vsel %vm763, %v1907, 0.0
    %v2014 = vadd.f32 %v2012, %v2013
    %v2015 = vsel %vm763, %v1908, 0.0
    %v2016 = vadd.f32 %v2014, %v2015
    %v2017 = vsel %vm763, %v1909, 0.0
    %v2018 = vadd.f32 %v2016, %v2017
    %v2019 = vsel %vm763, %v1910, 0.0
    %v2020 = vadd.f32 %v2018, %v2019
    %v2021 = vsel %vm763, %v1911, 0.0
    %v2022 = vadd.f32 %v2020, %v2021
    %v2023 = vsel %vm763, %v1912, 0.0
    %v2024 = vadd.f32 %v2022, %v2023
    %v2025 = vsel %vm763, %v1913, 0.0
    %v2026 = vadd.f32 %v2024, %v2025
    %v2027 = vsel %vm763, %v1914, 0.0
    %v2028 = vadd.f32 %v2026, %v2027
    %v2029 = vsel %vm763, %v1915, 0.0
    %v2030 = vadd.f32 %v2028, %v2029
    %v2031 = vsel %vm763, %v1916, 0.0
    %v2032 = vadd.f32 %v2030, %v2031
    %v2033 = vsel %vm763, %v1917, 0.0
    %v2034 = vadd.f32 %v2032, %v2033
    %v2035 = vsel %vm763, %v1918, 0.0
    %v2036 = vadd.f32 %v2034, %v2035
    %v2037 = vsel %vm763, %v1919, 0.0
    %v2038 = vadd.f32 %v2036, %v2037
    %v2039 = vsel %vm763, %v1920, 0.0
    %v2040 = vadd.f32 %v2038, %v2039
    %v2041 = vsel %vm763, %v1921, 0.0
    %v2042 = vadd.f32 %v2040, %v2041
    %v2043 = vsel %vm763, %v1922, 0.0
    %v2044 = vadd.f32 %v2042, %v2043
    %v2045 = vsel %vm763, %v1923, 0.0
    %v2046 = vadd.f32 %v2044, %v2045
    %v2047 = vsel %vm763, %v1924, 0.0
    %v2048 = vadd.f32 %v2046, %v2047
    %v2049 = vsel %vm763, %v1925, 0.0
    %v2050 = vadd.f32 %v2048, %v2049
    %v2051 = vsel %vm763, %v1926, 0.0
    %v2052 = vadd.f32 %v2050, %v2051
    %v2053 = vsel %vm763, %v1927, 0.0
    %v2054 = vadd.f32 %v2052, %v2053
    %v2055 = vrot.slane %v2054, 4
    %v2056 = vadd.f32 %v2054, %v2055
    %v2057 = vrot.slane %v2056, 2
    %v2058 = vadd.f32 %v2056, %v2057
    %v2059 = vrot.slane %v2058, 1
    %v2060 = vadd.f32 %v2058, %v2059
    %2061 = vmatprep.subr.mxu0 0.0
    %2062 = vmatpush1.msra.mxu0 %v290
    %2063 = vmatprep.subr.mxu0 0.0
    %2064 = vmatpush1.msra.mxu0 %v291
    %2065 = vmatprep.subr.mxu0 0.0
    %2066 = vmatpush1.msra.mxu0 %v292
    %2067 = vmatprep.subr.mxu0 0.0
    %2068 = vmatpush1.msra.mxu0 %v293
    %2069 = vmatprep.subr.mxu0 0.0
    %2070 = vmatpush1.msra.mxu0 %v294
    %2071 = vmatprep.subr.mxu0 0.0
    %2072 = vmatpush1.msra.mxu0 %v295
    %2073 = vmatprep.subr.mxu0 0.0
    %2074 = vmatpush1.msra.mxu0 %v296
    %2075 = vmatprep.subr.mxu0 0.0
    %2076 = vmatpush1.msra.mxu0 %v297
    %2077 = vmatprep.subr.mxu0 0.0
    %2078 = vmatpush1.msra.mxu0 %v298
    %2079 = vmatprep.subr.mxu0 0.0
    %2080 = vmatpush1.msra.mxu0 %v299
    %2081 = vmatprep.subr.mxu0 0.0
    %2082 = vmatpush1.msra.mxu0 %v300
    %2083 = vmatprep.subr.mxu0 0.0
    %2084 = vmatpush1.msra.mxu0 %v301
    %2085 = vmatprep.subr.mxu0 0.0
    %2086 = vmatpush1.msra.mxu0 %v302
    %2087 = vmatprep.subr.mxu0 0.0
    %2088 = vmatpush1.msra.mxu0 %v303
    %2089 = vmatprep.subr.mxu0 0.0
    %2090 = vmatpush1.msra.mxu0 %v304
    %2091 = vmatprep.subr.mxu0 0.0
    %2092 = vmatpush1.msra.mxu0 %v305
    %2093 = vmatprep.subr.mxu0 0.0
    %2094 = vmatpush1.msra.mxu0 0.0
    %2095 = vmatprep.subr.mxu0 0.0
    %2096 = vmatpush1.msra.mxu0 0.0
    %2097 = vmatprep.subr.mxu0 0.0
    %2098 = vmatpush1.msra.mxu0 0.0
    %2099 = vmatprep.subr.mxu0 0.0
    %2100 = vmatpush1.msra.mxu0 0.0
    %2101 = vmatprep.subr.mxu0 0.0
    %2102 = vmatpush1.msra.mxu0 0.0
    %2103 = vmatprep.subr.mxu0 0.0
    %2104 = vmatpush1.msra.mxu0 0.0
    %2105 = vmatprep.subr.mxu0 0.0
    %2106 = vmatpush1.msra.mxu0 0.0
    %2107 = vmatprep.subr.mxu0 0.0
    %2108 = vmatpush1.msra.mxu0 0.0
    %2109 = vmatprep.subr.mxu0 0.0
    %2110 = vmatpush1.msra.mxu0 0.0
    %2111 = vmatprep.subr.mxu0 0.0
    %2112 = vmatpush1.msra.mxu0 0.0
    %2113 = vmatprep.subr.mxu0 0.0
    %2114 = vmatpush1.msra.mxu0 0.0
    %2115 = vmatprep.subr.mxu0 0.0
    %2116 = vmatpush1.msra.mxu0 0.0
    %2117 = vmatprep.subr.mxu0 0.0
    %2118 = vmatpush1.msra.mxu0 0.0
    %2119 = vmatprep.subr.mxu0 0.0
    %2120 = vmatpush1.msra.mxu0 0.0
    %2121 = vmatprep.subr.mxu0 0.0
    %2122 = vmatpush1.msra.mxu0 0.0
    %2123 = vmatprep.subr.mxu0 0.0
    %2124 = vmatpush1.msra.mxu0 0.0
    %2125 = vmatprep.mubr.f32.mxu0 0.0
    %2126 = vmatmul.mubr.f32.gmra.mrb[0].mxu0 %v37
    %v2127 = vpop.f32.mrb[0].mxu0
    %v2128 = vadd.f32 %v312, %v2127
    %v2129 = vpop.f32.mrb[0].mxu0
    %2130 = vmatprep.mubr.f32.mxu0 0.0
    %2131 = vmatmul.mubr.f32.gmra.mrb[0].mxu0 %v41
    %v2132 = vpop.f32.mrb[0].mxu0
    %v2133 = vadd.f32 %v312, %v2132
    %v2134 = vpop.f32.mrb[0].mxu0
    %2135 = vmatprep.mubr.f32.mxu0 0.0
    %2136 = vmatmul.mubr.f32.gmra.mrb[0].mxu0 %v45
    %v2137 = vpop.f32.mrb[0].mxu0
    %v2138 = vadd.f32 %v312, %v2137
    %v2139 = vpop.f32.mrb[0].mxu0
    %2140 = vmatprep.mubr.f32.mxu0 0.0
    %2141 = vmatmul.mubr.f32.gmra.mrb[0].mxu0 %v49
    %v2142 = vpop.f32.mrb[0].mxu0
    %v2143 = vadd.f32 %v312, %v2142
    %v2144 = vpop.f32.mrb[0].mxu0
    %2145 = vmatprep.mubr.f32.mxu0 0.0
    %2146 = vmatmul.mubr.f32.gmra.mrb[0].mxu0 %v53
    %v2147 = vpop.f32.mrb[0].mxu0
    %v2148 = vadd.f32 %v312, %v2147
    %v2149 = vpop.f32.mrb[0].mxu0
    %2150 = vmatprep.mubr.f32.mxu0 0.0
    %2151 = vmatmul.mubr.f32.gmra.mrb[0].mxu0 %v57
    %v2152 = vpop.f32.mrb[0].mxu0
    %v2153 = vadd.f32 %v312, %v2152
    %v2154 = vpop.f32.mrb[0].mxu0
    %2155 = vmatprep.mubr.f32.mxu0 0.0
    %2156 = vmatmul.mubr.f32.gmra.mrb[0].mxu0 %v61
    %v2157 = vpop.f32.mrb[0].mxu0
    %v2158 = vadd.f32 %v312, %v2157
    %v2159 = vpop.f32.mrb[0].mxu0
    %2160 = vmatprep.mubr.f32.mxu0 0.0
    %2161 = vmatmul.mubr.f32.gmra.mrb[0].mxu0 %v65
    %v2162 = vpop.f32.mrb[0].mxu0
    %v2163 = vadd.f32 %v312, %v2162
    %v2164 = vpop.f32.mrb[0].mxu0
    %2165 = vmatprep.mubr.f32.mxu0 0.0
    %2166 = vmatmul.mubr.f32.gmra.mrb[0].mxu0 %v69
    %v2167 = vpop.f32.mrb[0].mxu0
    %v2168 = vadd.f32 %v312, %v2167
    %v2169 = vpop.f32.mrb[0].mxu0
    %2170 = vmatprep.mubr.f32.mxu0 0.0
    %2171 = vmatmul.mubr.f32.gmra.mrb[0].mxu0 %v73
    %v2172 = vpop.f32.mrb[0].mxu0
    %v2173 = vadd.f32 %v312, %v2172
    %v2174 = vpop.f32.mrb[0].mxu0
    %2175 = vmatprep.mubr.f32.mxu0 0.0
    %2176 = vmatmul.mubr.f32.gmra.mrb[0].mxu0 %v77
    %v2177 = vpop.f32.mrb[0].mxu0
    %v2178 = vadd.f32 %v312, %v2177
    %v2179 = vpop.f32.mrb[0].mxu0
    %2180 = vmatprep.mubr.f32.mxu0 0.0
    %2181 = vmatmul.mubr.f32.gmra.mrb[0].mxu0 %v81
    %v2182 = vpop.f32.mrb[0].mxu0
    %v2183 = vadd.f32 %v312, %v2182
    %v2184 = vpop.f32.mrb[0].mxu0
    %2185 = vmatprep.mubr.f32.mxu0 0.0
    %2186 = vmatmul.mubr.f32.gmra.mrb[0].mxu0 %v85
    %v2187 = vpop.f32.mrb[0].mxu0
    %v2188 = vadd.f32 %v312, %v2187
    %v2189 = vpop.f32.mrb[0].mxu0
    %2190 = vmatprep.mubr.f32.mxu0 0.0
    %2191 = vmatmul.mubr.f32.gmra.mrb[0].mxu0 %v89
    %v2192 = vpop.f32.mrb[0].mxu0
    %v2193 = vadd.f32 %v312, %v2192
    %v2194 = vpop.f32.mrb[0].mxu0
    %2195 = vmatprep.mubr.f32.mxu0 0.0
    %2196 = vmatmul.mubr.f32.gmra.mrb[0].mxu0 %v93
    %v2197 = vpop.f32.mrb[0].mxu0
    %v2198 = vadd.f32 %v312, %v2197
    %v2199 = vpop.f32.mrb[0].mxu0
    %2200 = vmatprep.mubr.f32.mxu0 0.0
    %2201 = vmatmul.mubr.f32.gmra.mrb[0].mxu0 %v97
    %v2202 = vpop.f32.mrb[0].mxu0
    %v2203 = vadd.f32 %v312, %v2202
    %v2204 = vpop.f32.mrb[0].mxu0
    %2205 = vmatprep.mubr.f32.mxu0 0.0
    %2206 = vmatmul.mubr.f32.gmra.mrb[0].mxu0 %v101
    %v2207 = vpop.f32.mrb[0].mxu0
    %v2208 = vadd.f32 %v312, %v2207
    %v2209 = vpop.f32.mrb[0].mxu0
    %2210 = vmatprep.mubr.f32.mxu0 0.0
    %2211 = vmatmul.mubr.f32.gmra.mrb[0].mxu0 %v105
    %v2212 = vpop.f32.mrb[0].mxu0
    %v2213 = vadd.f32 %v312, %v2212
    %v2214 = vpop.f32.mrb[0].mxu0
    %2215 = vmatprep.mubr.f32.mxu0 0.0
    %2216 = vmatmul.mubr.f32.gmra.mrb[0].mxu0 %v109
    %v2217 = vpop.f32.mrb[0].mxu0
    %v2218 = vadd.f32 %v312, %v2217
    %v2219 = vpop.f32.mrb[0].mxu0
    %2220 = vmatprep.mubr.f32.mxu0 0.0
    %2221 = vmatmul.mubr.f32.gmra.mrb[0].mxu0 %v113
    %v2222 = vpop.f32.mrb[0].mxu0
    %v2223 = vadd.f32 %v312, %v2222
    %v2224 = vpop.f32.mrb[0].mxu0
    %2225 = vmatprep.mubr.f32.mxu0 0.0
    %2226 = vmatmul.mubr.f32.gmra.mrb[0].mxu0 %v117
    %v2227 = vpop.f32.mrb[0].mxu0
    %v2228 = vadd.f32 %v312, %v2227
    %v2229 = vpop.f32.mrb[0].mxu0
    %2230 = vmatprep.mubr.f32.mxu0 0.0
    %2231 = vmatmul.mubr.f32.gmra.mrb[0].mxu0 %v121
    %v2232 = vpop.f32.mrb[0].mxu0
    %v2233 = vadd.f32 %v312, %v2232
    %v2234 = vpop.f32.mrb[0].mxu0
    %2235 = vmatprep.mubr.f32.mxu0 0.0
    %2236 = vmatmul.mubr.f32.gmra.mrb[0].mxu0 %v125
    %v2237 = vpop.f32.mrb[0].mxu0
    %v2238 = vadd.f32 %v312, %v2237
    %v2239 = vpop.f32.mrb[0].mxu0
    %2240 = vmatprep.mubr.f32.mxu0 0.0
    %2241 = vmatmul.mubr.f32.gmra.mrb[0].mxu0 %v129
    %v2242 = vpop.f32.mrb[0].mxu0
    %v2243 = vadd.f32 %v312, %v2242
    %v2244 = vpop.f32.mrb[0].mxu0
    %2245 = vmatprep.mubr.f32.mxu0 0.0
    %2246 = vmatmul.mubr.f32.gmra.mrb[0].mxu0 %v133
    %v2247 = vpop.f32.mrb[0].mxu0
    %v2248 = vadd.f32 %v312, %v2247
    %v2249 = vpop.f32.mrb[0].mxu0
    %2250 = vmatprep.mubr.f32.mxu0 0.0
    %2251 = vmatmul.mubr.f32.gmra.mrb[0].mxu0 %v137
    %v2252 = vpop.f32.mrb[0].mxu0
    %v2253 = vadd.f32 %v312, %v2252
    %v2254 = vpop.f32.mrb[0].mxu0
    %2255 = vmatprep.mubr.f32.mxu0 0.0
    %2256 = vmatmul.mubr.f32.gmra.mrb[0].mxu0 %v141
    %v2257 = vpop.f32.mrb[0].mxu0
    %v2258 = vadd.f32 %v312, %v2257
    %v2259 = vpop.f32.mrb[0].mxu0
    %2260 = vmatprep.mubr.f32.mxu0 0.0
    %2261 = vmatmul.mubr.f32.gmra.mrb[0].mxu0 %v145
    %v2262 = vpop.f32.mrb[0].mxu0
    %v2263 = vadd.f32 %v312, %v2262
    %v2264 = vpop.f32.mrb[0].mxu0
    %2265 = vmatprep.mubr.f32.mxu0 0.0
    %2266 = vmatmul.mubr.f32.gmra.mrb[0].mxu0 %v149
    %v2267 = vpop.f32.mrb[0].mxu0
    %v2268 = vadd.f32 %v312, %v2267
    %v2269 = vpop.f32.mrb[0].mxu0
    %2270 = vmatprep.mubr.f32.mxu0 0.0
    %2271 = vmatmul.mubr.f32.gmra.mrb[0].mxu0 %v153
    %v2272 = vpop.f32.mrb[0].mxu0
    %v2273 = vadd.f32 %v312, %v2272
    %v2274 = vpop.f32.mrb[0].mxu0
    %2275 = vmatprep.mubr.f32.mxu0 0.0
    %2276 = vmatmul.mubr.f32.gmra.mrb[0].mxu0 %v157
    %v2277 = vpop.f32.mrb[0].mxu0
    %v2278 = vadd.f32 %v312, %v2277
    %v2279 = vpop.f32.mrb[0].mxu0
    %2280 = vmatprep.mubr.f32.mxu0 0.0
    %2281 = vmatmul.mubr.f32.gmra.mrb[0].mxu0 %v161
    %v2282 = vpop.f32.mrb[0].mxu0
    %v2283 = vadd.f32 %v312, %v2282
    %v2284 = vpop.f32.mrb[0].mxu0
    %2285 = vmatprep.mubr.f32.mxu0 0.0
    %2286 = vmatmul.mubr.f32.gmra.mrb[0].mxu0 %v165
    %v2287 = vpop.f32.mrb[0].mxu0
    %v2288 = vadd.f32 %v312, %v2287
    %v2289 = vpop.f32.mrb[0].mxu0
    %2290 = vmatprep.mubr.f32.mxu0 0.0
    %2291 = vmatmul.mubr.f32.gmra.mrb[0].mxu0 %v169
    %v2292 = vpop.f32.mrb[0].mxu0
    %v2293 = vadd.f32 %v312, %v2292
    %v2294 = vpop.f32.mrb[0].mxu0
    %2295 = vmatprep.mubr.f32.mxu0 0.0
    %2296 = vmatmul.mubr.f32.gmra.mrb[0].mxu0 %v173
    %v2297 = vpop.f32.mrb[0].mxu0
    %v2298 = vadd.f32 %v312, %v2297
    %v2299 = vpop.f32.mrb[0].mxu0
    %2300 = vmatprep.mubr.f32.mxu0 0.0
    %2301 = vmatmul.mubr.f32.gmra.mrb[0].mxu0 %v177
    %v2302 = vpop.f32.mrb[0].mxu0
    %v2303 = vadd.f32 %v312, %v2302
    %v2304 = vpop.f32.mrb[0].mxu0
    %2305 = vmatprep.mubr.f32.mxu0 0.0
    %2306 = vmatmul.mubr.f32.gmra.mrb[0].mxu0 %v181
    %v2307 = vpop.f32.mrb[0].mxu0
    %v2308 = vadd.f32 %v312, %v2307
    %v2309 = vpop.f32.mrb[0].mxu0
    %2310 = vmatprep.mubr.f32.mxu0 0.0
    %2311 = vmatmul.mubr.f32.gmra.mrb[0].mxu0 %v185
    %v2312 = vpop.f32.mrb[0].mxu0
    %v2313 = vadd.f32 %v312, %v2312
    %v2314 = vpop.f32.mrb[0].mxu0
    %2315 = vmatprep.mubr.f32.mxu0 0.0
    %2316 = vmatmul.mubr.f32.gmra.mrb[0].mxu0 %v189
    %v2317 = vpop.f32.mrb[0].mxu0
    %v2318 = vadd.f32 %v312, %v2317
    %v2319 = vpop.f32.mrb[0].mxu0
    %2320 = vmatprep.mubr.f32.mxu0 0.0
    %2321 = vmatmul.mubr.f32.gmra.mrb[0].mxu0 %v193
    %v2322 = vpop.f32.mrb[0].mxu0
    %v2323 = vadd.f32 %v312, %v2322
    %v2324 = vpop.f32.mrb[0].mxu0
    %2325 = vmatprep.mubr.f32.mxu0 0.0
    %2326 = vmatmul.mubr.f32.gmra.mrb[0].mxu0 %v197
    %v2327 = vpop.f32.mrb[0].mxu0
    %v2328 = vadd.f32 %v312, %v2327
    %v2329 = vpop.f32.mrb[0].mxu0
    %2330 = vmatprep.mubr.f32.mxu0 0.0
    %2331 = vmatmul.mubr.f32.gmra.mrb[0].mxu0 %v201
    %v2332 = vpop.f32.mrb[0].mxu0
    %v2333 = vadd.f32 %v312, %v2332
    %v2334 = vpop.f32.mrb[0].mxu0
    %2335 = vmatprep.mubr.f32.mxu0 0.0
    %2336 = vmatmul.mubr.f32.gmra.mrb[0].mxu0 %v205
    %v2337 = vpop.f32.mrb[0].mxu0
    %v2338 = vadd.f32 %v312, %v2337
    %v2339 = vpop.f32.mrb[0].mxu0
    %2340 = vmatprep.mubr.f32.mxu0 0.0
    %2341 = vmatmul.mubr.f32.gmra.mrb[0].mxu0 %v209
    %v2342 = vpop.f32.mrb[0].mxu0
    %v2343 = vadd.f32 %v312, %v2342
    %v2344 = vpop.f32.mrb[0].mxu0
    %2345 = vmatprep.mubr.f32.mxu0 0.0
    %2346 = vmatmul.mubr.f32.gmra.mrb[0].mxu0 %v213
    %v2347 = vpop.f32.mrb[0].mxu0
    %v2348 = vadd.f32 %v312, %v2347
    %v2349 = vpop.f32.mrb[0].mxu0
    %2350 = vmatprep.mubr.f32.mxu0 0.0
    %2351 = vmatmul.mubr.f32.gmra.mrb[0].mxu0 %v217
    %v2352 = vpop.f32.mrb[0].mxu0
    %v2353 = vadd.f32 %v312, %v2352
    %v2354 = vpop.f32.mrb[0].mxu0
    %2355 = vmatprep.mubr.f32.mxu0 0.0
    %2356 = vmatmul.mubr.f32.gmra.mrb[0].mxu0 %v221
    %v2357 = vpop.f32.mrb[0].mxu0
    %v2358 = vadd.f32 %v312, %v2357
    %v2359 = vpop.f32.mrb[0].mxu0
    %2360 = vmatprep.mubr.f32.mxu0 0.0
    %2361 = vmatmul.mubr.f32.gmra.mrb[0].mxu0 %v225
    %v2362 = vpop.f32.mrb[0].mxu0
    %v2363 = vadd.f32 %v312, %v2362
    %v2364 = vpop.f32.mrb[0].mxu0
    %2365 = vmatprep.mubr.f32.mxu0 0.0
    %2366 = vmatmul.mubr.f32.gmra.mrb[0].mxu0 %v229
    %v2367 = vpop.f32.mrb[0].mxu0
    %v2368 = vadd.f32 %v312, %v2367
    %v2369 = vpop.f32.mrb[0].mxu0
    %2370 = vmatprep.mubr.f32.mxu0 0.0
    %2371 = vmatmul.mubr.f32.gmra.mrb[0].mxu0 %v233
    %v2372 = vpop.f32.mrb[0].mxu0
    %v2373 = vadd.f32 %v312, %v2372
    %v2374 = vpop.f32.mrb[0].mxu0
    %2375 = vmatprep.mubr.f32.mxu0 0.0
    %2376 = vmatmul.mubr.f32.gmra.mrb[0].mxu0 %v237
    %v2377 = vpop.f32.mrb[0].mxu0
    %v2378 = vadd.f32 %v312, %v2377
    %v2379 = vpop.f32.mrb[0].mxu0
    %2380 = vmatprep.mubr.f32.mxu0 0.0
    %2381 = vmatmul.mubr.f32.gmra.mrb[0].mxu0 %v241
    %v2382 = vpop.f32.mrb[0].mxu0
    %v2383 = vadd.f32 %v312, %v2382
    %v2384 = vpop.f32.mrb[0].mxu0
    %2385 = vmatprep.mubr.f32.mxu0 0.0
    %2386 = vmatmul.mubr.f32.gmra.mrb[0].mxu0 %v245
    %v2387 = vpop.f32.mrb[0].mxu0
    %v2388 = vadd.f32 %v312, %v2387
    %v2389 = vpop.f32.mrb[0].mxu0
    %2390 = vmatprep.mubr.f32.mxu0 0.0
    %2391 = vmatmul.mubr.f32.gmra.mrb[0].mxu0 %v249
    %v2392 = vpop.f32.mrb[0].mxu0
    %v2393 = vadd.f32 %v312, %v2392
    %v2394 = vpop.f32.mrb[0].mxu0
    %2395 = vmatprep.mubr.f32.mxu0 0.0
    %2396 = vmatmul.mubr.f32.gmra.mrb[0].mxu0 %v253
    %v2397 = vpop.f32.mrb[0].mxu0
    %v2398 = vadd.f32 %v312, %v2397
    %v2399 = vpop.f32.mrb[0].mxu0
    %2400 = vmatprep.mubr.f32.mxu0 0.0
    %2401 = vmatmul.mubr.f32.gmra.mrb[0].mxu0 %v257
    %v2402 = vpop.f32.mrb[0].mxu0
    %v2403 = vadd.f32 %v312, %v2402
    %v2404 = vpop.f32.mrb[0].mxu0
    %2405 = vmatprep.mubr.f32.mxu0 0.0
    %2406 = vmatmul.mubr.f32.gmra.mrb[0].mxu0 %v261
    %v2407 = vpop.f32.mrb[0].mxu0
    %v2408 = vadd.f32 %v312, %v2407
    %v2409 = vpop.f32.mrb[0].mxu0
    %2410 = vmatprep.mubr.f32.mxu0 0.0
    %2411 = vmatmul.mubr.f32.gmra.mrb[0].mxu0 %v265
    %v2412 = vpop.f32.mrb[0].mxu0
    %v2413 = vadd.f32 %v312, %v2412
    %v2414 = vpop.f32.mrb[0].mxu0
    %2415 = vmatprep.mubr.f32.mxu0 0.0
    %2416 = vmatmul.mubr.f32.gmra.mrb[0].mxu0 %v269
    %v2417 = vpop.f32.mrb[0].mxu0
    %v2418 = vadd.f32 %v312, %v2417
    %v2419 = vpop.f32.mrb[0].mxu0
    %2420 = vmatprep.mubr.f32.mxu0 0.0
    %2421 = vmatmul.mubr.f32.gmra.mrb[0].mxu0 %v273
    %v2422 = vpop.f32.mrb[0].mxu0
    %v2423 = vadd.f32 %v312, %v2422
    %v2424 = vpop.f32.mrb[0].mxu0
    %2425 = vmatprep.mubr.f32.mxu0 0.0
    %2426 = vmatmul.mubr.f32.gmra.mrb[0].mxu0 %v277
    %v2427 = vpop.f32.mrb[0].mxu0
    %v2428 = vadd.f32 %v312, %v2427
    %v2429 = vpop.f32.mrb[0].mxu0
    %2430 = vmatprep.mubr.f32.mxu0 0.0
    %2431 = vmatmul.mubr.f32.gmra.mrb[0].mxu0 %v281
    %v2432 = vpop.f32.mrb[0].mxu0
    %v2433 = vadd.f32 %v312, %v2432
    %v2434 = vpop.f32.mrb[0].mxu0
    %2435 = vmatprep.mubr.f32.mxu0 0.0
    %2436 = vmatmul.mubr.f32.gmra.mrb[0].mxu0 %v285
    %v2437 = vpop.f32.mrb[0].mxu0
    %v2438 = vadd.f32 %v312, %v2437
    %v2439 = vpop.f32.mrb[0].mxu0
    %2440 = vmatprep.mubr.f32.mxu0 0.0
    %2441 = vmatmul.mubr.f32.gmra.mrb[0].mxu0 %v289
    %v2442 = vpop.f32.mrb[0].mxu0
    %v2443 = vadd.f32 %v312, %v2442
    %v2444 = vpop.f32.mrb[0].mxu0
    %2445 = vdwg.mxu0
    %v2446 = vtanh.pop %v2128
    %v2447 = vtanh.pop %v2133
    %v2448 = vtanh.pop %v2138
    %v2449 = vtanh.pop %v2143
    %v2450 = vtanh.pop %v2148
    %v2451 = vtanh.pop %v2153
    %v2452 = vtanh.pop %v2158
    %v2453 = vtanh.pop %v2163
    %v2454 = vtanh.pop %v2168
    %v2455 = vtanh.pop %v2173
    %v2456 = vtanh.pop %v2178
    %v2457 = vtanh.pop %v2183
    %v2458 = vtanh.pop %v2188
    %v2459 = vtanh.pop %v2193
    %v2460 = vtanh.pop %v2198
    %v2461 = vtanh.pop %v2203
    %v2462 = vtanh.pop %v2208
    %v2463 = vtanh.pop %v2213
    %v2464 = vtanh.pop %v2218
    %v2465 = vtanh.pop %v2223
    %v2466 = vtanh.pop %v2228
    %v2467 = vtanh.pop %v2233
    %v2468 = vtanh.pop %v2238
    %v2469 = vtanh.pop %v2243
    %v2470 = vtanh.pop %v2248
    %v2471 = vtanh.pop %v2253
    %v2472 = vtanh.pop %v2258
    %v2473 = vtanh.pop %v2263
    %v2474 = vtanh.pop %v2268
    %v2475 = vtanh.pop %v2273
    %v2476 = vtanh.pop %v2278
    %v2477 = vtanh.pop %v2283
    %v2478 = vtanh.pop %v2288
    %v2479 = vtanh.pop %v2293
    %v2480 = vtanh.pop %v2298
    %v2481 = vtanh.pop %v2303
    %v2482 = vtanh.pop %v2308
    %v2483 = vtanh.pop %v2313
    %v2484 = vtanh.pop %v2318
    %v2485 = vtanh.pop %v2323
    %v2486 = vtanh.pop %v2328
    %v2487 = vtanh.pop %v2333
    %v2488 = vtanh.pop %v2338
    %v2489 = vtanh.pop %v2343
    %v2490 = vtanh.pop %v2348
    %v2491 = vtanh.pop %v2353
    %v2492 = vtanh.pop %v2358
    %v2493 = vtanh.pop %v2363
    %v2494 = vtanh.pop %v2368
    %v2495 = vtanh.pop %v2373
    %v2496 = vtanh.pop %v2378
    %v2497 = vtanh.pop %v2383
    %v2498 = vtanh.pop %v2388
    %v2499 = vtanh.pop %v2393
    %v2500 = vtanh.pop %v2398
    %v2501 = vtanh.pop %v2403
    %v2502 = vtanh.pop %v2408
    %v2503 = vtanh.pop %v2413
    %v2504 = vtanh.pop %v2418
    %v2505 = vtanh.pop %v2423
    %v2506 = vtanh.pop %v2428
    %v2507 = vtanh.pop %v2433
    %v2508 = vtanh.pop %v2438
    %v2509 = vtanh.pop %v2443
    %v2510 = vsel %vm763, %v2446, 0.0
    %v2511 = vsel %vm763, %v2447, 0.0
    %v2512 = vadd.f32 %v2510, %v2511
    %v2513 = vsel %vm763, %v2448, 0.0
    %v2514 = vadd.f32 %v2512, %v2513
    %v2515 = vsel %vm763, %v2449, 0.0
    %v2516 = vadd.f32 %v2514, %v2515
    %v2517 = vsel %vm763, %v2450, 0.0
    %v2518 = vadd.f32 %v2516, %v2517
    %v2519 = vsel %vm763, %v2451, 0.0
    %v2520 = vadd.f32 %v2518, %v2519
    %v2521 = vsel %vm763, %v2452, 0.0
    %v2522 = vadd.f32 %v2520, %v2521
    %v2523 = vsel %vm763, %v2453, 0.0
    %v2524 = vadd.f32 %v2522, %v2523
    %v2525 = vsel %vm763, %v2454, 0.0
    %v2526 = vadd.f32 %v2524, %v2525
    %v2527 = vsel %vm763, %v2455, 0.0
    %v2528 = vadd.f32 %v2526, %v2527
    %v2529 = vsel %vm763, %v2456, 0.0
    %v2530 = vadd.f32 %v2528, %v2529
    %v2531 = vsel %vm763, %v2457, 0.0
    %v2532 = vadd.f32 %v2530, %v2531
    %v2533 = vsel %vm763, %v2458, 0.0
    %v2534 = vadd.f32 %v2532, %v2533
    %v2535 = vsel %vm763, %v2459, 0.0
    %v2536 = vadd.f32 %v2534, %v2535
    %v2537 = vsel %vm763, %v2460, 0.0
    %v2538 = vadd.f32 %v2536, %v2537
    %v2539 = vsel %vm763, %v2461, 0.0
    %v2540 = vadd.f32 %v2538, %v2539
    %v2541 = vsel %vm763, %v2462, 0.0
    %v2542 = vadd.f32 %v2540, %v2541
    %v2543 = vsel %vm763, %v2463, 0.0
    %v2544 = vadd.f32 %v2542, %v2543
    %v2545 = vsel %vm763, %v2464, 0.0
    %v2546 = vadd.f32 %v2544, %v2545
    %v2547 = vsel %vm763, %v2465, 0.0
    %v2548 = vadd.f32 %v2546, %v2547
    %v2549 = vsel %vm763, %v2466, 0.0
    %v2550 = vadd.f32 %v2548, %v2549
    %v2551 = vsel %vm763, %v2467, 0.0
    %v2552 = vadd.f32 %v2550, %v2551
    %v2553 = vsel %vm763, %v2468, 0.0
    %v2554 = vadd.f32 %v2552, %v2553
    %v2555 = vsel %vm763, %v2469, 0.0
    %v2556 = vadd.f32 %v2554, %v2555
    %v2557 = vsel %vm763, %v2470, 0.0
    %v2558 = vadd.f32 %v2556, %v2557
    %v2559 = vsel %vm763, %v2471, 0.0
    %v2560 = vadd.f32 %v2558, %v2559
    %v2561 = vsel %vm763, %v2472, 0.0
    %v2562 = vadd.f32 %v2560, %v2561
    %v2563 = vsel %vm763, %v2473, 0.0
    %v2564 = vadd.f32 %v2562, %v2563
    %v2565 = vsel %vm763, %v2474, 0.0
    %v2566 = vadd.f32 %v2564, %v2565
    %v2567 = vsel %vm763, %v2475, 0.0
    %v2568 = vadd.f32 %v2566, %v2567
    %v2569 = vsel %vm763, %v2476, 0.0
    %v2570 = vadd.f32 %v2568, %v2569
    %v2571 = vsel %vm763, %v2477, 0.0
    %v2572 = vadd.f32 %v2570, %v2571
    %v2573 = vsel %vm763, %v2478, 0.0
    %v2574 = vadd.f32 %v2572, %v2573
    %v2575 = vsel %vm763, %v2479, 0.0
    %v2576 = vadd.f32 %v2574, %v2575
    %v2577 = vsel %vm763, %v2480, 0.0
    %v2578 = vadd.f32 %v2576, %v2577
    %v2579 = vsel %vm763, %v2481, 0.0
    %v2580 = vadd.f32 %v2578, %v2579
    %v2581 = vsel %vm763, %v2482, 0.0
    %v2582 = vadd.f32 %v2580, %v2581
    %v2583 = vsel %vm763, %v2483, 0.0
    %v2584 = vadd.f32 %v2582, %v2583
    %v2585 = vsel %vm763, %v2484, 0.0
    %v2586 = vadd.f32 %v2584, %v2585
    %v2587 = vsel %vm763, %v2485, 0.0
    %v2588 = vadd.f32 %v2586, %v2587
    %v2589 = vsel %vm763, %v2486, 0.0
    %v2590 = vadd.f32 %v2588, %v2589
    %v2591 = vsel %vm763, %v2487, 0.0
    %v2592 = vadd.f32 %v2590, %v2591
    %v2593 = vsel %vm763, %v2488, 0.0
    %v2594 = vadd.f32 %v2592, %v2593
    %v2595 = vsel %vm763, %v2489, 0.0
    %v2596 = vadd.f32 %v2594, %v2595
    %v2597 = vsel %vm763, %v2490, 0.0
    %v2598 = vadd.f32 %v2596, %v2597
    %v2599 = vsel %vm763, %v2491, 0.0
    %v2600 = vadd.f32 %v2598, %v2599
    %v2601 = vsel %vm763, %v2492, 0.0
    %v2602 = vadd.f32 %v2600, %v2601
    %v2603 = vsel %vm763, %v2493, 0.0
    %v2604 = vadd.f32 %v2602, %v2603
    %v2605 = vsel %vm763, %v2494, 0.0
    %v2606 = vadd.f32 %v2604, %v2605
    %v2607 = vsel %vm763, %v2495, 0.0
    %v2608 = vadd.f32 %v2606, %v2607
    %v2609 = vsel %vm763, %v2496, 0.0
    %v2610 = vadd.f32 %v2608, %v2609
    %v2611 = vsel %vm763, %v2497, 0.0
    %v2612 = vadd.f32 %v2610, %v2611
    %v2613 = vsel %vm763, %v2498, 0.0
    %v2614 = vadd.f32 %v2612, %v2613
    %v2615 = vsel %vm763, %v2499, 0.0
    %v2616 = vadd.f32 %v2614, %v2615
    %v2617 = vsel %vm763, %v2500, 0.0
    %v2618 = vadd.f32 %v2616, %v2617
    %v2619 = vsel %vm763, %v2501, 0.0
    %v2620 = vadd.f32 %v2618, %v2619
    %v2621 = vsel %vm763, %v2502, 0.0
    %v2622 = vadd.f32 %v2620, %v2621
    %v2623 = vsel %vm763, %v2503, 0.0
    %v2624 = vadd.f32 %v2622, %v2623
    %v2625 = vsel %vm763, %v2504, 0.0
    %v2626 = vadd.f32 %v2624, %v2625
    %v2627 = vsel %vm763, %v2505, 0.0
    %v2628 = vadd.f32 %v2626, %v2627
    %v2629 = vsel %vm763, %v2506, 0.0
    %v2630 = vadd.f32 %v2628, %v2629
    %v2631 = vsel %vm763, %v2507, 0.0
    %v2632 = vadd.f32 %v2630, %v2631
    %v2633 = vsel %vm763, %v2508, 0.0
    %v2634 = vadd.f32 %v2632, %v2633
    %v2635 = vsel %vm763, %v2509, 0.0
    %v2636 = vadd.f32 %v2634, %v2635
    %v2637 = vrot.slane %v2636, 4
    %v2638 = vadd.f32 %v2636, %v2637
    %v2639 = vrot.slane %v2638, 2
    %v2640 = vadd.f32 %v2638, %v2639
    %v2641 = vrot.slane %v2640, 1
    %v2642 = vadd.f32 %v2640, %v2641
    %vm2643 = vcmask 1040384
    %v2644 = vsel %vm2643, %v896, %v1478
    %vm2645 = vcmask 1041408
    %v2646 = vsel %vm2645, %v2644, %v2060
    %vm2647 = vcmask 1042432
    %v2648 = vsel %vm2647, %v2646, %v2642
    %v2650 = vlaneseq
    %v2651 = vshrl.u32 %v2650, 7
    %v2652 = vsub.s32 0, %v2651
    %v2653 = vrot.slane %v307, %v2652
    %v2655 = vmul.f32 %v2648, %v2653
    %vm2656 = vcmask 519168
    %v2657 = vsel %vm2656, %v2655, 0.0
    %2658 = vadd.xlane.f32.xlu0 %v2657
    %v2659 = vpop.xlane.xlu0 %2658
    %v2660 = vmul.f32 %v2659, 0.001953125
    %vm2661 = vcmask 1043456
    %v2662 = vsel %vm2661, %v2660, -inf
    %v2663 = vrot.slane %v2662, 4
    %v2664 = vmax.f32 %v2662, %v2663
    %v2665 = vrot.slane %v2664, 2
    %v2666 = vmax.f32 %v2664, %v2665
    %v2667 = vrot.slane %v2666, 1
    %v2668 = vmax.f32 %v2666, %v2667
    %s2669 = vtos %v2668
    %v2670 = vstv %s2669
    %v2671 = vsub.f32 %v2660, %v2670
    %v2672 = vmul.f32 %v2671, 1.442695
    %v2673 = vpow.pop %v2672
    %vm2674 = vcmask 3072
    %v2675 = vsel %vm2674, %v2673, 0.0
    %2676 = vadd.xlane.f32.xlu0 %v2675
    %v2677 = vpop.xlane.xlu0 %2676
    %v2678 = vrot.slane %v2677, 4
    %v2679 = vadd.f32 %v2677, %v2678
    %v2680 = vrot.slane %v2679, 2
    %v2681 = vadd.f32 %v2679, %v2680
    %v2682 = vrot.slane %v2681, 1
    %v2683 = vadd.f32 %v2681, %v2682
    %s2684 = vtos %v2683
    %v2685 = vstv %s2684
    %v2686 = vrcp.pop %v2685
    %v2687 = vmul.f32 %v2673, %v2686
    %2688 = vst.msk [vmem:[%s5] sm:$0xf] %vm2674, %v2687
    %v2689 = vlaneseq
    %v2690 = vshrl.u32 %v2689, 7
    %v2691 = vsub.s32 0, %v2690
    %v2692 = vrot.slane %v2687, %v2691
    %v2693 = vmul.f32 %v34, %v2692
    %v2694 = vmul.f32 %v38, %v2692
    %v2695 = vmul.f32 %v42, %v2692
    %v2696 = vmul.f32 %v46, %v2692
    %v2697 = vmul.f32 %v50, %v2692
    %v2698 = vmul.f32 %v54, %v2692
    %v2699 = vmul.f32 %v58, %v2692
    %v2700 = vmul.f32 %v62, %v2692
    %v2701 = vmul.f32 %v66, %v2692
    %v2702 = vmul.f32 %v70, %v2692
    %v2703 = vmul.f32 %v74, %v2692
    %v2704 = vmul.f32 %v78, %v2692
    %v2705 = vmul.f32 %v82, %v2692
    %v2706 = vmul.f32 %v86, %v2692
    %v2707 = vmul.f32 %v90, %v2692
    %v2708 = vmul.f32 %v94, %v2692
    %v2709 = vmul.f32 %v98, %v2692
    %v2710 = vmul.f32 %v102, %v2692
    %v2711 = vmul.f32 %v106, %v2692
    %v2712 = vmul.f32 %v110, %v2692
    %v2713 = vmul.f32 %v114, %v2692
    %v2714 = vmul.f32 %v118, %v2692
    %v2715 = vmul.f32 %v122, %v2692
    %v2716 = vmul.f32 %v126, %v2692
    %v2717 = vmul.f32 %v130, %v2692
    %v2718 = vmul.f32 %v134, %v2692
    %v2719 = vmul.f32 %v138, %v2692
    %v2720 = vmul.f32 %v142, %v2692
    %v2721 = vmul.f32 %v146, %v2692
    %v2722 = vmul.f32 %v150, %v2692
    %v2723 = vmul.f32 %v154, %v2692
    %v2724 = vmul.f32 %v158, %v2692
    %v2725 = vmul.f32 %v162, %v2692
    %v2726 = vmul.f32 %v166, %v2692
    %v2727 = vmul.f32 %v170, %v2692
    %v2728 = vmul.f32 %v174, %v2692
    %v2729 = vmul.f32 %v178, %v2692
    %v2730 = vmul.f32 %v182, %v2692
    %v2731 = vmul.f32 %v186, %v2692
    %v2732 = vmul.f32 %v190, %v2692
    %v2733 = vmul.f32 %v194, %v2692
    %v2734 = vmul.f32 %v198, %v2692
    %v2735 = vmul.f32 %v202, %v2692
    %v2736 = vmul.f32 %v206, %v2692
    %v2737 = vmul.f32 %v210, %v2692
    %v2738 = vmul.f32 %v214, %v2692
    %v2739 = vmul.f32 %v218, %v2692
    %v2740 = vmul.f32 %v222, %v2692
    %v2741 = vmul.f32 %v226, %v2692
    %v2742 = vmul.f32 %v230, %v2692
    %v2743 = vmul.f32 %v234, %v2692
    %v2744 = vmul.f32 %v238, %v2692
    %v2745 = vmul.f32 %v242, %v2692
    %v2746 = vmul.f32 %v246, %v2692
    %v2747 = vmul.f32 %v250, %v2692
    %v2748 = vmul.f32 %v254, %v2692
    %v2749 = vmul.f32 %v258, %v2692
    %v2750 = vmul.f32 %v262, %v2692
    %v2751 = vmul.f32 %v266, %v2692
    %v2752 = vmul.f32 %v270, %v2692
    %v2753 = vmul.f32 %v274, %v2692
    %v2754 = vmul.f32 %v278, %v2692
    %v2755 = vmul.f32 %v282, %v2692
    %v2756 = vmul.f32 %v286, %v2692
    %v2757 = vlaneseq
    %v2758 = vshrl.u32 %v2757, 7
    %v2759 = vsub.s32 1, %v2758
    %v2760 = vrot.slane %v2687, %v2759
    %v2761 = vmul.f32 %v35, %v2760
    %v2762 = vmul.f32 %v39, %v2760
    %v2763 = vmul.f32 %v43, %v2760
    %v2764 = vmul.f32 %v47, %v2760
    %v2765 = vmul.f32 %v51, %v2760
    %v2766 = vmul.f32 %v55, %v2760
    %v2767 = vmul.f32 %v59, %v2760
    %v2768 = vmul.f32 %v63, %v2760
    %v2769 = vmul.f32 %v67, %v2760
    %v2770 = vmul.f32 %v71, %v2760
    %v2771 = vmul.f32 %v75, %v2760
    %v2772 = vmul.f32 %v79, %v2760
    %v2773 = vmul.f32 %v83, %v2760
    %v2774 = vmul.f32 %v87, %v2760
    %v2775 = vmul.f32 %v91, %v2760
    %v2776 = vmul.f32 %v95, %v2760
    %v2777 = vmul.f32 %v99, %v2760
    %v2778 = vmul.f32 %v103, %v2760
    %v2779 = vmul.f32 %v107, %v2760
    %v2780 = vmul.f32 %v111, %v2760
    %v2781 = vmul.f32 %v115, %v2760
    %v2782 = vmul.f32 %v119, %v2760
    %v2783 = vmul.f32 %v123, %v2760
    %v2784 = vmul.f32 %v127, %v2760
    %v2785 = vmul.f32 %v131, %v2760
    %v2786 = vmul.f32 %v135, %v2760
    %v2787 = vmul.f32 %v139, %v2760
    %v2788 = vmul.f32 %v143, %v2760
    %v2789 = vmul.f32 %v147, %v2760
    %v2790 = vmul.f32 %v151, %v2760
    %v2791 = vmul.f32 %v155, %v2760
    %v2792 = vmul.f32 %v159, %v2760
    %v2793 = vmul.f32 %v163, %v2760
    %v2794 = vmul.f32 %v167, %v2760
    %v2795 = vmul.f32 %v171, %v2760
    %v2796 = vmul.f32 %v175, %v2760
    %v2797 = vmul.f32 %v179, %v2760
    %v2798 = vmul.f32 %v183, %v2760
    %v2799 = vmul.f32 %v187, %v2760
    %v2800 = vmul.f32 %v191, %v2760
    %v2801 = vmul.f32 %v195, %v2760
    %v2802 = vmul.f32 %v199, %v2760
    %v2803 = vmul.f32 %v203, %v2760
    %v2804 = vmul.f32 %v207, %v2760
    %v2805 = vmul.f32 %v211, %v2760
    %v2806 = vmul.f32 %v215, %v2760
    %v2807 = vmul.f32 %v219, %v2760
    %v2808 = vmul.f32 %v223, %v2760
    %v2809 = vmul.f32 %v227, %v2760
    %v2810 = vmul.f32 %v231, %v2760
    %v2811 = vmul.f32 %v235, %v2760
    %v2812 = vmul.f32 %v239, %v2760
    %v2813 = vmul.f32 %v243, %v2760
    %v2814 = vmul.f32 %v247, %v2760
    %v2815 = vmul.f32 %v251, %v2760
    %v2816 = vmul.f32 %v255, %v2760
    %v2817 = vmul.f32 %v259, %v2760
    %v2818 = vmul.f32 %v263, %v2760
    %v2819 = vmul.f32 %v267, %v2760
    %v2820 = vmul.f32 %v271, %v2760
    %v2821 = vmul.f32 %v275, %v2760
    %v2822 = vmul.f32 %v279, %v2760
    %v2823 = vmul.f32 %v283, %v2760
    %v2824 = vmul.f32 %v287, %v2760
    %v2825 = vadd.f32 %v2693, %v2761
    %v2826 = vadd.f32 %v2694, %v2762
    %v2827 = vadd.f32 %v2695, %v2763
    %v2828 = vadd.f32 %v2696, %v2764
    %v2829 = vadd.f32 %v2697, %v2765
    %v2830 = vadd.f32 %v2698, %v2766
    %v2831 = vadd.f32 %v2699, %v2767
    %v2832 = vadd.f32 %v2700, %v2768
    %v2833 = vadd.f32 %v2701, %v2769
    %v2834 = vadd.f32 %v2702, %v2770
    %v2835 = vadd.f32 %v2703, %v2771
    %v2836 = vadd.f32 %v2704, %v2772
    %v2837 = vadd.f32 %v2705, %v2773
    %v2838 = vadd.f32 %v2706, %v2774
    %v2839 = vadd.f32 %v2707, %v2775
    %v2840 = vadd.f32 %v2708, %v2776
    %v2841 = vadd.f32 %v2709, %v2777
    %v2842 = vadd.f32 %v2710, %v2778
    %v2843 = vadd.f32 %v2711, %v2779
    %v2844 = vadd.f32 %v2712, %v2780
    %v2845 = vadd.f32 %v2713, %v2781
    %v2846 = vadd.f32 %v2714, %v2782
    %v2847 = vadd.f32 %v2715, %v2783
    %v2848 = vadd.f32 %v2716, %v2784
    %v2849 = vadd.f32 %v2717, %v2785
    %v2850 = vadd.f32 %v2718, %v2786
    %v2851 = vadd.f32 %v2719, %v2787
    %v2852 = vadd.f32 %v2720, %v2788
    %v2853 = vadd.f32 %v2721, %v2789
    %v2854 = vadd.f32 %v2722, %v2790
    %v2855 = vadd.f32 %v2723, %v2791
    %v2856 = vadd.f32 %v2724, %v2792
    %v2857 = vadd.f32 %v2725, %v2793
    %v2858 = vadd.f32 %v2726, %v2794
    %v2859 = vadd.f32 %v2727, %v2795
    %v2860 = vadd.f32 %v2728, %v2796
    %v2861 = vadd.f32 %v2729, %v2797
    %v2862 = vadd.f32 %v2730, %v2798
    %v2863 = vadd.f32 %v2731, %v2799
    %v2864 = vadd.f32 %v2732, %v2800
    %v2865 = vadd.f32 %v2733, %v2801
    %v2866 = vadd.f32 %v2734, %v2802
    %v2867 = vadd.f32 %v2735, %v2803
    %v2868 = vadd.f32 %v2736, %v2804
    %v2869 = vadd.f32 %v2737, %v2805
    %v2870 = vadd.f32 %v2738, %v2806
    %v2871 = vadd.f32 %v2739, %v2807
    %v2872 = vadd.f32 %v2740, %v2808
    %v2873 = vadd.f32 %v2741, %v2809
    %v2874 = vadd.f32 %v2742, %v2810
    %v2875 = vadd.f32 %v2743, %v2811
    %v2876 = vadd.f32 %v2744, %v2812
    %v2877 = vadd.f32 %v2745, %v2813
    %v2878 = vadd.f32 %v2746, %v2814
    %v2879 = vadd.f32 %v2747, %v2815
    %v2880 = vadd.f32 %v2748, %v2816
    %v2881 = vadd.f32 %v2749, %v2817
    %v2882 = vadd.f32 %v2750, %v2818
    %v2883 = vadd.f32 %v2751, %v2819
    %v2884 = vadd.f32 %v2752, %v2820
    %v2885 = vadd.f32 %v2753, %v2821
    %v2886 = vadd.f32 %v2754, %v2822
    %v2887 = vadd.f32 %v2755, %v2823
    %v2888 = vadd.f32 %v2756, %v2824
    %v2889 = vlaneseq
    %v2890 = vshrl.u32 %v2889, 7
    %v2891 = vsub.s32 2, %v2890
    %v2892 = vrot.slane %v2687, %v2891
    %v2893 = vmul.f32 %v36, %v2892
    %v2894 = vmul.f32 %v40, %v2892
    %v2895 = vmul.f32 %v44, %v2892
    %v2896 = vmul.f32 %v48, %v2892
    %v2897 = vmul.f32 %v52, %v2892
    %v2898 = vmul.f32 %v56, %v2892
    %v2899 = vmul.f32 %v60, %v2892
    %v2900 = vmul.f32 %v64, %v2892
    %v2901 = vmul.f32 %v68, %v2892
    %v2902 = vmul.f32 %v72, %v2892
    %v2903 = vmul.f32 %v76, %v2892
    %v2904 = vmul.f32 %v80, %v2892
    %v2905 = vmul.f32 %v84, %v2892
    %v2906 = vmul.f32 %v88, %v2892
    %v2907 = vmul.f32 %v92, %v2892
    %v2908 = vmul.f32 %v96, %v2892
    %v2909 = vmul.f32 %v100, %v2892
    %v2910 = vmul.f32 %v104, %v2892
    %v2911 = vmul.f32 %v108, %v2892
    %v2912 = vmul.f32 %v112, %v2892
    %v2913 = vmul.f32 %v116, %v2892
    %v2914 = vmul.f32 %v120, %v2892
    %v2915 = vmul.f32 %v124, %v2892
    %v2916 = vmul.f32 %v128, %v2892
    %v2917 = vmul.f32 %v132, %v2892
    %v2918 = vmul.f32 %v136, %v2892
    %v2919 = vmul.f32 %v140, %v2892
    %v2920 = vmul.f32 %v144, %v2892
    %v2921 = vmul.f32 %v148, %v2892
    %v2922 = vmul.f32 %v152, %v2892
    %v2923 = vmul.f32 %v156, %v2892
    %v2924 = vmul.f32 %v160, %v2892
    %v2925 = vmul.f32 %v164, %v2892
    %v2926 = vmul.f32 %v168, %v2892
    %v2927 = vmul.f32 %v172, %v2892
    %v2928 = vmul.f32 %v176, %v2892
    %v2929 = vmul.f32 %v180, %v2892
    %v2930 = vmul.f32 %v184, %v2892
    %v2931 = vmul.f32 %v188, %v2892
    %v2932 = vmul.f32 %v192, %v2892
    %v2933 = vmul.f32 %v196, %v2892
    %v2934 = vmul.f32 %v200, %v2892
    %v2935 = vmul.f32 %v204, %v2892
    %v2936 = vmul.f32 %v208, %v2892
    %v2937 = vmul.f32 %v212, %v2892
    %v2938 = vmul.f32 %v216, %v2892
    %v2939 = vmul.f32 %v220, %v2892
    %v2940 = vmul.f32 %v224, %v2892
    %v2941 = vmul.f32 %v228, %v2892
    %v2942 = vmul.f32 %v232, %v2892
    %v2943 = vmul.f32 %v236, %v2892
    %v2944 = vmul.f32 %v240, %v2892
    %v2945 = vmul.f32 %v244, %v2892
    %v2946 = vmul.f32 %v248, %v2892
    %v2947 = vmul.f32 %v252, %v2892
    %v2948 = vmul.f32 %v256, %v2892
    %v2949 = vmul.f32 %v260, %v2892
    %v2950 = vmul.f32 %v264, %v2892
    %v2951 = vmul.f32 %v268, %v2892
    %v2952 = vmul.f32 %v272, %v2892
    %v2953 = vmul.f32 %v276, %v2892
    %v2954 = vmul.f32 %v280, %v2892
    %v2955 = vmul.f32 %v284, %v2892
    %v2956 = vmul.f32 %v288, %v2892
    %v2957 = vadd.f32 %v2825, %v2893
    %v2958 = vadd.f32 %v2826, %v2894
    %v2959 = vadd.f32 %v2827, %v2895
    %v2960 = vadd.f32 %v2828, %v2896
    %v2961 = vadd.f32 %v2829, %v2897
    %v2962 = vadd.f32 %v2830, %v2898
    %v2963 = vadd.f32 %v2831, %v2899
    %v2964 = vadd.f32 %v2832, %v2900
    %v2965 = vadd.f32 %v2833, %v2901
    %v2966 = vadd.f32 %v2834, %v2902
    %v2967 = vadd.f32 %v2835, %v2903
    %v2968 = vadd.f32 %v2836, %v2904
    %v2969 = vadd.f32 %v2837, %v2905
    %v2970 = vadd.f32 %v2838, %v2906
    %v2971 = vadd.f32 %v2839, %v2907
    %v2972 = vadd.f32 %v2840, %v2908
    %v2973 = vadd.f32 %v2841, %v2909
    %v2974 = vadd.f32 %v2842, %v2910
    %v2975 = vadd.f32 %v2843, %v2911
    %v2976 = vadd.f32 %v2844, %v2912
    %v2977 = vadd.f32 %v2845, %v2913
    %v2978 = vadd.f32 %v2846, %v2914
    %v2979 = vadd.f32 %v2847, %v2915
    %v2980 = vadd.f32 %v2848, %v2916
    %v2981 = vadd.f32 %v2849, %v2917
    %v2982 = vadd.f32 %v2850, %v2918
    %v2983 = vadd.f32 %v2851, %v2919
    %v2984 = vadd.f32 %v2852, %v2920
    %v2985 = vadd.f32 %v2853, %v2921
    %v2986 = vadd.f32 %v2854, %v2922
    %v2987 = vadd.f32 %v2855, %v2923
    %v2988 = vadd.f32 %v2856, %v2924
    %v2989 = vadd.f32 %v2857, %v2925
    %v2990 = vadd.f32 %v2858, %v2926
    %v2991 = vadd.f32 %v2859, %v2927
    %v2992 = vadd.f32 %v2860, %v2928
    %v2993 = vadd.f32 %v2861, %v2929
    %v2994 = vadd.f32 %v2862, %v2930
    %v2995 = vadd.f32 %v2863, %v2931
    %v2996 = vadd.f32 %v2864, %v2932
    %v2997 = vadd.f32 %v2865, %v2933
    %v2998 = vadd.f32 %v2866, %v2934
    %v2999 = vadd.f32 %v2867, %v2935
    %v3000 = vadd.f32 %v2868, %v2936
    %v3001 = vadd.f32 %v2869, %v2937
    %v3002 = vadd.f32 %v2870, %v2938
    %v3003 = vadd.f32 %v2871, %v2939
    %v3004 = vadd.f32 %v2872, %v2940
    %v3005 = vadd.f32 %v2873, %v2941
    %v3006 = vadd.f32 %v2874, %v2942
    %v3007 = vadd.f32 %v2875, %v2943
    %v3008 = vadd.f32 %v2876, %v2944
    %v3009 = vadd.f32 %v2877, %v2945
    %v3010 = vadd.f32 %v2878, %v2946
    %v3011 = vadd.f32 %v2879, %v2947
    %v3012 = vadd.f32 %v2880, %v2948
    %v3013 = vadd.f32 %v2881, %v2949
    %v3014 = vadd.f32 %v2882, %v2950
    %v3015 = vadd.f32 %v2883, %v2951
    %v3016 = vadd.f32 %v2884, %v2952
    %v3017 = vadd.f32 %v2885, %v2953
    %v3018 = vadd.f32 %v2886, %v2954
    %v3019 = vadd.f32 %v2887, %v2955
    %v3020 = vadd.f32 %v2888, %v2956
    %v3021 = vlaneseq
    %v3022 = vshrl.u32 %v3021, 7
    %v3023 = vsub.s32 3, %v3022
    %v3024 = vrot.slane %v2687, %v3023
    %v3025 = vmul.f32 %v37, %v3024
    %v3026 = vmul.f32 %v41, %v3024
    %v3027 = vmul.f32 %v45, %v3024
    %v3028 = vmul.f32 %v49, %v3024
    %v3029 = vmul.f32 %v53, %v3024
    %v3030 = vmul.f32 %v57, %v3024
    %v3031 = vmul.f32 %v61, %v3024
    %v3032 = vmul.f32 %v65, %v3024
    %v3033 = vmul.f32 %v69, %v3024
    %v3034 = vmul.f32 %v73, %v3024
    %v3035 = vmul.f32 %v77, %v3024
    %v3036 = vmul.f32 %v81, %v3024
    %v3037 = vmul.f32 %v85, %v3024
    %v3038 = vmul.f32 %v89, %v3024
    %v3039 = vmul.f32 %v93, %v3024
    %v3040 = vmul.f32 %v97, %v3024
    %v3041 = vmul.f32 %v101, %v3024
    %v3042 = vmul.f32 %v105, %v3024
    %v3043 = vmul.f32 %v109, %v3024
    %v3044 = vmul.f32 %v113, %v3024
    %v3045 = vmul.f32 %v117, %v3024
    %v3046 = vmul.f32 %v121, %v3024
    %v3047 = vmul.f32 %v125, %v3024
    %v3048 = vmul.f32 %v129, %v3024
    %v3049 = vmul.f32 %v133, %v3024
    %v3050 = vmul.f32 %v137, %v3024
    %v3051 = vmul.f32 %v141, %v3024
    %v3052 = vmul.f32 %v145, %v3024
    %v3053 = vmul.f32 %v149, %v3024
    %v3054 = vmul.f32 %v153, %v3024
    %v3055 = vmul.f32 %v157, %v3024
    %v3056 = vmul.f32 %v161, %v3024
    %v3057 = vmul.f32 %v165, %v3024
    %v3058 = vmul.f32 %v169, %v3024
    %v3059 = vmul.f32 %v173, %v3024
    %v3060 = vmul.f32 %v177, %v3024
    %v3061 = vmul.f32 %v181, %v3024
    %v3062 = vmul.f32 %v185, %v3024
    %v3063 = vmul.f32 %v189, %v3024
    %v3064 = vmul.f32 %v193, %v3024
    %v3065 = vmul.f32 %v197, %v3024
    %v3066 = vmul.f32 %v201, %v3024
    %v3067 = vmul.f32 %v205, %v3024
    %v3068 = vmul.f32 %v209, %v3024
    %v3069 = vmul.f32 %v213, %v3024
    %v3070 = vmul.f32 %v217, %v3024
    %v3071 = vmul.f32 %v221, %v3024
    %v3072 = vmul.f32 %v225, %v3024
    %v3073 = vmul.f32 %v229, %v3024
    %v3074 = vmul.f32 %v233, %v3024
    %v3075 = vmul.f32 %v237, %v3024
    %v3076 = vmul.f32 %v241, %v3024
    %v3077 = vmul.f32 %v245, %v3024
    %v3078 = vmul.f32 %v249, %v3024
    %v3079 = vmul.f32 %v253, %v3024
    %v3080 = vmul.f32 %v257, %v3024
    %v3081 = vmul.f32 %v261, %v3024
    %v3082 = vmul.f32 %v265, %v3024
    %v3083 = vmul.f32 %v269, %v3024
    %v3084 = vmul.f32 %v273, %v3024
    %v3085 = vmul.f32 %v277, %v3024
    %v3086 = vmul.f32 %v281, %v3024
    %v3087 = vmul.f32 %v285, %v3024
    %v3088 = vmul.f32 %v289, %v3024
    %v3089 = vadd.f32 %v2957, %v3025
    %v3090 = vadd.f32 %v2958, %v3026
    %v3091 = vadd.f32 %v2959, %v3027
    %v3092 = vadd.f32 %v2960, %v3028
    %v3093 = vadd.f32 %v2961, %v3029
    %v3094 = vadd.f32 %v2962, %v3030
    %v3095 = vadd.f32 %v2963, %v3031
    %v3096 = vadd.f32 %v2964, %v3032
    %v3097 = vadd.f32 %v2965, %v3033
    %v3098 = vadd.f32 %v2966, %v3034
    %v3099 = vadd.f32 %v2967, %v3035
    %v3100 = vadd.f32 %v2968, %v3036
    %v3101 = vadd.f32 %v2969, %v3037
    %v3102 = vadd.f32 %v2970, %v3038
    %v3103 = vadd.f32 %v2971, %v3039
    %v3104 = vadd.f32 %v2972, %v3040
    %v3105 = vadd.f32 %v2973, %v3041
    %v3106 = vadd.f32 %v2974, %v3042
    %v3107 = vadd.f32 %v2975, %v3043
    %v3108 = vadd.f32 %v2976, %v3044
    %v3109 = vadd.f32 %v2977, %v3045
    %v3110 = vadd.f32 %v2978, %v3046
    %v3111 = vadd.f32 %v2979, %v3047
    %v3112 = vadd.f32 %v2980, %v3048
    %v3113 = vadd.f32 %v2981, %v3049
    %v3114 = vadd.f32 %v2982, %v3050
    %v3115 = vadd.f32 %v2983, %v3051
    %v3116 = vadd.f32 %v2984, %v3052
    %v3117 = vadd.f32 %v2985, %v3053
    %v3118 = vadd.f32 %v2986, %v3054
    %v3119 = vadd.f32 %v2987, %v3055
    %v3120 = vadd.f32 %v2988, %v3056
    %v3121 = vadd.f32 %v2989, %v3057
    %v3122 = vadd.f32 %v2990, %v3058
    %v3123 = vadd.f32 %v2991, %v3059
    %v3124 = vadd.f32 %v2992, %v3060
    %v3125 = vadd.f32 %v2993, %v3061
    %v3126 = vadd.f32 %v2994, %v3062
    %v3127 = vadd.f32 %v2995, %v3063
    %v3128 = vadd.f32 %v2996, %v3064
    %v3129 = vadd.f32 %v2997, %v3065
    %v3130 = vadd.f32 %v2998, %v3066
    %v3131 = vadd.f32 %v2999, %v3067
    %v3132 = vadd.f32 %v3000, %v3068
    %v3133 = vadd.f32 %v3001, %v3069
    %v3134 = vadd.f32 %v3002, %v3070
    %v3135 = vadd.f32 %v3003, %v3071
    %v3136 = vadd.f32 %v3004, %v3072
    %v3137 = vadd.f32 %v3005, %v3073
    %v3138 = vadd.f32 %v3006, %v3074
    %v3139 = vadd.f32 %v3007, %v3075
    %v3140 = vadd.f32 %v3008, %v3076
    %v3141 = vadd.f32 %v3009, %v3077
    %v3142 = vadd.f32 %v3010, %v3078
    %v3143 = vadd.f32 %v3011, %v3079
    %v3144 = vadd.f32 %v3012, %v3080
    %v3145 = vadd.f32 %v3013, %v3081
    %v3146 = vadd.f32 %v3014, %v3082
    %v3147 = vadd.f32 %v3015, %v3083
    %v3148 = vadd.f32 %v3016, %v3084
    %v3149 = vadd.f32 %v3017, %v3085
    %v3150 = vadd.f32 %v3018, %v3086
    %v3151 = vadd.f32 %v3019, %v3087
    %v3152 = vadd.f32 %v3020, %v3088
    %3153 = vst [vmem:[#allocation5] sm:$0xff] %v3089
    %3154 = vst [vmem:[#allocation5 + $0x8] sm:$0xff] %v3090
    %3155 = vst [vmem:[#allocation5 + $0x10] sm:$0xff] %v3091
    %3156 = vst [vmem:[#allocation5 + $0x18] sm:$0xff] %v3092
    %3157 = vst [vmem:[#allocation5 + $0x20] sm:$0xff] %v3093
    %3158 = vst [vmem:[#allocation5 + $0x28] sm:$0xff] %v3094
    %3159 = vst [vmem:[#allocation5 + $0x30] sm:$0xff] %v3095
    %3160 = vst [vmem:[#allocation5 + $0x38] sm:$0xff] %v3096
    %3161 = vst [vmem:[#allocation5 + $0x40] sm:$0xff] %v3097
    %3162 = vst [vmem:[#allocation5 + $0x48] sm:$0xff] %v3098
    %3163 = vst [vmem:[#allocation5 + $0x50] sm:$0xff] %v3099
    %3164 = vst [vmem:[#allocation5 + $0x58] sm:$0xff] %v3100
    %3165 = vst [vmem:[#allocation5 + $0x60] sm:$0xff] %v3101
    %3166 = vst [vmem:[#allocation5 + $0x68] sm:$0xff] %v3102
    %3167 = vst [vmem:[#allocation5 + $0x70] sm:$0xff] %v3103
    %3168 = vst [vmem:[#allocation5 + $0x78] sm:$0xff] %v3104
    %3169 = vst [vmem:[#allocation5 + $0x80] sm:$0xff] %v3105
    %3170 = vst [vmem:[#allocation5 + $0x88] sm:$0xff] %v3106
    %3171 = vst [vmem:[#allocation5 + $0x90] sm:$0xff] %v3107
    %3172 = vst [vmem:[#allocation5 + $0x98] sm:$0xff] %v3108
    %3173 = vst [vmem:[#allocation5 + $0xa0] sm:$0xff] %v3109
    %3174 = vst [vmem:[#allocation5 + $0xa8] sm:$0xff] %v3110
    %3175 = vst [vmem:[#allocation5 + $0xb0] sm:$0xff] %v3111
    %3176 = vst [vmem:[#allocation5 + $0xb8] sm:$0xff] %v3112
    %3177 = vst [vmem:[#allocation5 + $0xc0] sm:$0xff] %v3113
    %3178 = vst [vmem:[#allocation5 + $0xc8] sm:$0xff] %v3114
    %3179 = vst [vmem:[#allocation5 + $0xd0] sm:$0xff] %v3115
    %3180 = vst [vmem:[#allocation5 + $0xd8] sm:$0xff] %v3116
    %3181 = vst [vmem:[#allocation5 + $0xe0] sm:$0xff] %v3117
    %3182 = vst [vmem:[#allocation5 + $0xe8] sm:$0xff] %v3118
    %3183 = vst [vmem:[#allocation5 + $0xf0] sm:$0xff] %v3119
    %3184 = vst [vmem:[#allocation5 + $0xf8] sm:$0xff] %v3120
    %3185 = vst [vmem:[#allocation5 + $0x100] sm:$0xff] %v3121
    %3186 = vst [vmem:[#allocation5 + $0x108] sm:$0xff] %v3122
    %3187 = vst [vmem:[#allocation5 + $0x110] sm:$0xff] %v3123
    %3188 = vst [vmem:[#allocation5 + $0x118] sm:$0xff] %v3124
    %3189 = vst [vmem:[#allocation5 + $0x120] sm:$0xff] %v3125
    %3190 = vst [vmem:[#allocation5 + $0x128] sm:$0xff] %v3126
    %3191 = vst [vmem:[#allocation5 + $0x130] sm:$0xff] %v3127
    %3192 = vst [vmem:[#allocation5 + $0x138] sm:$0xff] %v3128
    %3193 = vst [vmem:[#allocation5 + $0x140] sm:$0xff] %v3129
    %3194 = vst [vmem:[#allocation5 + $0x148] sm:$0xff] %v3130
    %3195 = vst [vmem:[#allocation5 + $0x150] sm:$0xff] %v3131
    %3196 = vst [vmem:[#allocation5 + $0x158] sm:$0xff] %v3132
    %3197 = vst [vmem:[#allocation5 + $0x160] sm:$0xff] %v3133
    %3198 = vst [vmem:[#allocation5 + $0x168] sm:$0xff] %v3134
    %3199 = vst [vmem:[#allocation5 + $0x170] sm:$0xff] %v3135
    %3200 = vst [vmem:[#allocation5 + $0x178] sm:$0xff] %v3136
    %3201 = vst [vmem:[#allocation5 + $0x180] sm:$0xff] %v3137
    %3202 = vst [vmem:[#allocation5 + $0x188] sm:$0xff] %v3138
    %3203 = vst [vmem:[#allocation5 + $0x190] sm:$0xff] %v3139
    %3204 = vst [vmem:[#allocation5 + $0x198] sm:$0xff] %v3140
    %3205 = vst [vmem:[#allocation5 + $0x1a0] sm:$0xff] %v3141
    %3206 = vst [vmem:[#allocation5 + $0x1a8] sm:$0xff] %v3142
    %3207 = vst [vmem:[#allocation5 + $0x1b0] sm:$0xff] %v3143
    %3208 = vst [vmem:[#allocation5 + $0x1b8] sm:$0xff] %v3144
    %3209 = vst [vmem:[#allocation5 + $0x1c0] sm:$0xff] %v3145
    %3210 = vst [vmem:[#allocation5 + $0x1c8] sm:$0xff] %v3146
    %3211 = vst [vmem:[#allocation5 + $0x1d0] sm:$0xff] %v3147
    %3212 = vst [vmem:[#allocation5 + $0x1d8] sm:$0xff] %v3148
    %3213 = vst [vmem:[#allocation5 + $0x1e0] sm:$0xff] %v3149
    %3214 = vst [vmem:[#allocation5 + $0x1e8] sm:$0xff] %v3150
    %3215 = vst [vmem:[#allocation5 + $0x1f0] sm:$0xff] %v3151
    %3216 = vst [vmem:[#allocation5 + $0x1f8] sm:$0xff] %v3152
    // Predicated region
    $region22: #{tpu_custom_call.1} parent=1 // pred_check
      _
    $region23: #{tpu_custom_call.1} parent=1 // pred_check_branch
      %3218 = sbr.rel (0) target = $region25
    $region24: #{tpu_custom_call.1} parent=1 // pred_region
      %s3220 = ssub.s32 8192, 8192
      %3221 = vsyncadd [#allocation4], %s3220
      %s3222 = sshll.u32 [#allocation5], 4
      %s3223 = int_to_ptr.vmem [resolvable:$true] %s3222
      %3228 = dma.vmem_to_hbm [thread:$0]  %s3223, 8192, %s4, [#allocation4], 128, 128, 8
    $region25: #{tpu_custom_call.1} parent=1 // pred_fallthru
      _
    // Predicated region
    $region26: #{tpu_custom_call.1} parent=1 // pred_check
      _
    $region27: #{tpu_custom_call.1} parent=1 // pred_check_branch
      %3230 = sbr.rel (0) target = $region29
    $region28: #{tpu_custom_call.1} parent=1 // pred_region
      _
    $region29: #{tpu_custom_call.1} parent=1 // pred_fallthru
      _
    // Predicated region
    $region30: #{tpu_custom_call.1} parent=1 // pred_check
      _
    $region31: #{tpu_custom_call.1} parent=1 // pred_check_branch
      %3232 = sbr.rel (0) target = $region33
    $region32: #{tpu_custom_call.1} parent=1 // pred_region
      %3233 = dma.done [#allocation4], 8192
    $region33: #{tpu_custom_call.1} parent=1 // pred_fallthru
      _
    // Predicated region
    $region34: #{tpu_custom_call.1} parent=1 // pred_check
      _
    $region35: #{tpu_custom_call.1} parent=1 // pred_check_branch
      %3235 = sbr.rel (0) target = $region37
    $region36: #{tpu_custom_call.1} parent=1 // pred_region
      _
    $region37: #{tpu_custom_call.1} parent=1 // pred_fallthru
      _
    %3236 = vsyncpa [#allocation3], 1
    %3237 = vsyncpa [#allocation4], 1

</llo_original>
